<compile_context>
chip_gen: v7x
topology: tpu7x:2x2x1
jax: 0.10.0
libtpu: 0.0.40
codegen_flags: <defaults>
</compile_context>

<pallas_src>
import functools
import math

import jax
import jax.numpy as jnp
from jax.experimental import pallas as pl
from jax.experimental.pallas import tpu as pltpu

CFG = dict(
    hidden=32,      # vit.config.hidden_size (scaled down from 768)
    heads=4,        # num_attention_heads
    layers=2,       # num_hidden_layers
    mlp=128,        # intermediate_size = 4 * hidden
    patch=16,       # patch_size (kept at 16 like the real model)
    img=32,         # image size -> (32/16)^2 = 4 patches, seq = 5 with CLS
    chans=3,
    classes=29,     # replaced classifier head: nn.Linear(hidden, 29)
    eps=1e-12,      # layer_norm_eps
)

_QKV_PAD = 128      # fused QKV projection N padded 96 -> 128 (lane-dense MXU tile)
_CLS_PAD = 128      # classifier output padded 29 -> 128 (lane-dense store)


# ----------------------------------------------------------------------------
# One fused Pallas kernel: whole ViT forward for a single batch element.
# ----------------------------------------------------------------------------
def _fused_vit_kernel(patches_ref, patch_w_ref, emb_bias_ref,
                      ln1g_ref, ln1b_ref, wqkv_ref, bqkv_ref,
                      wo_ref, bo_ref, ln2g_ref, ln2b_ref,
                      w1_ref, b1_ref, w2_ref, b2_ref,
                      lnfg_ref, lnfb_ref, clsw_ref, clsb_ref,
                      out_ref, *, n_layers, heads, dh, eps):
    d = heads * dh

    def layernorm(x, g, b):
        mean = jnp.mean(x, axis=-1, keepdims=True)
        var = jnp.mean((x - mean) ** 2, axis=-1, keepdims=True)
        return (x - mean) * jax.lax.rsqrt(var + eps) * g + b

    def gelu(x):                               # exact (erf) GELU, like nn.GELU
        return 0.5 * x * (1.0 + jax.lax.erf(x * (1.0 / math.sqrt(2.0))))

    # --- patch embedding + CLS + positional embedding -----------------------
    # patches_ref row 0 is a zero row; emb_bias row 0 = cls + pos[0], rows 1..
    # hold pos[i] + conv bias, so a single matmul yields the full (S, D) seq.
    h = jnp.dot(patches_ref[0], patch_w_ref[...],
                preferred_element_type=jnp.float32) + emb_bias_ref[...]

    # --- transformer encoder (pre-LN), unrolled over layers & heads ---------
    for l in range(n_layers):
        last = l == n_layers - 1
        # Only the CLS row of the last layer feeds the classifier, so the last
        # layer's query-side attention / output proj / MLP run on one row.
        nq = 1 if last else h.shape[0]

        # attention block (scale 1/sqrt(dh) already folded into wqkv/bqkv)
        hn = layernorm(h, ln1g_ref[l], ln1b_ref[l])
        qkv = jnp.dot(hn, wqkv_ref[l],
                      preferred_element_type=jnp.float32) + bqkv_ref[l]
        wo = wo_ref[l]
        attn = bo_ref[l] + h[0:nq, :]          # output bias + residual
        for hh in range(heads):                # heads via static lane slices
            q = qkv[0:nq, hh * dh:(hh + 1) * dh]
            k = qkv[:, d + hh * dh:d + (hh + 1) * dh]
            v = qkv[:, 2 * d + hh * dh:2 * d + (hh + 1) * dh]
            s = jax.lax.dot_general(q, k, (((1,), (1,)), ((), ())),
                                    preferred_element_type=jnp.float32)
            s = s - jnp.max(s, axis=-1, keepdims=True)
            p = jnp.exp(s)
            p = p * pl.reciprocal(jnp.sum(p, axis=-1, keepdims=True), approx=True)
            ctx = jnp.dot(p, v, preferred_element_type=jnp.float32)     # (nq, dh)
            # ctx @ W_o == sum over per-head row-blocks of W_o (sublane slices)
            attn = attn + jnp.dot(ctx, wo[hh * dh:(hh + 1) * dh, :],
                                  preferred_element_type=jnp.float32)
        h = attn                                # (nq, D)

        # MLP block
        hn = layernorm(h, ln2g_ref[l], ln2b_ref[l])
        m = gelu(jnp.dot(hn, w1_ref[l], preferred_element_type=jnp.float32)
                 + b1_ref[l])
        h = jnp.dot(m, w2_ref[l], preferred_element_type=jnp.float32) + b2_ref[l] + h

    # --- final LN on the CLS row, (lane-padded) classifier head --------------
    hf = layernorm(h[0:1, :], lnfg_ref[...], lnfb_ref[...])       # (1, hidden)
    logits = jnp.dot(hf, clsw_ref[...],
                     preferred_element_type=jnp.float32) + clsb_ref[...]
    out_ref[0] = logits.astype(out_ref.dtype)                     # (1, _CLS_PAD)


# ----------------------------------------------------------------------------
# Wrapper helpers
# ----------------------------------------------------------------------------
def _rep_spec(shape):
    # full-array block, same block at every grid step (weights stay resident)
    return pl.BlockSpec(shape, lambda i: (0,) * len(shape))


def patchify(x, p):
    # (B, C, H, W) -> (B, nP, C*p*p), flattening in (c, kh, kw) order to match
    # the Conv2d(3, hidden, kernel=16, stride=16) weight layout.
    b, c, h, w = x.shape
    nh, nw = h // p, w // p
    x = x.reshape(b, c, nh, p, nw, p)
    x = x.transpose(0, 2, 4, 1, 3, 5)
    return x.reshape(b, nh * nw, c * p * p)


def fuse_params(params):
    """One-time weight fusion/padding/stacking (kept out of the hot forward)."""
    hdim = CFG["hidden"]
    scale = 1.0 / math.sqrt(hdim // CFG["heads"])

    # fold CLS token / positional embedding / conv bias into one (S, D) bias
    pos = params["pos"][0]                                     # (S, D)
    cls = params["cls"][0, 0]                                  # (D,)
    emb_bias = jnp.concatenate(
        [(cls + pos[0])[None, :], pos[1:] + params["patch_b"][None, :]], axis=0)

    def stack(name, reshape=None):
        arrs = [lyr[name] for lyr in params["layers"]]
        if reshape is not None:
            arrs = [a.reshape(reshape) for a in arrs]
        return jnp.stack(arrs, axis=0)

    # fuse Q/K/V into one lane-padded projection; fold attention scale into Q
    wqkv = jnp.stack([
        jnp.pad(jnp.concatenate([l["wq"] * scale, l["wk"], l["wv"]], axis=1),
                ((0, 0), (0, _QKV_PAD - 3 * hdim)))
        for l in params["layers"]], axis=0)                    # (L, D, 128)
    bqkv = jnp.stack([
        jnp.pad(jnp.concatenate([l["bq"] * scale, l["bk"], l["bv"]]),
                (0, _QKV_PAD - 3 * hdim)).reshape(1, _QKV_PAD)
        for l in params["layers"]], axis=0)                    # (L, 1, 128)

    return dict(
        patch_w=params["patch_w"], emb_bias=emb_bias,
        ln1g=stack("ln1_g", (1, hdim)), ln1b=stack("ln1_b", (1, hdim)),
        wqkv=wqkv, bqkv=bqkv,
        wo=stack("wo"), bo=stack("bo", (1, hdim)),
        ln2g=stack("ln2_g", (1, hdim)), ln2b=stack("ln2_b", (1, hdim)),
        w1=stack("w1"), b1=stack("b1", (1, CFG["mlp"])),
        w2=stack("w2"), b2=stack("b2", (1, hdim)),
        lnfg=params["lnf_g"].reshape(1, hdim),
        lnfb=params["lnf_b"].reshape(1, hdim),
        clsw=jnp.pad(params["cls_w"], ((0, 0), (0, _CLS_PAD - CFG["classes"]))),
        clsb=jnp.pad(params["cls_b"],
                     (0, _CLS_PAD - CFG["classes"])).reshape(1, _CLS_PAD),
    )


def vit_forward(fused, x):
    hdim, heads, n_layers = CFG["hidden"], CFG["heads"], CFG["layers"]
    dh = hdim // heads
    b = x.shape[0]

    # patch extraction + a zero CLS row so one matmul yields the full (S, D)
    patches = patchify(x, CFG["patch"])                        # (B, nP, Cpp)
    n_p, cpp = patches.shape[1], patches.shape[2]
    s = n_p + 1
    patches = jnp.pad(patches, ((0, 0), (1, 0), (0, 0)))       # (B, S, Cpp)

    args = (patches, fused["patch_w"], fused["emb_bias"],
            fused["ln1g"], fused["ln1b"], fused["wqkv"], fused["bqkv"],
            fused["wo"], fused["bo"], fused["ln2g"], fused["ln2b"],
            fused["w1"], fused["b1"], fused["w2"], fused["b2"],
            fused["lnfg"], fused["lnfb"], fused["clsw"], fused["clsb"])

    in_specs = [pl.BlockSpec((1, s, cpp), lambda i: (i, 0, 0))]
    in_specs += [_rep_spec(a.shape) for a in args[1:]]

    kernel = functools.partial(
        _fused_vit_kernel, n_layers=n_layers, heads=heads, dh=dh, eps=CFG["eps"])

    logits_pad = pl.pallas_call(
        kernel,
        grid=(b,),                                 # shards over 2 TCs on v7x
        in_specs=in_specs,
        out_specs=pl.BlockSpec((1, 1, _CLS_PAD), lambda i: (i, 0, 0)),
        out_shape=jax.ShapeDtypeStruct((b, 1, _CLS_PAD), x.dtype),
        compiler_params=pltpu.CompilerParams(
            dimension_semantics=("parallel",)),
    )(*args)

    return logits_pad.reshape(b, _CLS_PAD)[:, :CFG["classes"]]   # (B, 29)


# ----------------------------------------------------------------------------
# Pure-JAX reference (mirrors HF ViT pre-LN encoder) for correctness checking
# ----------------------------------------------------------------------------
def vit_reference(params, x):
    hdim, heads = CFG["hidden"], CFG["heads"]
    dh = hdim // heads
    b = x.shape[0]

    def ln(v, g, bb):
        mu = v.mean(-1, keepdims=True)
        var = ((v - mu) ** 2).mean(-1, keepdims=True)
        return (v - mu) / jnp.sqrt(var + CFG["eps"]) * g + bb

    patches = patchify(x, CFG["patch"])
    h = jnp.einsum("bpc,cd->bpd", patches, params["patch_w"]) + params["patch_b"]
    cls = jnp.broadcast_to(params["cls"], (b, 1, hdim))
    h = jnp.concatenate([cls, h], axis=1) + params["pos"]

    for lyr in params["layers"]:
        hn = ln(h, lyr["ln1_g"], lyr["ln1_b"])
        q = hn @ lyr["wq"] + lyr["bq"]
        k = hn @ lyr["wk"] + lyr["bk"]
        v = hn @ lyr["wv"] + lyr["bv"]
        S = q.shape[1]
        q = q.reshape(b, S, heads, dh).transpose(0, 2, 1, 3)
        k = k.reshape(b, S, heads, dh).transpose(0, 2, 1, 3)
        v = v.reshape(b, S, heads, dh).transpose(0, 2, 1, 3)
        sc = jnp.einsum("bhqd,bhkd->bhqk", q, k) / math.sqrt(dh)
        p = jax.nn.softmax(sc, axis=-1)
        ctx = jnp.einsum("bhqk,bhkd->bhqd", p, v).transpose(0, 2, 1, 3)
        ctx = ctx.reshape(b, S, hdim)
        h = h + ctx @ lyr["wo"] + lyr["bo"]
        hn = ln(h, lyr["ln2_g"], lyr["ln2_b"])
        m = hn @ lyr["w1"] + lyr["b1"]
        m = 0.5 * m * (1.0 + jax.lax.erf(m / math.sqrt(2.0)))
        h = h + m @ lyr["w2"] + lyr["b2"]

    hf = ln(h, params["lnf_g"], params["lnf_b"])
    return hf[:, 0, :] @ params["cls_w"] + params["cls_b"]


# ----------------------------------------------------------------------------
# Deterministic synthetic parameter init
# ----------------------------------------------------------------------------
def init_params(key):
    hdim, p, c = CFG["hidden"], CFG["patch"], CFG["chans"]
    n_p = (CFG["img"] // p) ** 2
    keys = iter(jax.random.split(key, 64))

    def w(shape, scale=0.02):
        return (scale * jax.random.normal(next(keys), shape)).astype(jnp.float32)

    zeros = lambda *sh: jnp.zeros(sh, jnp.float32)
    ones = lambda *sh: jnp.ones(sh, jnp.float32)

    params = {
        "patch_w": w((c * p * p, hdim)), "patch_b": zeros(hdim),
        "cls": w((1, 1, hdim)), "pos": w((1, n_p + 1, hdim)),
        "lnf_g": ones(hdim), "lnf_b": zeros(hdim),
        "cls_w": w((hdim, CFG["classes"])), "cls_b": zeros(CFG["classes"]),
        "layers": [],
    }
    for _ in range(CFG["layers"]):
        params["layers"].append({
            "ln1_g": ones(hdim), "ln1_b": zeros(hdim),
            "wq": w((hdim, hdim)), "bq": zeros(hdim),
            "wk": w((hdim, hdim)), "bk": zeros(hdim),
            "wv": w((hdim, hdim)), "bv": zeros(hdim),
            "wo": w((hdim, hdim)), "bo": zeros(hdim),
            "ln2_g": ones(hdim), "ln2_b": zeros(hdim),
            "w1": w((hdim, CFG["mlp"])), "b1": zeros(CFG["mlp"]),
            "w2": w((CFG["mlp"], hdim)), "b2": zeros(hdim),
        })
    return params


if __name__ == "__main__":
    key = jax.random.PRNGKey(0)
    pkey, xkey = jax.random.split(key)
    params = init_params(pkey)
    fused = fuse_params(params)                # one-time weight fusion/padding
    x = jax.random.normal(
        xkey, (2, CFG["chans"], CFG["img"], CFG["img"]), dtype=jnp.float32)  # NCHW

    logits = jax.jit(vit_forward)(fused, x)
    jax.block_until_ready(logits)

    assert logits.shape == (2, CFG["classes"]), logits.shape
    assert bool(jnp.all(jnp.isfinite(logits)))

    ref = vit_reference(params, x)
    max_err = float(jnp.max(jnp.abs(logits - ref)))
    assert max_err < 5e-3, f"max |kernel - reference| = {max_err}"
    print("KERNEL_OK")
</pallas_src>

<mosaic_0001>
module attributes {stable_mosaic.version = 11 : i64} {
  func.func @_fused_vit_kernel(%arg0: i32, %arg1: memref<1x5x768xf32, #tpu.memory_space<vmem>>, %arg2: memref<768x32xf32, #tpu.memory_space<vmem>>, %arg3: memref<5x32xf32, #tpu.memory_space<vmem>>, %arg4: memref<2x1x32xf32, #tpu.memory_space<vmem>>, %arg5: memref<2x1x32xf32, #tpu.memory_space<vmem>>, %arg6: memref<2x32x128xf32, #tpu.memory_space<vmem>>, %arg7: memref<2x1x128xf32, #tpu.memory_space<vmem>>, %arg8: memref<2x32x32xf32, #tpu.memory_space<vmem>>, %arg9: memref<2x1x32xf32, #tpu.memory_space<vmem>>, %arg10: memref<2x1x32xf32, #tpu.memory_space<vmem>>, %arg11: memref<2x1x32xf32, #tpu.memory_space<vmem>>, %arg12: memref<2x32x128xf32, #tpu.memory_space<vmem>>, %arg13: memref<2x1x128xf32, #tpu.memory_space<vmem>>, %arg14: memref<2x128x32xf32, #tpu.memory_space<vmem>>, %arg15: memref<2x1x32xf32, #tpu.memory_space<vmem>>, %arg16: memref<1x32xf32, #tpu.memory_space<vmem>>, %arg17: memref<1x32xf32, #tpu.memory_space<vmem>>, %arg18: memref<32x128xf32, #tpu.memory_space<vmem>>, %arg19: memref<1x128xf32, #tpu.memory_space<vmem>>, %arg20: memref<1x1x128xf32, #tpu.memory_space<vmem>>) attributes {dimension_semantics = [#tpu.dimension_semantics<parallel>], iteration_bounds = array<i64: 2>, scalar_prefetch = 0 : i64, scratch_operands = 0 : i64, tpu.core_type = #tpu.core_type<tc>, window_params = [{transform_indices = @transform_0, window_bounds = array<i64: 1, 5, 768>}, {pipeline_mode = #tpu.pipeline_mode<synchronous>, transform_indices = @transform_1, window_bounds = array<i64: 768, 32>}, {pipeline_mode = #tpu.pipeline_mode<synchronous>, transform_indices = @transform_2, window_bounds = array<i64: 5, 32>}, {pipeline_mode = #tpu.pipeline_mode<synchronous>, transform_indices = @transform_3, window_bounds = array<i64: 2, 1, 32>}, {pipeline_mode = #tpu.pipeline_mode<synchronous>, transform_indices = @transform_4, window_bounds = array<i64: 2, 1, 32>}, {pipeline_mode = #tpu.pipeline_mode<synchronous>, transform_indices = @transform_5, window_bounds = array<i64: 2, 32, 128>}, {pipeline_mode = #tpu.pipeline_mode<synchronous>, transform_indices = @transform_6, window_bounds = array<i64: 2, 1, 128>}, {pipeline_mode = #tpu.pipeline_mode<synchronous>, transform_indices = @transform_7, window_bounds = array<i64: 2, 32, 32>}, {pipeline_mode = #tpu.pipeline_mode<synchronous>, transform_indices = @transform_8, window_bounds = array<i64: 2, 1, 32>}, {pipeline_mode = #tpu.pipeline_mode<synchronous>, transform_indices = @transform_9, window_bounds = array<i64: 2, 1, 32>}, {pipeline_mode = #tpu.pipeline_mode<synchronous>, transform_indices = @transform_10, window_bounds = array<i64: 2, 1, 32>}, {pipeline_mode = #tpu.pipeline_mode<synchronous>, transform_indices = @transform_11, window_bounds = array<i64: 2, 32, 128>}, {pipeline_mode = #tpu.pipeline_mode<synchronous>, transform_indices = @transform_12, window_bounds = array<i64: 2, 1, 128>}, {pipeline_mode = #tpu.pipeline_mode<synchronous>, transform_indices = @transform_13, window_bounds = array<i64: 2, 128, 32>}, {pipeline_mode = #tpu.pipeline_mode<synchronous>, transform_indices = @transform_14, window_bounds = array<i64: 2, 1, 32>}, {pipeline_mode = #tpu.pipeline_mode<synchronous>, transform_indices = @transform_15, window_bounds = array<i64: 1, 32>}, {pipeline_mode = #tpu.pipeline_mode<synchronous>, transform_indices = @transform_16, window_bounds = array<i64: 1, 32>}, {pipeline_mode = #tpu.pipeline_mode<synchronous>, transform_indices = @transform_17, window_bounds = array<i64: 32, 128>}, {pipeline_mode = #tpu.pipeline_mode<synchronous>, transform_indices = @transform_18, window_bounds = array<i64: 1, 128>}, {transform_indices = @transform_19, window_bounds = array<i64: 1, 1, 128>}]} {
    %c0 = arith.constant 0 : index
    %c0_0 = arith.constant 0 : index
    %c0_1 = arith.constant 0 : index
    %0 = vector.load %arg1[%c0, %c0_0, %c0_1] : memref<1x5x768xf32, #tpu.memory_space<vmem>>, vector<1x5x768xf32>
    %1 = vector.shape_cast %0 : vector<1x5x768xf32> to vector<5x768xf32>
    %c0_2 = arith.constant 0 : index
    %c0_3 = arith.constant 0 : index
    %2 = vector.load %arg2[%c0_2, %c0_3] : memref<768x32xf32, #tpu.memory_space<vmem>>, vector<768x32xf32>
    %cst = arith.constant dense<0.000000e+00> : vector<5x32xf32>
    %3 = tpu.matmul %1, %2, %cst {dimension_numbers = #tpu.dot_dimension_numbers<[1], [0], [0], [1], [0, 0, 1, 1], [], []>} : vector<5x768xf32>, vector<768x32xf32>, vector<5x32xf32> -> vector<5x32xf32>
    %c0_4 = arith.constant 0 : index
    %c0_5 = arith.constant 0 : index
    %4 = vector.load %arg3[%c0_4, %c0_5] : memref<5x32xf32, #tpu.memory_space<vmem>>, vector<5x32xf32>
    %5 = arith.addf %3, %4 : vector<5x32xf32>
    %c0_6 = arith.constant 0 : index
    %c0_7 = arith.constant 0 : index
    %c0_8 = arith.constant 0 : index
    %6 = vector.load %arg4[%c0_6, %c0_7, %c0_8] : memref<2x1x32xf32, #tpu.memory_space<vmem>>, vector<1x1x32xf32>
    %7 = vector.shape_cast %6 : vector<1x1x32xf32> to vector<1x32xf32>
    %c0_9 = arith.constant 0 : index
    %c0_10 = arith.constant 0 : index
    %c0_11 = arith.constant 0 : index
    %8 = vector.load %arg5[%c0_9, %c0_10, %c0_11] : memref<2x1x32xf32, #tpu.memory_space<vmem>>, vector<1x1x32xf32>
    %9 = vector.shape_cast %8 : vector<1x1x32xf32> to vector<1x32xf32>
    %cst_12 = arith.constant dense<0.000000e+00> : vector<5xf32>
    %10 = vector.multi_reduction <add>, %5, %cst_12 [1] : vector<5x32xf32> to vector<5xf32>
    %11 = vector.shape_cast %10 : vector<5xf32> to vector<5x1xf32>
    %cst_13 = arith.constant 3.200000e+01 : f32
    %12 = vector.broadcast %cst_13 : f32 to vector<5x1xf32>
    %13 = arith.divf %11, %12 : vector<5x1xf32>
    %14 = vector.broadcast %13 : vector<5x1xf32> to vector<5x32xf32>
    %15 = arith.subf %5, %14 : vector<5x32xf32>
    %16 = arith.mulf %15, %15 : vector<5x32xf32>
    %cst_14 = arith.constant dense<0.000000e+00> : vector<5xf32>
    %17 = vector.multi_reduction <add>, %16, %cst_14 [1] : vector<5x32xf32> to vector<5xf32>
    %18 = vector.shape_cast %17 : vector<5xf32> to vector<5x1xf32>
    %cst_15 = arith.constant 3.200000e+01 : f32
    %19 = vector.broadcast %cst_15 : f32 to vector<5x1xf32>
    %20 = arith.divf %18, %19 : vector<5x1xf32>
    %21 = vector.broadcast %13 : vector<5x1xf32> to vector<5x32xf32>
    %22 = arith.subf %5, %21 : vector<5x32xf32>
    %cst_16 = arith.constant 9.99999996E-13 : f32
    %23 = vector.broadcast %cst_16 : f32 to vector<5x1xf32>
    %24 = arith.addf %20, %23 : vector<5x1xf32>
    %25 = math.rsqrt %24 : vector<5x1xf32>
    %26 = vector.broadcast %25 : vector<5x1xf32> to vector<5x32xf32>
    %27 = arith.mulf %22, %26 : vector<5x32xf32>
    %28 = vector.broadcast %7 : vector<1x32xf32> to vector<5x32xf32>
    %29 = arith.mulf %27, %28 : vector<5x32xf32>
    %30 = vector.broadcast %9 : vector<1x32xf32> to vector<5x32xf32>
    %31 = arith.addf %29, %30 : vector<5x32xf32>
    %c0_17 = arith.constant 0 : index
    %c0_18 = arith.constant 0 : index
    %c0_19 = arith.constant 0 : index
    %32 = vector.load %arg6[%c0_17, %c0_18, %c0_19] : memref<2x32x128xf32, #tpu.memory_space<vmem>>, vector<1x32x128xf32>
    %33 = vector.shape_cast %32 : vector<1x32x128xf32> to vector<32x128xf32>
    %cst_20 = arith.constant dense<0.000000e+00> : vector<5x128xf32>
    %34 = tpu.matmul %31, %33, %cst_20 {dimension_numbers = #tpu.dot_dimension_numbers<[1], [0], [0], [1], [0, 0, 1, 1], [], []>} : vector<5x32xf32>, vector<32x128xf32>, vector<5x128xf32> -> vector<5x128xf32>
    %c0_21 = arith.constant 0 : index
    %c0_22 = arith.constant 0 : index
    %c0_23 = arith.constant 0 : index
    %35 = vector.load %arg7[%c0_21, %c0_22, %c0_23] : memref<2x1x128xf32, #tpu.memory_space<vmem>>, vector<1x1x128xf32>
    %36 = vector.shape_cast %35 : vector<1x1x128xf32> to vector<1x128xf32>
    %37 = vector.broadcast %36 : vector<1x128xf32> to vector<5x128xf32>
    %38 = arith.addf %34, %37 : vector<5x128xf32>
    %c0_24 = arith.constant 0 : index
    %c0_25 = arith.constant 0 : index
    %c0_26 = arith.constant 0 : index
    %39 = vector.load %arg8[%c0_24, %c0_25, %c0_26] : memref<2x32x32xf32, #tpu.memory_space<vmem>>, vector<1x32x32xf32>
    %40 = vector.shape_cast %39 : vector<1x32x32xf32> to vector<32x32xf32>
    %c0_27 = arith.constant 0 : index
    %c0_28 = arith.constant 0 : index
    %c0_29 = arith.constant 0 : index
    %41 = vector.load %arg9[%c0_27, %c0_28, %c0_29] : memref<2x1x32xf32, #tpu.memory_space<vmem>>, vector<1x1x32xf32>
    %42 = vector.shape_cast %41 : vector<1x1x32xf32> to vector<1x32xf32>
    %43 = vector.broadcast %42 : vector<1x32xf32> to vector<5x32xf32>
    %44 = arith.addf %43, %5 : vector<5x32xf32>
    %45 = vector.extract_strided_slice %38 {offsets = [0, 0], sizes = [5, 8], strides = [1, 1]} : vector<5x128xf32> to vector<5x8xf32>
    %46 = vector.extract_strided_slice %38 {offsets = [0, 32], sizes = [5, 8], strides = [1, 1]} : vector<5x128xf32> to vector<5x8xf32>
    %47 = vector.extract_strided_slice %38 {offsets = [0, 64], sizes = [5, 8], strides = [1, 1]} : vector<5x128xf32> to vector<5x8xf32>
    %cst_30 = arith.constant dense<0.000000e+00> : vector<5x5xf32>
    %48 = tpu.matmul %45, %46, %cst_30 {dimension_numbers = #tpu.dot_dimension_numbers<[1], [1], [0], [0], [0, 0, 1, 0], [], []>} : vector<5x8xf32>, vector<5x8xf32>, vector<5x5xf32> -> vector<5x5xf32>
    %cst_31 = arith.constant dense<0xFF800000> : vector<5xf32>
    %49 = vector.multi_reduction <maximumf>, %48, %cst_31 [1] : vector<5x5xf32> to vector<5xf32>
    %50 = vector.shape_cast %49 : vector<5xf32> to vector<5x1xf32>
    %51 = vector.broadcast %50 : vector<5x1xf32> to vector<5x5xf32>
    %52 = arith.subf %48, %51 : vector<5x5xf32>
    %53 = math.exp %52 : vector<5x5xf32>
    %cst_32 = arith.constant dense<0.000000e+00> : vector<5xf32>
    %54 = vector.multi_reduction <add>, %53, %cst_32 [1] : vector<5x5xf32> to vector<5xf32>
    %55 = vector.shape_cast %54 : vector<5xf32> to vector<5x1xf32>
    %56 = tpu.reciprocal %55 {approx = true} : vector<5x1xf32> -> vector<5x1xf32>
    %57 = vector.broadcast %56 : vector<5x1xf32> to vector<5x5xf32>
    %58 = arith.mulf %53, %57 : vector<5x5xf32>
    %cst_33 = arith.constant dense<0.000000e+00> : vector<5x8xf32>
    %59 = tpu.matmul %58, %47, %cst_33 {dimension_numbers = #tpu.dot_dimension_numbers<[1], [0], [0], [1], [0, 0, 1, 1], [], []>} : vector<5x5xf32>, vector<5x8xf32>, vector<5x8xf32> -> vector<5x8xf32>
    %60 = vector.extract_strided_slice %40 {offsets = [0, 0], sizes = [8, 32], strides = [1, 1]} : vector<32x32xf32> to vector<8x32xf32>
    %cst_34 = arith.constant dense<0.000000e+00> : vector<5x32xf32>
    %61 = tpu.matmul %59, %60, %cst_34 {dimension_numbers = #tpu.dot_dimension_numbers<[1], [0], [0], [1], [0, 0, 1, 1], [], []>} : vector<5x8xf32>, vector<8x32xf32>, vector<5x32xf32> -> vector<5x32xf32>
    %62 = arith.addf %44, %61 : vector<5x32xf32>
    %63 = vector.extract_strided_slice %38 {offsets = [0, 8], sizes = [5, 8], strides = [1, 1]} : vector<5x128xf32> to vector<5x8xf32>
    %64 = vector.extract_strided_slice %38 {offsets = [0, 40], sizes = [5, 8], strides = [1, 1]} : vector<5x128xf32> to vector<5x8xf32>
    %65 = vector.extract_strided_slice %38 {offsets = [0, 72], sizes = [5, 8], strides = [1, 1]} : vector<5x128xf32> to vector<5x8xf32>
    %cst_35 = arith.constant dense<0.000000e+00> : vector<5x5xf32>
    %66 = tpu.matmul %63, %64, %cst_35 {dimension_numbers = #tpu.dot_dimension_numbers<[1], [1], [0], [0], [0, 0, 1, 0], [], []>} : vector<5x8xf32>, vector<5x8xf32>, vector<5x5xf32> -> vector<5x5xf32>
    %cst_36 = arith.constant dense<0xFF800000> : vector<5xf32>
    %67 = vector.multi_reduction <maximumf>, %66, %cst_36 [1] : vector<5x5xf32> to vector<5xf32>
    %68 = vector.shape_cast %67 : vector<5xf32> to vector<5x1xf32>
    %69 = vector.broadcast %68 : vector<5x1xf32> to vector<5x5xf32>
    %70 = arith.subf %66, %69 : vector<5x5xf32>
    %71 = math.exp %70 : vector<5x5xf32>
    %cst_37 = arith.constant dense<0.000000e+00> : vector<5xf32>
    %72 = vector.multi_reduction <add>, %71, %cst_37 [1] : vector<5x5xf32> to vector<5xf32>
    %73 = vector.shape_cast %72 : vector<5xf32> to vector<5x1xf32>
    %74 = tpu.reciprocal %73 {approx = true} : vector<5x1xf32> -> vector<5x1xf32>
    %75 = vector.broadcast %74 : vector<5x1xf32> to vector<5x5xf32>
    %76 = arith.mulf %71, %75 : vector<5x5xf32>
    %cst_38 = arith.constant dense<0.000000e+00> : vector<5x8xf32>
    %77 = tpu.matmul %76, %65, %cst_38 {dimension_numbers = #tpu.dot_dimension_numbers<[1], [0], [0], [1], [0, 0, 1, 1], [], []>} : vector<5x5xf32>, vector<5x8xf32>, vector<5x8xf32> -> vector<5x8xf32>
    %78 = vector.extract_strided_slice %40 {offsets = [8, 0], sizes = [8, 32], strides = [1, 1]} : vector<32x32xf32> to vector<8x32xf32>
    %cst_39 = arith.constant dense<0.000000e+00> : vector<5x32xf32>
    %79 = tpu.matmul %77, %78, %cst_39 {dimension_numbers = #tpu.dot_dimension_numbers<[1], [0], [0], [1], [0, 0, 1, 1], [], []>} : vector<5x8xf32>, vector<8x32xf32>, vector<5x32xf32> -> vector<5x32xf32>
    %80 = arith.addf %62, %79 : vector<5x32xf32>
    %81 = vector.extract_strided_slice %38 {offsets = [0, 16], sizes = [5, 8], strides = [1, 1]} : vector<5x128xf32> to vector<5x8xf32>
    %82 = vector.extract_strided_slice %38 {offsets = [0, 48], sizes = [5, 8], strides = [1, 1]} : vector<5x128xf32> to vector<5x8xf32>
    %83 = vector.extract_strided_slice %38 {offsets = [0, 80], sizes = [5, 8], strides = [1, 1]} : vector<5x128xf32> to vector<5x8xf32>
    %cst_40 = arith.constant dense<0.000000e+00> : vector<5x5xf32>
    %84 = tpu.matmul %81, %82, %cst_40 {dimension_numbers = #tpu.dot_dimension_numbers<[1], [1], [0], [0], [0, 0, 1, 0], [], []>} : vector<5x8xf32>, vector<5x8xf32>, vector<5x5xf32> -> vector<5x5xf32>
    %cst_41 = arith.constant dense<0xFF800000> : vector<5xf32>
    %85 = vector.multi_reduction <maximumf>, %84, %cst_41 [1] : vector<5x5xf32> to vector<5xf32>
    %86 = vector.shape_cast %85 : vector<5xf32> to vector<5x1xf32>
    %87 = vector.broadcast %86 : vector<5x1xf32> to vector<5x5xf32>
    %88 = arith.subf %84, %87 : vector<5x5xf32>
    %89 = math.exp %88 : vector<5x5xf32>
    %cst_42 = arith.constant dense<0.000000e+00> : vector<5xf32>
    %90 = vector.multi_reduction <add>, %89, %cst_42 [1] : vector<5x5xf32> to vector<5xf32>
    %91 = vector.shape_cast %90 : vector<5xf32> to vector<5x1xf32>
    %92 = tpu.reciprocal %91 {approx = true} : vector<5x1xf32> -> vector<5x1xf32>
    %93 = vector.broadcast %92 : vector<5x1xf32> to vector<5x5xf32>
    %94 = arith.mulf %89, %93 : vector<5x5xf32>
    %cst_43 = arith.constant dense<0.000000e+00> : vector<5x8xf32>
    %95 = tpu.matmul %94, %83, %cst_43 {dimension_numbers = #tpu.dot_dimension_numbers<[1], [0], [0], [1], [0, 0, 1, 1], [], []>} : vector<5x5xf32>, vector<5x8xf32>, vector<5x8xf32> -> vector<5x8xf32>
    %96 = vector.extract_strided_slice %40 {offsets = [16, 0], sizes = [8, 32], strides = [1, 1]} : vector<32x32xf32> to vector<8x32xf32>
    %cst_44 = arith.constant dense<0.000000e+00> : vector<5x32xf32>
    %97 = tpu.matmul %95, %96, %cst_44 {dimension_numbers = #tpu.dot_dimension_numbers<[1], [0], [0], [1], [0, 0, 1, 1], [], []>} : vector<5x8xf32>, vector<8x32xf32>, vector<5x32xf32> -> vector<5x32xf32>
    %98 = arith.addf %80, %97 : vector<5x32xf32>
    %99 = vector.extract_strided_slice %38 {offsets = [0, 24], sizes = [5, 8], strides = [1, 1]} : vector<5x128xf32> to vector<5x8xf32>
    %100 = vector.extract_strided_slice %38 {offsets = [0, 56], sizes = [5, 8], strides = [1, 1]} : vector<5x128xf32> to vector<5x8xf32>
    %101 = vector.extract_strided_slice %38 {offsets = [0, 88], sizes = [5, 8], strides = [1, 1]} : vector<5x128xf32> to vector<5x8xf32>
    %cst_45 = arith.constant dense<0.000000e+00> : vector<5x5xf32>
    %102 = tpu.matmul %99, %100, %cst_45 {dimension_numbers = #tpu.dot_dimension_numbers<[1], [1], [0], [0], [0, 0, 1, 0], [], []>} : vector<5x8xf32>, vector<5x8xf32>, vector<5x5xf32> -> vector<5x5xf32>
    %cst_46 = arith.constant dense<0xFF800000> : vector<5xf32>
    %103 = vector.multi_reduction <maximumf>, %102, %cst_46 [1] : vector<5x5xf32> to vector<5xf32>
    %104 = vector.shape_cast %103 : vector<5xf32> to vector<5x1xf32>
    %105 = vector.broadcast %104 : vector<5x1xf32> to vector<5x5xf32>
    %106 = arith.subf %102, %105 : vector<5x5xf32>
    %107 = math.exp %106 : vector<5x5xf32>
    %cst_47 = arith.constant dense<0.000000e+00> : vector<5xf32>
    %108 = vector.multi_reduction <add>, %107, %cst_47 [1] : vector<5x5xf32> to vector<5xf32>
    %109 = vector.shape_cast %108 : vector<5xf32> to vector<5x1xf32>
    %110 = tpu.reciprocal %109 {approx = true} : vector<5x1xf32> -> vector<5x1xf32>
    %111 = vector.broadcast %110 : vector<5x1xf32> to vector<5x5xf32>
    %112 = arith.mulf %107, %111 : vector<5x5xf32>
    %cst_48 = arith.constant dense<0.000000e+00> : vector<5x8xf32>
    %113 = tpu.matmul %112, %101, %cst_48 {dimension_numbers = #tpu.dot_dimension_numbers<[1], [0], [0], [1], [0, 0, 1, 1], [], []>} : vector<5x5xf32>, vector<5x8xf32>, vector<5x8xf32> -> vector<5x8xf32>
    %114 = vector.extract_strided_slice %40 {offsets = [24, 0], sizes = [8, 32], strides = [1, 1]} : vector<32x32xf32> to vector<8x32xf32>
    %cst_49 = arith.constant dense<0.000000e+00> : vector<5x32xf32>
    %115 = tpu.matmul %113, %114, %cst_49 {dimension_numbers = #tpu.dot_dimension_numbers<[1], [0], [0], [1], [0, 0, 1, 1], [], []>} : vector<5x8xf32>, vector<8x32xf32>, vector<5x32xf32> -> vector<5x32xf32>
    %116 = arith.addf %98, %115 : vector<5x32xf32>
    %c0_50 = arith.constant 0 : index
    %c0_51 = arith.constant 0 : index
    %c0_52 = arith.constant 0 : index
    %117 = vector.load %arg10[%c0_50, %c0_51, %c0_52] : memref<2x1x32xf32, #tpu.memory_space<vmem>>, vector<1x1x32xf32>
    %118 = vector.shape_cast %117 : vector<1x1x32xf32> to vector<1x32xf32>
    %c0_53 = arith.constant 0 : index
    %c0_54 = arith.constant 0 : index
    %c0_55 = arith.constant 0 : index
    %119 = vector.load %arg11[%c0_53, %c0_54, %c0_55] : memref<2x1x32xf32, #tpu.memory_space<vmem>>, vector<1x1x32xf32>
    %120 = vector.shape_cast %119 : vector<1x1x32xf32> to vector<1x32xf32>
    %cst_56 = arith.constant dense<0.000000e+00> : vector<5xf32>
    %121 = vector.multi_reduction <add>, %116, %cst_56 [1] : vector<5x32xf32> to vector<5xf32>
    %122 = vector.shape_cast %121 : vector<5xf32> to vector<5x1xf32>
    %cst_57 = arith.constant 3.200000e+01 : f32
    %123 = vector.broadcast %cst_57 : f32 to vector<5x1xf32>
    %124 = arith.divf %122, %123 : vector<5x1xf32>
    %125 = vector.broadcast %124 : vector<5x1xf32> to vector<5x32xf32>
    %126 = arith.subf %116, %125 : vector<5x32xf32>
    %127 = arith.mulf %126, %126 : vector<5x32xf32>
    %cst_58 = arith.constant dense<0.000000e+00> : vector<5xf32>
    %128 = vector.multi_reduction <add>, %127, %cst_58 [1] : vector<5x32xf32> to vector<5xf32>
    %129 = vector.shape_cast %128 : vector<5xf32> to vector<5x1xf32>
    %cst_59 = arith.constant 3.200000e+01 : f32
    %130 = vector.broadcast %cst_59 : f32 to vector<5x1xf32>
    %131 = arith.divf %129, %130 : vector<5x1xf32>
    %132 = vector.broadcast %124 : vector<5x1xf32> to vector<5x32xf32>
    %133 = arith.subf %116, %132 : vector<5x32xf32>
    %cst_60 = arith.constant 9.99999996E-13 : f32
    %134 = vector.broadcast %cst_60 : f32 to vector<5x1xf32>
    %135 = arith.addf %131, %134 : vector<5x1xf32>
    %136 = math.rsqrt %135 : vector<5x1xf32>
    %137 = vector.broadcast %136 : vector<5x1xf32> to vector<5x32xf32>
    %138 = arith.mulf %133, %137 : vector<5x32xf32>
    %139 = vector.broadcast %118 : vector<1x32xf32> to vector<5x32xf32>
    %140 = arith.mulf %138, %139 : vector<5x32xf32>
    %141 = vector.broadcast %120 : vector<1x32xf32> to vector<5x32xf32>
    %142 = arith.addf %140, %141 : vector<5x32xf32>
    %c0_61 = arith.constant 0 : index
    %c0_62 = arith.constant 0 : index
    %c0_63 = arith.constant 0 : index
    %143 = vector.load %arg12[%c0_61, %c0_62, %c0_63] : memref<2x32x128xf32, #tpu.memory_space<vmem>>, vector<1x32x128xf32>
    %144 = vector.shape_cast %143 : vector<1x32x128xf32> to vector<32x128xf32>
    %cst_64 = arith.constant dense<0.000000e+00> : vector<5x128xf32>
    %145 = tpu.matmul %142, %144, %cst_64 {dimension_numbers = #tpu.dot_dimension_numbers<[1], [0], [0], [1], [0, 0, 1, 1], [], []>} : vector<5x32xf32>, vector<32x128xf32>, vector<5x128xf32> -> vector<5x128xf32>
    %c0_65 = arith.constant 0 : index
    %c0_66 = arith.constant 0 : index
    %c0_67 = arith.constant 0 : index
    %146 = vector.load %arg13[%c0_65, %c0_66, %c0_67] : memref<2x1x128xf32, #tpu.memory_space<vmem>>, vector<1x1x128xf32>
    %147 = vector.shape_cast %146 : vector<1x1x128xf32> to vector<1x128xf32>
    %148 = vector.broadcast %147 : vector<1x128xf32> to vector<5x128xf32>
    %149 = arith.addf %145, %148 : vector<5x128xf32>
    %cst_68 = arith.constant 5.000000e-01 : f32
    %150 = vector.broadcast %cst_68 : f32 to vector<5x128xf32>
    %151 = arith.mulf %150, %149 : vector<5x128xf32>
    %cst_69 = arith.constant 0.707106769 : f32
    %152 = vector.broadcast %cst_69 : f32 to vector<5x128xf32>
    %153 = arith.mulf %149, %152 : vector<5x128xf32>
    %154 = math.erf %153 : vector<5x128xf32>
    %cst_70 = arith.constant 1.000000e+00 : f32
    %155 = vector.broadcast %cst_70 : f32 to vector<5x128xf32>
    %156 = arith.addf %155, %154 : vector<5x128xf32>
    %157 = arith.mulf %151, %156 : vector<5x128xf32>
    %c0_71 = arith.constant 0 : index
    %c0_72 = arith.constant 0 : index
    %c0_73 = arith.constant 0 : index
    %158 = vector.load %arg14[%c0_71, %c0_72, %c0_73] : memref<2x128x32xf32, #tpu.memory_space<vmem>>, vector<1x128x32xf32>
    %159 = vector.shape_cast %158 : vector<1x128x32xf32> to vector<128x32xf32>
    %cst_74 = arith.constant dense<0.000000e+00> : vector<5x32xf32>
    %160 = tpu.matmul %157, %159, %cst_74 {dimension_numbers = #tpu.dot_dimension_numbers<[1], [0], [0], [1], [0, 0, 1, 1], [], []>} : vector<5x128xf32>, vector<128x32xf32>, vector<5x32xf32> -> vector<5x32xf32>
    %c0_75 = arith.constant 0 : index
    %c0_76 = arith.constant 0 : index
    %c0_77 = arith.constant 0 : index
    %161 = vector.load %arg15[%c0_75, %c0_76, %c0_77] : memref<2x1x32xf32, #tpu.memory_space<vmem>>, vector<1x1x32xf32>
    %162 = vector.shape_cast %161 : vector<1x1x32xf32> to vector<1x32xf32>
    %163 = vector.broadcast %162 : vector<1x32xf32> to vector<5x32xf32>
    %164 = arith.addf %160, %163 : vector<5x32xf32>
    %165 = arith.addf %164, %116 : vector<5x32xf32>
    %c1 = arith.constant 1 : index
    %c0_78 = arith.constant 0 : index
    %c0_79 = arith.constant 0 : index
    %166 = vector.load %arg4[%c1, %c0_78, %c0_79] : memref<2x1x32xf32, #tpu.memory_space<vmem>>, vector<1x1x32xf32>
    %167 = vector.shape_cast %166 : vector<1x1x32xf32> to vector<1x32xf32>
    %c1_80 = arith.constant 1 : index
    %c0_81 = arith.constant 0 : index
    %c0_82 = arith.constant 0 : index
    %168 = vector.load %arg5[%c1_80, %c0_81, %c0_82] : memref<2x1x32xf32, #tpu.memory_space<vmem>>, vector<1x1x32xf32>
    %169 = vector.shape_cast %168 : vector<1x1x32xf32> to vector<1x32xf32>
    %cst_83 = arith.constant dense<0.000000e+00> : vector<5xf32>
    %170 = vector.multi_reduction <add>, %165, %cst_83 [1] : vector<5x32xf32> to vector<5xf32>
    %171 = vector.shape_cast %170 : vector<5xf32> to vector<5x1xf32>
    %cst_84 = arith.constant 3.200000e+01 : f32
    %172 = vector.broadcast %cst_84 : f32 to vector<5x1xf32>
    %173 = arith.divf %171, %172 : vector<5x1xf32>
    %174 = vector.broadcast %173 : vector<5x1xf32> to vector<5x32xf32>
    %175 = arith.subf %165, %174 : vector<5x32xf32>
    %176 = arith.mulf %175, %175 : vector<5x32xf32>
    %cst_85 = arith.constant dense<0.000000e+00> : vector<5xf32>
    %177 = vector.multi_reduction <add>, %176, %cst_85 [1] : vector<5x32xf32> to vector<5xf32>
    %178 = vector.shape_cast %177 : vector<5xf32> to vector<5x1xf32>
    %cst_86 = arith.constant 3.200000e+01 : f32
    %179 = vector.broadcast %cst_86 : f32 to vector<5x1xf32>
    %180 = arith.divf %178, %179 : vector<5x1xf32>
    %181 = vector.broadcast %173 : vector<5x1xf32> to vector<5x32xf32>
    %182 = arith.subf %165, %181 : vector<5x32xf32>
    %cst_87 = arith.constant 9.99999996E-13 : f32
    %183 = vector.broadcast %cst_87 : f32 to vector<5x1xf32>
    %184 = arith.addf %180, %183 : vector<5x1xf32>
    %185 = math.rsqrt %184 : vector<5x1xf32>
    %186 = vector.broadcast %185 : vector<5x1xf32> to vector<5x32xf32>
    %187 = arith.mulf %182, %186 : vector<5x32xf32>
    %188 = vector.broadcast %167 : vector<1x32xf32> to vector<5x32xf32>
    %189 = arith.mulf %187, %188 : vector<5x32xf32>
    %190 = vector.broadcast %169 : vector<1x32xf32> to vector<5x32xf32>
    %191 = arith.addf %189, %190 : vector<5x32xf32>
    %c1_88 = arith.constant 1 : index
    %c0_89 = arith.constant 0 : index
    %c0_90 = arith.constant 0 : index
    %192 = vector.load %arg6[%c1_88, %c0_89, %c0_90] : memref<2x32x128xf32, #tpu.memory_space<vmem>>, vector<1x32x128xf32>
    %193 = vector.shape_cast %192 : vector<1x32x128xf32> to vector<32x128xf32>
    %cst_91 = arith.constant dense<0.000000e+00> : vector<5x128xf32>
    %194 = tpu.matmul %191, %193, %cst_91 {dimension_numbers = #tpu.dot_dimension_numbers<[1], [0], [0], [1], [0, 0, 1, 1], [], []>} : vector<5x32xf32>, vector<32x128xf32>, vector<5x128xf32> -> vector<5x128xf32>
    %c1_92 = arith.constant 1 : index
    %c0_93 = arith.constant 0 : index
    %c0_94 = arith.constant 0 : index
    %195 = vector.load %arg7[%c1_92, %c0_93, %c0_94] : memref<2x1x128xf32, #tpu.memory_space<vmem>>, vector<1x1x128xf32>
    %196 = vector.shape_cast %195 : vector<1x1x128xf32> to vector<1x128xf32>
    %197 = vector.broadcast %196 : vector<1x128xf32> to vector<5x128xf32>
    %198 = arith.addf %194, %197 : vector<5x128xf32>
    %c1_95 = arith.constant 1 : index
    %c0_96 = arith.constant 0 : index
    %c0_97 = arith.constant 0 : index
    %199 = vector.load %arg8[%c1_95, %c0_96, %c0_97] : memref<2x32x32xf32, #tpu.memory_space<vmem>>, vector<1x32x32xf32>
    %200 = vector.shape_cast %199 : vector<1x32x32xf32> to vector<32x32xf32>
    %c1_98 = arith.constant 1 : index
    %c0_99 = arith.constant 0 : index
    %c0_100 = arith.constant 0 : index
    %201 = vector.load %arg9[%c1_98, %c0_99, %c0_100] : memref<2x1x32xf32, #tpu.memory_space<vmem>>, vector<1x1x32xf32>
    %202 = vector.shape_cast %201 : vector<1x1x32xf32> to vector<1x32xf32>
    %203 = vector.extract_strided_slice %165 {offsets = [0, 0], sizes = [1, 32], strides = [1, 1]} : vector<5x32xf32> to vector<1x32xf32>
    %204 = arith.addf %202, %203 : vector<1x32xf32>
    %205 = vector.extract_strided_slice %198 {offsets = [0, 0], sizes = [1, 8], strides = [1, 1]} : vector<5x128xf32> to vector<1x8xf32>
    %206 = vector.extract_strided_slice %198 {offsets = [0, 32], sizes = [5, 8], strides = [1, 1]} : vector<5x128xf32> to vector<5x8xf32>
    %207 = vector.extract_strided_slice %198 {offsets = [0, 64], sizes = [5, 8], strides = [1, 1]} : vector<5x128xf32> to vector<5x8xf32>
    %cst_101 = arith.constant dense<0.000000e+00> : vector<1x5xf32>
    %208 = tpu.matmul %205, %206, %cst_101 {dimension_numbers = #tpu.dot_dimension_numbers<[1], [1], [0], [0], [0, 0, 1, 0], [], []>} : vector<1x8xf32>, vector<5x8xf32>, vector<1x5xf32> -> vector<1x5xf32>
    %cst_102 = arith.constant dense<0xFF800000> : vector<1xf32>
    %209 = vector.multi_reduction <maximumf>, %208, %cst_102 [1] : vector<1x5xf32> to vector<1xf32>
    %210 = vector.shape_cast %209 : vector<1xf32> to vector<1x1xf32>
    %211 = vector.broadcast %210 : vector<1x1xf32> to vector<1x5xf32>
    %212 = arith.subf %208, %211 : vector<1x5xf32>
    %213 = math.exp %212 : vector<1x5xf32>
    %cst_103 = arith.constant dense<0.000000e+00> : vector<1xf32>
    %214 = vector.multi_reduction <add>, %213, %cst_103 [1] : vector<1x5xf32> to vector<1xf32>
    %215 = vector.shape_cast %214 : vector<1xf32> to vector<1x1xf32>
    %216 = tpu.reciprocal %215 {approx = true} : vector<1x1xf32> -> vector<1x1xf32>
    %217 = vector.broadcast %216 : vector<1x1xf32> to vector<1x5xf32>
    %218 = arith.mulf %213, %217 : vector<1x5xf32>
    %cst_104 = arith.constant dense<0.000000e+00> : vector<1x8xf32>
    %219 = tpu.matmul %218, %207, %cst_104 {dimension_numbers = #tpu.dot_dimension_numbers<[1], [0], [0], [1], [0, 0, 1, 1], [], []>} : vector<1x5xf32>, vector<5x8xf32>, vector<1x8xf32> -> vector<1x8xf32>
    %220 = vector.extract_strided_slice %200 {offsets = [0, 0], sizes = [8, 32], strides = [1, 1]} : vector<32x32xf32> to vector<8x32xf32>
    %cst_105 = arith.constant dense<0.000000e+00> : vector<1x32xf32>
    %221 = tpu.matmul %219, %220, %cst_105 {dimension_numbers = #tpu.dot_dimension_numbers<[1], [0], [0], [1], [0, 0, 1, 1], [], []>} : vector<1x8xf32>, vector<8x32xf32>, vector<1x32xf32> -> vector<1x32xf32>
    %222 = arith.addf %204, %221 : vector<1x32xf32>
    %223 = vector.extract_strided_slice %198 {offsets = [0, 8], sizes = [1, 8], strides = [1, 1]} : vector<5x128xf32> to vector<1x8xf32>
    %224 = vector.extract_strided_slice %198 {offsets = [0, 40], sizes = [5, 8], strides = [1, 1]} : vector<5x128xf32> to vector<5x8xf32>
    %225 = vector.extract_strided_slice %198 {offsets = [0, 72], sizes = [5, 8], strides = [1, 1]} : vector<5x128xf32> to vector<5x8xf32>
    %cst_106 = arith.constant dense<0.000000e+00> : vector<1x5xf32>
    %226 = tpu.matmul %223, %224, %cst_106 {dimension_numbers = #tpu.dot_dimension_numbers<[1], [1], [0], [0], [0, 0, 1, 0], [], []>} : vector<1x8xf32>, vector<5x8xf32>, vector<1x5xf32> -> vector<1x5xf32>
    %cst_107 = arith.constant dense<0xFF800000> : vector<1xf32>
    %227 = vector.multi_reduction <maximumf>, %226, %cst_107 [1] : vector<1x5xf32> to vector<1xf32>
    %228 = vector.shape_cast %227 : vector<1xf32> to vector<1x1xf32>
    %229 = vector.broadcast %228 : vector<1x1xf32> to vector<1x5xf32>
    %230 = arith.subf %226, %229 : vector<1x5xf32>
    %231 = math.exp %230 : vector<1x5xf32>
    %cst_108 = arith.constant dense<0.000000e+00> : vector<1xf32>
    %232 = vector.multi_reduction <add>, %231, %cst_108 [1] : vector<1x5xf32> to vector<1xf32>
    %233 = vector.shape_cast %232 : vector<1xf32> to vector<1x1xf32>
    %234 = tpu.reciprocal %233 {approx = true} : vector<1x1xf32> -> vector<1x1xf32>
    %235 = vector.broadcast %234 : vector<1x1xf32> to vector<1x5xf32>
    %236 = arith.mulf %231, %235 : vector<1x5xf32>
    %cst_109 = arith.constant dense<0.000000e+00> : vector<1x8xf32>
    %237 = tpu.matmul %236, %225, %cst_109 {dimension_numbers = #tpu.dot_dimension_numbers<[1], [0], [0], [1], [0, 0, 1, 1], [], []>} : vector<1x5xf32>, vector<5x8xf32>, vector<1x8xf32> -> vector<1x8xf32>
    %238 = vector.extract_strided_slice %200 {offsets = [8, 0], sizes = [8, 32], strides = [1, 1]} : vector<32x32xf32> to vector<8x32xf32>
    %cst_110 = arith.constant dense<0.000000e+00> : vector<1x32xf32>
    %239 = tpu.matmul %237, %238, %cst_110 {dimension_numbers = #tpu.dot_dimension_numbers<[1], [0], [0], [1], [0, 0, 1, 1], [], []>} : vector<1x8xf32>, vector<8x32xf32>, vector<1x32xf32> -> vector<1x32xf32>
    %240 = arith.addf %222, %239 : vector<1x32xf32>
    %241 = vector.extract_strided_slice %198 {offsets = [0, 16], sizes = [1, 8], strides = [1, 1]} : vector<5x128xf32> to vector<1x8xf32>
    %242 = vector.extract_strided_slice %198 {offsets = [0, 48], sizes = [5, 8], strides = [1, 1]} : vector<5x128xf32> to vector<5x8xf32>
    %243 = vector.extract_strided_slice %198 {offsets = [0, 80], sizes = [5, 8], strides = [1, 1]} : vector<5x128xf32> to vector<5x8xf32>
    %cst_111 = arith.constant dense<0.000000e+00> : vector<1x5xf32>
    %244 = tpu.matmul %241, %242, %cst_111 {dimension_numbers = #tpu.dot_dimension_numbers<[1], [1], [0], [0], [0, 0, 1, 0], [], []>} : vector<1x8xf32>, vector<5x8xf32>, vector<1x5xf32> -> vector<1x5xf32>
    %cst_112 = arith.constant dense<0xFF800000> : vector<1xf32>
    %245 = vector.multi_reduction <maximumf>, %244, %cst_112 [1] : vector<1x5xf32> to vector<1xf32>
    %246 = vector.shape_cast %245 : vector<1xf32> to vector<1x1xf32>
    %247 = vector.broadcast %246 : vector<1x1xf32> to vector<1x5xf32>
    %248 = arith.subf %244, %247 : vector<1x5xf32>
    %249 = math.exp %248 : vector<1x5xf32>
    %cst_113 = arith.constant dense<0.000000e+00> : vector<1xf32>
    %250 = vector.multi_reduction <add>, %249, %cst_113 [1] : vector<1x5xf32> to vector<1xf32>
    %251 = vector.shape_cast %250 : vector<1xf32> to vector<1x1xf32>
    %252 = tpu.reciprocal %251 {approx = true} : vector<1x1xf32> -> vector<1x1xf32>
    %253 = vector.broadcast %252 : vector<1x1xf32> to vector<1x5xf32>
    %254 = arith.mulf %249, %253 : vector<1x5xf32>
    %cst_114 = arith.constant dense<0.000000e+00> : vector<1x8xf32>
    %255 = tpu.matmul %254, %243, %cst_114 {dimension_numbers = #tpu.dot_dimension_numbers<[1], [0], [0], [1], [0, 0, 1, 1], [], []>} : vector<1x5xf32>, vector<5x8xf32>, vector<1x8xf32> -> vector<1x8xf32>
    %256 = vector.extract_strided_slice %200 {offsets = [16, 0], sizes = [8, 32], strides = [1, 1]} : vector<32x32xf32> to vector<8x32xf32>
    %cst_115 = arith.constant dense<0.000000e+00> : vector<1x32xf32>
    %257 = tpu.matmul %255, %256, %cst_115 {dimension_numbers = #tpu.dot_dimension_numbers<[1], [0], [0], [1], [0, 0, 1, 1], [], []>} : vector<1x8xf32>, vector<8x32xf32>, vector<1x32xf32> -> vector<1x32xf32>
    %258 = arith.addf %240, %257 : vector<1x32xf32>
    %259 = vector.extract_strided_slice %198 {offsets = [0, 24], sizes = [1, 8], strides = [1, 1]} : vector<5x128xf32> to vector<1x8xf32>
    %260 = vector.extract_strided_slice %198 {offsets = [0, 56], sizes = [5, 8], strides = [1, 1]} : vector<5x128xf32> to vector<5x8xf32>
    %261 = vector.extract_strided_slice %198 {offsets = [0, 88], sizes = [5, 8], strides = [1, 1]} : vector<5x128xf32> to vector<5x8xf32>
    %cst_116 = arith.constant dense<0.000000e+00> : vector<1x5xf32>
    %262 = tpu.matmul %259, %260, %cst_116 {dimension_numbers = #tpu.dot_dimension_numbers<[1], [1], [0], [0], [0, 0, 1, 0], [], []>} : vector<1x8xf32>, vector<5x8xf32>, vector<1x5xf32> -> vector<1x5xf32>
    %cst_117 = arith.constant dense<0xFF800000> : vector<1xf32>
    %263 = vector.multi_reduction <maximumf>, %262, %cst_117 [1] : vector<1x5xf32> to vector<1xf32>
    %264 = vector.shape_cast %263 : vector<1xf32> to vector<1x1xf32>
    %265 = vector.broadcast %264 : vector<1x1xf32> to vector<1x5xf32>
    %266 = arith.subf %262, %265 : vector<1x5xf32>
    %267 = math.exp %266 : vector<1x5xf32>
    %cst_118 = arith.constant dense<0.000000e+00> : vector<1xf32>
    %268 = vector.multi_reduction <add>, %267, %cst_118 [1] : vector<1x5xf32> to vector<1xf32>
    %269 = vector.shape_cast %268 : vector<1xf32> to vector<1x1xf32>
    %270 = tpu.reciprocal %269 {approx = true} : vector<1x1xf32> -> vector<1x1xf32>
    %271 = vector.broadcast %270 : vector<1x1xf32> to vector<1x5xf32>
    %272 = arith.mulf %267, %271 : vector<1x5xf32>
    %cst_119 = arith.constant dense<0.000000e+00> : vector<1x8xf32>
    %273 = tpu.matmul %272, %261, %cst_119 {dimension_numbers = #tpu.dot_dimension_numbers<[1], [0], [0], [1], [0, 0, 1, 1], [], []>} : vector<1x5xf32>, vector<5x8xf32>, vector<1x8xf32> -> vector<1x8xf32>
    %274 = vector.extract_strided_slice %200 {offsets = [24, 0], sizes = [8, 32], strides = [1, 1]} : vector<32x32xf32> to vector<8x32xf32>
    %cst_120 = arith.constant dense<0.000000e+00> : vector<1x32xf32>
    %275 = tpu.matmul %273, %274, %cst_120 {dimension_numbers = #tpu.dot_dimension_numbers<[1], [0], [0], [1], [0, 0, 1, 1], [], []>} : vector<1x8xf32>, vector<8x32xf32>, vector<1x32xf32> -> vector<1x32xf32>
    %276 = arith.addf %258, %275 : vector<1x32xf32>
    %c1_121 = arith.constant 1 : index
    %c0_122 = arith.constant 0 : index
    %c0_123 = arith.constant 0 : index
    %277 = vector.load %arg10[%c1_121, %c0_122, %c0_123] : memref<2x1x32xf32, #tpu.memory_space<vmem>>, vector<1x1x32xf32>
    %278 = vector.shape_cast %277 : vector<1x1x32xf32> to vector<1x32xf32>
    %c1_124 = arith.constant 1 : index
    %c0_125 = arith.constant 0 : index
    %c0_126 = arith.constant 0 : index
    %279 = vector.load %arg11[%c1_124, %c0_125, %c0_126] : memref<2x1x32xf32, #tpu.memory_space<vmem>>, vector<1x1x32xf32>
    %280 = vector.shape_cast %279 : vector<1x1x32xf32> to vector<1x32xf32>
    %cst_127 = arith.constant dense<0.000000e+00> : vector<1xf32>
    %281 = vector.multi_reduction <add>, %276, %cst_127 [1] : vector<1x32xf32> to vector<1xf32>
    %282 = vector.shape_cast %281 : vector<1xf32> to vector<1x1xf32>
    %cst_128 = arith.constant 3.200000e+01 : f32
    %283 = vector.broadcast %cst_128 : f32 to vector<1x1xf32>
    %284 = arith.divf %282, %283 : vector<1x1xf32>
    %285 = vector.broadcast %284 : vector<1x1xf32> to vector<1x32xf32>
    %286 = arith.subf %276, %285 : vector<1x32xf32>
    %287 = arith.mulf %286, %286 : vector<1x32xf32>
    %cst_129 = arith.constant dense<0.000000e+00> : vector<1xf32>
    %288 = vector.multi_reduction <add>, %287, %cst_129 [1] : vector<1x32xf32> to vector<1xf32>
    %289 = vector.shape_cast %288 : vector<1xf32> to vector<1x1xf32>
    %cst_130 = arith.constant 3.200000e+01 : f32
    %290 = vector.broadcast %cst_130 : f32 to vector<1x1xf32>
    %291 = arith.divf %289, %290 : vector<1x1xf32>
    %292 = vector.broadcast %284 : vector<1x1xf32> to vector<1x32xf32>
    %293 = arith.subf %276, %292 : vector<1x32xf32>
    %cst_131 = arith.constant 9.99999996E-13 : f32
    %294 = vector.broadcast %cst_131 : f32 to vector<1x1xf32>
    %295 = arith.addf %291, %294 : vector<1x1xf32>
    %296 = math.rsqrt %295 : vector<1x1xf32>
    %297 = vector.broadcast %296 : vector<1x1xf32> to vector<1x32xf32>
    %298 = arith.mulf %293, %297 : vector<1x32xf32>
    %299 = arith.mulf %298, %278 : vector<1x32xf32>
    %300 = arith.addf %299, %280 : vector<1x32xf32>
    %c1_132 = arith.constant 1 : index
    %c0_133 = arith.constant 0 : index
    %c0_134 = arith.constant 0 : index
    %301 = vector.load %arg12[%c1_132, %c0_133, %c0_134] : memref<2x32x128xf32, #tpu.memory_space<vmem>>, vector<1x32x128xf32>
    %302 = vector.shape_cast %301 : vector<1x32x128xf32> to vector<32x128xf32>
    %cst_135 = arith.constant dense<0.000000e+00> : vector<1x128xf32>
    %303 = tpu.matmul %300, %302, %cst_135 {dimension_numbers = #tpu.dot_dimension_numbers<[1], [0], [0], [1], [0, 0, 1, 1], [], []>} : vector<1x32xf32>, vector<32x128xf32>, vector<1x128xf32> -> vector<1x128xf32>
    %c1_136 = arith.constant 1 : index
    %c0_137 = arith.constant 0 : index
    %c0_138 = arith.constant 0 : index
    %304 = vector.load %arg13[%c1_136, %c0_137, %c0_138] : memref<2x1x128xf32, #tpu.memory_space<vmem>>, vector<1x1x128xf32>
    %305 = vector.shape_cast %304 : vector<1x1x128xf32> to vector<1x128xf32>
    %306 = arith.addf %303, %305 : vector<1x128xf32>
    %cst_139 = arith.constant 5.000000e-01 : f32
    %307 = vector.broadcast %cst_139 : f32 to vector<1x128xf32>
    %308 = arith.mulf %307, %306 : vector<1x128xf32>
    %cst_140 = arith.constant 0.707106769 : f32
    %309 = vector.broadcast %cst_140 : f32 to vector<1x128xf32>
    %310 = arith.mulf %306, %309 : vector<1x128xf32>
    %311 = math.erf %310 : vector<1x128xf32>
    %cst_141 = arith.constant 1.000000e+00 : f32
    %312 = vector.broadcast %cst_141 : f32 to vector<1x128xf32>
    %313 = arith.addf %312, %311 : vector<1x128xf32>
    %314 = arith.mulf %308, %313 : vector<1x128xf32>
    %c1_142 = arith.constant 1 : index
    %c0_143 = arith.constant 0 : index
    %c0_144 = arith.constant 0 : index
    %315 = vector.load %arg14[%c1_142, %c0_143, %c0_144] : memref<2x128x32xf32, #tpu.memory_space<vmem>>, vector<1x128x32xf32>
    %316 = vector.shape_cast %315 : vector<1x128x32xf32> to vector<128x32xf32>
    %cst_145 = arith.constant dense<0.000000e+00> : vector<1x32xf32>
    %317 = tpu.matmul %314, %316, %cst_145 {dimension_numbers = #tpu.dot_dimension_numbers<[1], [0], [0], [1], [0, 0, 1, 1], [], []>} : vector<1x128xf32>, vector<128x32xf32>, vector<1x32xf32> -> vector<1x32xf32>
    %c1_146 = arith.constant 1 : index
    %c0_147 = arith.constant 0 : index
    %c0_148 = arith.constant 0 : index
    %318 = vector.load %arg15[%c1_146, %c0_147, %c0_148] : memref<2x1x32xf32, #tpu.memory_space<vmem>>, vector<1x1x32xf32>
    %319 = vector.shape_cast %318 : vector<1x1x32xf32> to vector<1x32xf32>
    %320 = arith.addf %317, %319 : vector<1x32xf32>
    %321 = arith.addf %320, %276 : vector<1x32xf32>
    %c0_149 = arith.constant 0 : index
    %c0_150 = arith.constant 0 : index
    %322 = vector.load %arg16[%c0_149, %c0_150] : memref<1x32xf32, #tpu.memory_space<vmem>>, vector<1x32xf32>
    %c0_151 = arith.constant 0 : index
    %c0_152 = arith.constant 0 : index
    %323 = vector.load %arg17[%c0_151, %c0_152] : memref<1x32xf32, #tpu.memory_space<vmem>>, vector<1x32xf32>
    %cst_153 = arith.constant dense<0.000000e+00> : vector<1xf32>
    %324 = vector.multi_reduction <add>, %321, %cst_153 [1] : vector<1x32xf32> to vector<1xf32>
    %325 = vector.shape_cast %324 : vector<1xf32> to vector<1x1xf32>
    %cst_154 = arith.constant 3.200000e+01 : f32
    %326 = vector.broadcast %cst_154 : f32 to vector<1x1xf32>
    %327 = arith.divf %325, %326 : vector<1x1xf32>
    %328 = vector.broadcast %327 : vector<1x1xf32> to vector<1x32xf32>
    %329 = arith.subf %321, %328 : vector<1x32xf32>
    %330 = arith.mulf %329, %329 : vector<1x32xf32>
    %cst_155 = arith.constant dense<0.000000e+00> : vector<1xf32>
    %331 = vector.multi_reduction <add>, %330, %cst_155 [1] : vector<1x32xf32> to vector<1xf32>
    %332 = vector.shape_cast %331 : vector<1xf32> to vector<1x1xf32>
    %cst_156 = arith.constant 3.200000e+01 : f32
    %333 = vector.broadcast %cst_156 : f32 to vector<1x1xf32>
    %334 = arith.divf %332, %333 : vector<1x1xf32>
    %335 = vector.broadcast %327 : vector<1x1xf32> to vector<1x32xf32>
    %336 = arith.subf %321, %335 : vector<1x32xf32>
    %cst_157 = arith.constant 9.99999996E-13 : f32
    %337 = vector.broadcast %cst_157 : f32 to vector<1x1xf32>
    %338 = arith.addf %334, %337 : vector<1x1xf32>
    %339 = math.rsqrt %338 : vector<1x1xf32>
    %340 = vector.broadcast %339 : vector<1x1xf32> to vector<1x32xf32>
    %341 = arith.mulf %336, %340 : vector<1x32xf32>
    %342 = arith.mulf %341, %322 : vector<1x32xf32>
    %343 = arith.addf %342, %323 : vector<1x32xf32>
    %c0_158 = arith.constant 0 : index
    %c0_159 = arith.constant 0 : index
    %344 = vector.load %arg18[%c0_158, %c0_159] : memref<32x128xf32, #tpu.memory_space<vmem>>, vector<32x128xf32>
    %cst_160 = arith.constant dense<0.000000e+00> : vector<1x128xf32>
    %345 = tpu.matmul %343, %344, %cst_160 {dimension_numbers = #tpu.dot_dimension_numbers<[1], [0], [0], [1], [0, 0, 1, 1], [], []>} : vector<1x32xf32>, vector<32x128xf32>, vector<1x128xf32> -> vector<1x128xf32>
    %c0_161 = arith.constant 0 : index
    %c0_162 = arith.constant 0 : index
    %346 = vector.load %arg19[%c0_161, %c0_162] : memref<1x128xf32, #tpu.memory_space<vmem>>, vector<1x128xf32>
    %347 = arith.addf %345, %346 : vector<1x128xf32>
    %c0_163 = arith.constant 0 : index
    %c0_164 = arith.constant 0 : index
    %c0_165 = arith.constant 0 : index
    %348 = vector.load %arg20[%c0_163, %c0_164, %c0_165] : memref<1x1x128xf32, #tpu.memory_space<vmem>>, vector<1x1x128xf32>
    %349 = vector.shape_cast %348 : vector<1x1x128xf32> to vector<1x128xf32>
    %350 = vector.shape_cast %347 : vector<1x128xf32> to vector<1x1x128xf32>
    tpu.vector_store %arg20[%c0_163, %c0_164, %c0_165], %350 {strides = array<i32>} : memref<1x1x128xf32, #tpu.memory_space<vmem>>, vector<1x1x128xf32>,
    return
  }
  func.func @transform_0(%arg0: i32) -> (i32, i32, i32) {
    %c0_i32 = arith.constant 0 : i32
    %c0_i32_0 = arith.constant 0 : i32
    %c0_i32_1 = arith.constant 0 : i32
    return %arg0, %c0_i32, %c0_i32_0 : i32, i32, i32
  }
  func.func @transform_1(%arg0: i32) -> (i32, i32) {
    %c0_i32 = arith.constant 0 : i32
    %c0_i32_0 = arith.constant 0 : i32
    %c0_i32_1 = arith.constant 0 : i32
    return %c0_i32, %c0_i32_0 : i32, i32
  }
  func.func @transform_2(%arg0: i32) -> (i32, i32) {
    %c0_i32 = arith.constant 0 : i32
    %c0_i32_0 = arith.constant 0 : i32
    %c0_i32_1 = arith.constant 0 : i32
    return %c0_i32, %c0_i32_0 : i32, i32
  }
  func.func @transform_3(%arg0: i32) -> (i32, i32, i32) {
    %c0_i32 = arith.constant 0 : i32
    %c0_i32_0 = arith.constant 0 : i32
    %c0_i32_1 = arith.constant 0 : i32
    %c0_i32_2 = arith.constant 0 : i32
    return %c0_i32, %c0_i32_0, %c0_i32_1 : i32, i32, i32
  }
  func.func @transform_4(%arg0: i32) -> (i32, i32, i32) {
    %c0_i32 = arith.constant 0 : i32
    %c0_i32_0 = arith.constant 0 : i32
    %c0_i32_1 = arith.constant 0 : i32
    %c0_i32_2 = arith.constant 0 : i32
    return %c0_i32, %c0_i32_0, %c0_i32_1 : i32, i32, i32
  }
  func.func @transform_5(%arg0: i32) -> (i32, i32, i32) {
    %c0_i32 = arith.constant 0 : i32
    %c0_i32_0 = arith.constant 0 : i32
    %c0_i32_1 = arith.constant 0 : i32
    %c0_i32_2 = arith.constant 0 : i32
    return %c0_i32, %c0_i32_0, %c0_i32_1 : i32, i32, i32
  }
  func.func @transform_6(%arg0: i32) -> (i32, i32, i32) {
    %c0_i32 = arith.constant 0 : i32
    %c0_i32_0 = arith.constant 0 : i32
    %c0_i32_1 = arith.constant 0 : i32
    %c0_i32_2 = arith.constant 0 : i32
    return %c0_i32, %c0_i32_0, %c0_i32_1 : i32, i32, i32
  }
  func.func @transform_7(%arg0: i32) -> (i32, i32, i32) {
    %c0_i32 = arith.constant 0 : i32
    %c0_i32_0 = arith.constant 0 : i32
    %c0_i32_1 = arith.constant 0 : i32
    %c0_i32_2 = arith.constant 0 : i32
    return %c0_i32, %c0_i32_0, %c0_i32_1 : i32, i32, i32
  }
  func.func @transform_8(%arg0: i32) -> (i32, i32, i32) {
    %c0_i32 = arith.constant 0 : i32
    %c0_i32_0 = arith.constant 0 : i32
    %c0_i32_1 = arith.constant 0 : i32
    %c0_i32_2 = arith.constant 0 : i32
    return %c0_i32, %c0_i32_0, %c0_i32_1 : i32, i32, i32
  }
  func.func @transform_9(%arg0: i32) -> (i32, i32, i32) {
    %c0_i32 = arith.constant 0 : i32
    %c0_i32_0 = arith.constant 0 : i32
    %c0_i32_1 = arith.constant 0 : i32
    %c0_i32_2 = arith.constant 0 : i32
    return %c0_i32, %c0_i32_0, %c0_i32_1 : i32, i32, i32
  }
  func.func @transform_10(%arg0: i32) -> (i32, i32, i32) {
    %c0_i32 = arith.constant 0 : i32
    %c0_i32_0 = arith.constant 0 : i32
    %c0_i32_1 = arith.constant 0 : i32
    %c0_i32_2 = arith.constant 0 : i32
    return %c0_i32, %c0_i32_0, %c0_i32_1 : i32, i32, i32
  }
  func.func @transform_11(%arg0: i32) -> (i32, i32, i32) {
    %c0_i32 = arith.constant 0 : i32
    %c0_i32_0 = arith.constant 0 : i32
    %c0_i32_1 = arith.constant 0 : i32
    %c0_i32_2 = arith.constant 0 : i32
    return %c0_i32, %c0_i32_0, %c0_i32_1 : i32, i32, i32
  }
  func.func @transform_12(%arg0: i32) -> (i32, i32, i32) {
    %c0_i32 = arith.constant 0 : i32
    %c0_i32_0 = arith.constant 0 : i32
    %c0_i32_1 = arith.constant 0 : i32
    %c0_i32_2 = arith.constant 0 : i32
    return %c0_i32, %c0_i32_0, %c0_i32_1 : i32, i32, i32
  }
  func.func @transform_13(%arg0: i32) -> (i32, i32, i32) {
    %c0_i32 = arith.constant 0 : i32
    %c0_i32_0 = arith.constant 0 : i32
    %c0_i32_1 = arith.constant 0 : i32
    %c0_i32_2 = arith.constant 0 : i32
    return %c0_i32, %c0_i32_0, %c0_i32_1 : i32, i32, i32
  }
  func.func @transform_14(%arg0: i32) -> (i32, i32, i32) {
    %c0_i32 = arith.constant 0 : i32
    %c0_i32_0 = arith.constant 0 : i32
    %c0_i32_1 = arith.constant 0 : i32
    %c0_i32_2 = arith.constant 0 : i32
    return %c0_i32, %c0_i32_0, %c0_i32_1 : i32, i32, i32
  }
  func.func @transform_15(%arg0: i32) -> (i32, i32) {
    %c0_i32 = arith.constant 0 : i32
    %c0_i32_0 = arith.constant 0 : i32
    %c0_i32_1 = arith.constant 0 : i32
    return %c0_i32, %c0_i32_0 : i32, i32
  }
  func.func @transform_16(%arg0: i32) -> (i32, i32) {
    %c0_i32 = arith.constant 0 : i32
    %c0_i32_0 = arith.constant 0 : i32
    %c0_i32_1 = arith.constant 0 : i32
    return %c0_i32, %c0_i32_0 : i32, i32
  }
  func.func @transform_17(%arg0: i32) -> (i32, i32) {
    %c0_i32 = arith.constant 0 : i32
    %c0_i32_0 = arith.constant 0 : i32
    %c0_i32_1 = arith.constant 0 : i32
    return %c0_i32, %c0_i32_0 : i32, i32
  }
  func.func @transform_18(%arg0: i32) -> (i32, i32) {
    %c0_i32 = arith.constant 0 : i32
    %c0_i32_0 = arith.constant 0 : i32
    %c0_i32_1 = arith.constant 0 : i32
    return %c0_i32, %c0_i32_0 : i32, i32
  }
  func.func @transform_19(%arg0: i32) -> (i32, i32, i32) {
    %c0_i32 = arith.constant 0 : i32
    %c0_i32_0 = arith.constant 0 : i32
    %c0_i32_1 = arith.constant 0 : i32
    return %arg0, %c0_i32, %c0_i32_0 : i32, i32, i32
  }
}

</mosaic_0001>

<llo_original>
// kernel: vit_forward.1
$region0: #{vit_forward.1}
  #allocation0 [shape = 'u32[]', space=smem, size = 0x4, offset = 0x4, fixed_abs, tag = 'smem constant byte address 0x4 - core index']
  #allocation1 [shape = 'u32[144,128]{1,0:T(1,128)}', space=vmem, size = 0x12000, scoped, tag = 'internal scratch']
  %s0 = inlined_call_operand.vmem [shape: f32[2,5,768], index: 0, kind: input, shape index: {}]
  %s1 = inlined_call_operand.vmem [shape: f32[768,32], index: 1, kind: input, shape index: {}]
  %s2 = inlined_call_operand.vmem [shape: f32[5,32], index: 2, kind: input, shape index: {}]
  %s3 = inlined_call_operand.vmem [shape: f32[2,1,32], index: 3, kind: input, shape index: {}]
  %s4 = inlined_call_operand.vmem [shape: f32[2,1,32], index: 4, kind: input, shape index: {}]
  %s5 = inlined_call_operand.vmem [shape: f32[2,32,128], index: 5, kind: input, shape index: {}]
  %s6 = inlined_call_operand.vmem [shape: f32[2,1,128], index: 6, kind: input, shape index: {}]
  %s7 = inlined_call_operand.vmem [shape: f32[2,32,32], index: 7, kind: input, shape index: {}]
  %s8 = inlined_call_operand.vmem [shape: f32[2,1,32], index: 8, kind: input, shape index: {}]
  %s9 = inlined_call_operand.vmem [shape: f32[2,1,32], index: 9, kind: input, shape index: {}]
  %s10 = inlined_call_operand.vmem [shape: f32[2,1,32], index: 10, kind: input, shape index: {}]
  %s11 = inlined_call_operand.vmem [shape: f32[2,32,128], index: 11, kind: input, shape index: {}]
  %s12 = inlined_call_operand.vmem [shape: f32[2,1,128], index: 12, kind: input, shape index: {}]
  %s13 = inlined_call_operand.vmem [shape: f32[2,128,32], index: 13, kind: input, shape index: {}]
  %s14 = inlined_call_operand.vmem [shape: f32[2,1,32], index: 14, kind: input, shape index: {}]
  %s15 = inlined_call_operand.vmem [shape: f32[1,32], index: 15, kind: input, shape index: {}]
  %s16 = inlined_call_operand.vmem [shape: f32[1,32], index: 16, kind: input, shape index: {}]
  %s17 = inlined_call_operand.vmem [shape: f32[32,128], index: 17, kind: input, shape index: {}]
  %s18 = inlined_call_operand.vmem [shape: f32[1,128], index: 18, kind: input, shape index: {}]
  %s19 = inlined_call_operand.hbm [shape: f32[2,1,128], index: 19, kind: output, shape index: {}]
  %s20 = sld [smem:[#allocation0]]
  $region109: #{vit_forward.1} parent=0
    _
  %s22 = ssub.s32 1, %s20
  %s23 = scalar_select 0, %s22, %s20
  $region1: #{vit_forward.1} parent=0
    #allocation2 [shape = 'u8[1024]{0}', space=vmem, size = 0x400, scoped, tag = 'output window, operand 0']
    #allocation3 [shape = 's32[2]{0}', space=sflag, size = 0x8, scoped, tag = 'scoped memory for vit_forward.1']
    %24 = vsyncpa [#allocation3], 0
    %s25 = scalar_lea.sflag [#allocation3], 1
    %26 = vsyncpa %s25, 0
    loop: start=0, step=1, limit=4
    $region2: #{vit_forward.1} parent=1 // loop_pre_header
      _
    $region3: #{vit_forward.1} parent=1 // loop_header
      %s28 = sphi 0, %s32
      %p29 = scmp.ge.s32.totalorder %s28, 4
      %s38 = sphi 0, %s40
      %s41 = sphi 0, %s38
      %s42 = sphi 0, %s41
      %s58 = sphi 0, %s42
      %s62 = sphi 0, %s62
      %s64 = sphi 0, %s62
      %s65 = sphi 0, %s64
      %s79 = sphi 0, %s65
      %s83 = sphi 0, %s83
      %s85 = sphi 0, %s83
      %s86 = sphi 0, %s85
      %s100 = sphi 0, %s86
      %s104 = sphi 0, %s104
      %s106 = sphi 0, %s104
      %s107 = sphi 0, %s106
      %s121 = sphi 0, %s107
      %s125 = sphi 0, %s125
      %s127 = sphi 0, %s125
      %s128 = sphi 0, %s127
      %s142 = sphi 0, %s128
      %s146 = sphi 0, %s146
      %s148 = sphi 0, %s146
      %s149 = sphi 0, %s148
      %s163 = sphi 0, %s149
      %s167 = sphi 0, %s167
      %s169 = sphi 0, %s167
      %s170 = sphi 0, %s169
      %s184 = sphi 0, %s170
      %s188 = sphi 0, %s188
      %s190 = sphi 0, %s188
      %s191 = sphi 0, %s190
      %s205 = sphi 0, %s191
      %s209 = sphi 0, %s209
      %s211 = sphi 0, %s209
      %s212 = sphi 0, %s211
      %s226 = sphi 0, %s212
      %s230 = sphi 0, %s230
      %s232 = sphi 0, %s230
      %s233 = sphi 0, %s232
      %s247 = sphi 0, %s233
      %s251 = sphi 0, %s251
      %s253 = sphi 0, %s251
      %s254 = sphi 0, %s253
      %s268 = sphi 0, %s254
      %s272 = sphi 0, %s272
      %s274 = sphi 0, %s272
      %s275 = sphi 0, %s274
      %s289 = sphi 0, %s275
      %s293 = sphi 0, %s293
      %s295 = sphi 0, %s293
      %s296 = sphi 0, %s295
      %s310 = sphi 0, %s296
      %s314 = sphi 0, %s314
      %s316 = sphi 0, %s314
      %s317 = sphi 0, %s316
      %s331 = sphi 0, %s317
      %s335 = sphi 0, %s335
      %s337 = sphi 0, %s335
      %s338 = sphi 0, %s337
      %s352 = sphi 0, %s338
      %s356 = sphi 0, %s356
      %s358 = sphi 0, %s356
      %s359 = sphi 0, %s358
      %s373 = sphi 0, %s359
      %s377 = sphi 0, %s377
      %s379 = sphi 0, %s377
      %s380 = sphi 0, %s379
      %s394 = sphi 0, %s380
      %s398 = sphi 0, %s398
      %s400 = sphi 0, %s398
      %s401 = sphi 0, %s400
      %s415 = sphi 0, %s401
      %s419 = sphi 0, %s419
      %s421 = sphi 0, %s419
      %s422 = sphi 0, %s421
      %s436 = sphi 0, %s422
      %s442 = sphi 0, %s444
      %s445 = sphi 0, %s442
      %s446 = sphi 0, %s445
      %s462 = sphi 0, %s446
    $region4: #{vit_forward.1} parent=1 // loop_header_branch
      %31 = sbr.rel (%p29) target = $region8
    $region5: #{vit_forward.1} parent=1 // loop_body
      %s33 = ssub.s32 %s28, 1
      %s34 = ssub.s32 %s28, 2
      %s35 = sadd.s32 %s28, 1
      %s36 = ssub.s32 %s28, %s35
      %p37 = scmp.eq.s32.totalorder %s36, 0
      %s39 = sadd.s32 %s38, 1
      %s40 = scalar_select %p37, %s38, %s39
      %p43 = pneg %p37
      %p44 = scmp.eq.s32.totalorder %s28, 1
      %p45 = por %p43, %p44
      %p46 = scmp.ne.s32.totalorder %s38, %s41
      %p47 = scmp.eq.s32.totalorder %s28, 0
      %p48 = por %p46, %p47
      %p49 = scmp.ne.s32.totalorder %s38, %s41
      %p50 = scmp.eq.s32.totalorder %s33, 1
      %p51 = por %p49, %p50
      %p52 = scmp.ne.s32.totalorder %s41, %s42
      %p53 = scmp.eq.s32.totalorder %s33, 0
      %p54 = por %p52, %p53
      %p55 = scmp.ne.s32.totalorder %s41, %s42
      %p56 = scmp.eq.s32.totalorder %s34, 1
      %p57 = por %p55, %p56
      %p59 = scmp.ne.s32.totalorder %s42, %s58
      %p60 = scmp.eq.s32.totalorder %s34, 0
      %p61 = por %p59, %p60
      %s63 = sadd.s32 %s62, 1
      %p66 = scmp.eq.s32.totalorder %s28, 1
      %p67 = scmp.ne.s32.totalorder %s62, %s64
      %p68 = scmp.eq.s32.totalorder %s28, 0
      %p69 = por %p67, %p68
      %p70 = scmp.ne.s32.totalorder %s62, %s64
      %p71 = scmp.eq.s32.totalorder %s33, 1
      %p72 = por %p70, %p71
      %p73 = scmp.ne.s32.totalorder %s64, %s65
      %p74 = scmp.eq.s32.totalorder %s33, 0
      %p75 = por %p73, %p74
      %p76 = scmp.ne.s32.totalorder %s64, %s65
      %p77 = scmp.eq.s32.totalorder %s34, 1
      %p78 = por %p76, %p77
      %p80 = scmp.ne.s32.totalorder %s65, %s79
      %p81 = scmp.eq.s32.totalorder %s34, 0
      %p82 = por %p80, %p81
      %s84 = sadd.s32 %s83, 1
      %p87 = scmp.eq.s32.totalorder %s28, 1
      %p88 = scmp.ne.s32.totalorder %s83, %s85
      %p89 = scmp.eq.s32.totalorder %s28, 0
      %p90 = por %p88, %p89
      %p91 = scmp.ne.s32.totalorder %s83, %s85
      %p92 = scmp.eq.s32.totalorder %s33, 1
      %p93 = por %p91, %p92
      %p94 = scmp.ne.s32.totalorder %s85, %s86
      %p95 = scmp.eq.s32.totalorder %s33, 0
      %p96 = por %p94, %p95
      %p97 = scmp.ne.s32.totalorder %s85, %s86
      %p98 = scmp.eq.s32.totalorder %s34, 1
      %p99 = por %p97, %p98
      %p101 = scmp.ne.s32.totalorder %s86, %s100
      %p102 = scmp.eq.s32.totalorder %s34, 0
      %p103 = por %p101, %p102
      %s105 = sadd.s32 %s104, 1
      %p108 = scmp.eq.s32.totalorder %s28, 1
      %p109 = scmp.ne.s32.totalorder %s104, %s106
      %p110 = scmp.eq.s32.totalorder %s28, 0
      %p111 = por %p109, %p110
      %p112 = scmp.ne.s32.totalorder %s104, %s106
      %p113 = scmp.eq.s32.totalorder %s33, 1
      %p114 = por %p112, %p113
      %p115 = scmp.ne.s32.totalorder %s106, %s107
      %p116 = scmp.eq.s32.totalorder %s33, 0
      %p117 = por %p115, %p116
      %p118 = scmp.ne.s32.totalorder %s106, %s107
      %p119 = scmp.eq.s32.totalorder %s34, 1
      %p120 = por %p118, %p119
      %p122 = scmp.ne.s32.totalorder %s107, %s121
      %p123 = scmp.eq.s32.totalorder %s34, 0
      %p124 = por %p122, %p123
      %s126 = sadd.s32 %s125, 1
      %p129 = scmp.eq.s32.totalorder %s28, 1
      %p130 = scmp.ne.s32.totalorder %s125, %s127
      %p131 = scmp.eq.s32.totalorder %s28, 0
      %p132 = por %p130, %p131
      %p133 = scmp.ne.s32.totalorder %s125, %s127
      %p134 = scmp.eq.s32.totalorder %s33, 1
      %p135 = por %p133, %p134
      %p136 = scmp.ne.s32.totalorder %s127, %s128
      %p137 = scmp.eq.s32.totalorder %s33, 0
      %p138 = por %p136, %p137
      %p139 = scmp.ne.s32.totalorder %s127, %s128
      %p140 = scmp.eq.s32.totalorder %s34, 1
      %p141 = por %p139, %p140
      %p143 = scmp.ne.s32.totalorder %s128, %s142
      %p144 = scmp.eq.s32.totalorder %s34, 0
      %p145 = por %p143, %p144
      %s147 = sadd.s32 %s146, 1
      %p150 = scmp.eq.s32.totalorder %s28, 1
      %p151 = scmp.ne.s32.totalorder %s146, %s148
      %p152 = scmp.eq.s32.totalorder %s28, 0
      %p153 = por %p151, %p152
      %p154 = scmp.ne.s32.totalorder %s146, %s148
      %p155 = scmp.eq.s32.totalorder %s33, 1
      %p156 = por %p154, %p155
      %p157 = scmp.ne.s32.totalorder %s148, %s149
      %p158 = scmp.eq.s32.totalorder %s33, 0
      %p159 = por %p157, %p158
      %p160 = scmp.ne.s32.totalorder %s148, %s149
      %p161 = scmp.eq.s32.totalorder %s34, 1
      %p162 = por %p160, %p161
      %p164 = scmp.ne.s32.totalorder %s149, %s163
      %p165 = scmp.eq.s32.totalorder %s34, 0
      %p166 = por %p164, %p165
      %s168 = sadd.s32 %s167, 1
      %p171 = scmp.eq.s32.totalorder %s28, 1
      %p172 = scmp.ne.s32.totalorder %s167, %s169
      %p173 = scmp.eq.s32.totalorder %s28, 0
      %p174 = por %p172, %p173
      %p175 = scmp.ne.s32.totalorder %s167, %s169
      %p176 = scmp.eq.s32.totalorder %s33, 1
      %p177 = por %p175, %p176
      %p178 = scmp.ne.s32.totalorder %s169, %s170
      %p179 = scmp.eq.s32.totalorder %s33, 0
      %p180 = por %p178, %p179
      %p181 = scmp.ne.s32.totalorder %s169, %s170
      %p182 = scmp.eq.s32.totalorder %s34, 1
      %p183 = por %p181, %p182
      %p185 = scmp.ne.s32.totalorder %s170, %s184
      %p186 = scmp.eq.s32.totalorder %s34, 0
      %p187 = por %p185, %p186
      %s189 = sadd.s32 %s188, 1
      %p192 = scmp.eq.s32.totalorder %s28, 1
      %p193 = scmp.ne.s32.totalorder %s188, %s190
      %p194 = scmp.eq.s32.totalorder %s28, 0
      %p195 = por %p193, %p194
      %p196 = scmp.ne.s32.totalorder %s188, %s190
      %p197 = scmp.eq.s32.totalorder %s33, 1
      %p198 = por %p196, %p197
      %p199 = scmp.ne.s32.totalorder %s190, %s191
      %p200 = scmp.eq.s32.totalorder %s33, 0
      %p201 = por %p199, %p200
      %p202 = scmp.ne.s32.totalorder %s190, %s191
      %p203 = scmp.eq.s32.totalorder %s34, 1
      %p204 = por %p202, %p203
      %p206 = scmp.ne.s32.totalorder %s191, %s205
      %p207 = scmp.eq.s32.totalorder %s34, 0
      %p208 = por %p206, %p207
      %s210 = sadd.s32 %s209, 1
      %p213 = scmp.eq.s32.totalorder %s28, 1
      %p214 = scmp.ne.s32.totalorder %s209, %s211
      %p215 = scmp.eq.s32.totalorder %s28, 0
      %p216 = por %p214, %p215
      %p217 = scmp.ne.s32.totalorder %s209, %s211
      %p218 = scmp.eq.s32.totalorder %s33, 1
      %p219 = por %p217, %p218
      %p220 = scmp.ne.s32.totalorder %s211, %s212
      %p221 = scmp.eq.s32.totalorder %s33, 0
      %p222 = por %p220, %p221
      %p223 = scmp.ne.s32.totalorder %s211, %s212
      %p224 = scmp.eq.s32.totalorder %s34, 1
      %p225 = por %p223, %p224
      %p227 = scmp.ne.s32.totalorder %s212, %s226
      %p228 = scmp.eq.s32.totalorder %s34, 0
      %p229 = por %p227, %p228
      %s231 = sadd.s32 %s230, 1
      %p234 = scmp.eq.s32.totalorder %s28, 1
      %p235 = scmp.ne.s32.totalorder %s230, %s232
      %p236 = scmp.eq.s32.totalorder %s28, 0
      %p237 = por %p235, %p236
      %p238 = scmp.ne.s32.totalorder %s230, %s232
      %p239 = scmp.eq.s32.totalorder %s33, 1
      %p240 = por %p238, %p239
      %p241 = scmp.ne.s32.totalorder %s232, %s233
      %p242 = scmp.eq.s32.totalorder %s33, 0
      %p243 = por %p241, %p242
      %p244 = scmp.ne.s32.totalorder %s232, %s233
      %p245 = scmp.eq.s32.totalorder %s34, 1
      %p246 = por %p244, %p245
      %p248 = scmp.ne.s32.totalorder %s233, %s247
      %p249 = scmp.eq.s32.totalorder %s34, 0
      %p250 = por %p248, %p249
      %s252 = sadd.s32 %s251, 1
      %p255 = scmp.eq.s32.totalorder %s28, 1
      %p256 = scmp.ne.s32.totalorder %s251, %s253
      %p257 = scmp.eq.s32.totalorder %s28, 0
      %p258 = por %p256, %p257
      %p259 = scmp.ne.s32.totalorder %s251, %s253
      %p260 = scmp.eq.s32.totalorder %s33, 1
      %p261 = por %p259, %p260
      %p262 = scmp.ne.s32.totalorder %s253, %s254
      %p263 = scmp.eq.s32.totalorder %s33, 0
      %p264 = por %p262, %p263
      %p265 = scmp.ne.s32.totalorder %s253, %s254
      %p266 = scmp.eq.s32.totalorder %s34, 1
      %p267 = por %p265, %p266
      %p269 = scmp.ne.s32.totalorder %s254, %s268
      %p270 = scmp.eq.s32.totalorder %s34, 0
      %p271 = por %p269, %p270
      %s273 = sadd.s32 %s272, 1
      %p276 = scmp.eq.s32.totalorder %s28, 1
      %p277 = scmp.ne.s32.totalorder %s272, %s274
      %p278 = scmp.eq.s32.totalorder %s28, 0
      %p279 = por %p277, %p278
      %p280 = scmp.ne.s32.totalorder %s272, %s274
      %p281 = scmp.eq.s32.totalorder %s33, 1
      %p282 = por %p280, %p281
      %p283 = scmp.ne.s32.totalorder %s274, %s275
      %p284 = scmp.eq.s32.totalorder %s33, 0
      %p285 = por %p283, %p284
      %p286 = scmp.ne.s32.totalorder %s274, %s275
      %p287 = scmp.eq.s32.totalorder %s34, 1
      %p288 = por %p286, %p287
      %p290 = scmp.ne.s32.totalorder %s275, %s289
      %p291 = scmp.eq.s32.totalorder %s34, 0
      %p292 = por %p290, %p291
      %s294 = sadd.s32 %s293, 1
      %p297 = scmp.eq.s32.totalorder %s28, 1
      %p298 = scmp.ne.s32.totalorder %s293, %s295
      %p299 = scmp.eq.s32.totalorder %s28, 0
      %p300 = por %p298, %p299
      %p301 = scmp.ne.s32.totalorder %s293, %s295
      %p302 = scmp.eq.s32.totalorder %s33, 1
      %p303 = por %p301, %p302
      %p304 = scmp.ne.s32.totalorder %s295, %s296
      %p305 = scmp.eq.s32.totalorder %s33, 0
      %p306 = por %p304, %p305
      %p307 = scmp.ne.s32.totalorder %s295, %s296
      %p308 = scmp.eq.s32.totalorder %s34, 1
      %p309 = por %p307, %p308
      %p311 = scmp.ne.s32.totalorder %s296, %s310
      %p312 = scmp.eq.s32.totalorder %s34, 0
      %p313 = por %p311, %p312
      %s315 = sadd.s32 %s314, 1
      %p318 = scmp.eq.s32.totalorder %s28, 1
      %p319 = scmp.ne.s32.totalorder %s314, %s316
      %p320 = scmp.eq.s32.totalorder %s28, 0
      %p321 = por %p319, %p320
      %p322 = scmp.ne.s32.totalorder %s314, %s316
      %p323 = scmp.eq.s32.totalorder %s33, 1
      %p324 = por %p322, %p323
      %p325 = scmp.ne.s32.totalorder %s316, %s317
      %p326 = scmp.eq.s32.totalorder %s33, 0
      %p327 = por %p325, %p326
      %p328 = scmp.ne.s32.totalorder %s316, %s317
      %p329 = scmp.eq.s32.totalorder %s34, 1
      %p330 = por %p328, %p329
      %p332 = scmp.ne.s32.totalorder %s317, %s331
      %p333 = scmp.eq.s32.totalorder %s34, 0
      %p334 = por %p332, %p333
      %s336 = sadd.s32 %s335, 1
      %p339 = scmp.eq.s32.totalorder %s28, 1
      %p340 = scmp.ne.s32.totalorder %s335, %s337
      %p341 = scmp.eq.s32.totalorder %s28, 0
      %p342 = por %p340, %p341
      %p343 = scmp.ne.s32.totalorder %s335, %s337
      %p344 = scmp.eq.s32.totalorder %s33, 1
      %p345 = por %p343, %p344
      %p346 = scmp.ne.s32.totalorder %s337, %s338
      %p347 = scmp.eq.s32.totalorder %s33, 0
      %p348 = por %p346, %p347
      %p349 = scmp.ne.s32.totalorder %s337, %s338
      %p350 = scmp.eq.s32.totalorder %s34, 1
      %p351 = por %p349, %p350
      %p353 = scmp.ne.s32.totalorder %s338, %s352
      %p354 = scmp.eq.s32.totalorder %s34, 0
      %p355 = por %p353, %p354
      %s357 = sadd.s32 %s356, 1
      %p360 = scmp.eq.s32.totalorder %s28, 1
      %p361 = scmp.ne.s32.totalorder %s356, %s358
      %p362 = scmp.eq.s32.totalorder %s28, 0
      %p363 = por %p361, %p362
      %p364 = scmp.ne.s32.totalorder %s356, %s358
      %p365 = scmp.eq.s32.totalorder %s33, 1
      %p366 = por %p364, %p365
      %p367 = scmp.ne.s32.totalorder %s358, %s359
      %p368 = scmp.eq.s32.totalorder %s33, 0
      %p369 = por %p367, %p368
      %p370 = scmp.ne.s32.totalorder %s358, %s359
      %p371 = scmp.eq.s32.totalorder %s34, 1
      %p372 = por %p370, %p371
      %p374 = scmp.ne.s32.totalorder %s359, %s373
      %p375 = scmp.eq.s32.totalorder %s34, 0
      %p376 = por %p374, %p375
      %s378 = sadd.s32 %s377, 1
      %p381 = scmp.eq.s32.totalorder %s28, 1
      %p382 = scmp.ne.s32.totalorder %s377, %s379
      %p383 = scmp.eq.s32.totalorder %s28, 0
      %p384 = por %p382, %p383
      %p385 = scmp.ne.s32.totalorder %s377, %s379
      %p386 = scmp.eq.s32.totalorder %s33, 1
      %p387 = por %p385, %p386
      %p388 = scmp.ne.s32.totalorder %s379, %s380
      %p389 = scmp.eq.s32.totalorder %s33, 0
      %p390 = por %p388, %p389
      %p391 = scmp.ne.s32.totalorder %s379, %s380
      %p392 = scmp.eq.s32.totalorder %s34, 1
      %p393 = por %p391, %p392
      %p395 = scmp.ne.s32.totalorder %s380, %s394
      %p396 = scmp.eq.s32.totalorder %s34, 0
      %p397 = por %p395, %p396
      %s399 = sadd.s32 %s398, 1
      %p402 = scmp.eq.s32.totalorder %s28, 1
      %p403 = scmp.ne.s32.totalorder %s398, %s400
      %p404 = scmp.eq.s32.totalorder %s28, 0
      %p405 = por %p403, %p404
      %p406 = scmp.ne.s32.totalorder %s398, %s400
      %p407 = scmp.eq.s32.totalorder %s33, 1
      %p408 = por %p406, %p407
      %p409 = scmp.ne.s32.totalorder %s400, %s401
      %p410 = scmp.eq.s32.totalorder %s33, 0
      %p411 = por %p409, %p410
      %p412 = scmp.ne.s32.totalorder %s400, %s401
      %p413 = scmp.eq.s32.totalorder %s34, 1
      %p414 = por %p412, %p413
      %p416 = scmp.ne.s32.totalorder %s401, %s415
      %p417 = scmp.eq.s32.totalorder %s34, 0
      %p418 = por %p416, %p417
      %s420 = sadd.s32 %s419, 1
      %p423 = scmp.eq.s32.totalorder %s28, 1
      %p424 = scmp.ne.s32.totalorder %s419, %s421
      %p425 = scmp.eq.s32.totalorder %s28, 0
      %p426 = por %p424, %p425
      %p427 = scmp.ne.s32.totalorder %s419, %s421
      %p428 = scmp.eq.s32.totalorder %s33, 1
      %p429 = por %p427, %p428
      %p430 = scmp.ne.s32.totalorder %s421, %s422
      %p431 = scmp.eq.s32.totalorder %s33, 0
      %p432 = por %p430, %p431
      %p433 = scmp.ne.s32.totalorder %s421, %s422
      %p434 = scmp.eq.s32.totalorder %s34, 1
      %p435 = por %p433, %p434
      %p437 = scmp.ne.s32.totalorder %s422, %s436
      %p438 = scmp.eq.s32.totalorder %s34, 0
      %p439 = por %p437, %p438
      %s440 = ssub.s32 %s28, %s35
      %p441 = scmp.eq.s32.totalorder %s440, 0
      %s443 = sadd.s32 %s442, 1
      %s444 = scalar_select %p441, %s442, %s443
      %p447 = pneg %p441
      %p448 = scmp.eq.s32.totalorder %s28, 1
      %p449 = por %p447, %p448
      %p450 = scmp.ne.s32.totalorder %s442, %s445
      %p451 = scmp.eq.s32.totalorder %s28, 0
      %p452 = por %p450, %p451
      %p453 = scmp.ne.s32.totalorder %s442, %s445
      %p454 = scmp.eq.s32.totalorder %s33, 1
      %p455 = por %p453, %p454
      %p456 = scmp.ne.s32.totalorder %s445, %s446
      %p457 = scmp.eq.s32.totalorder %s33, 0
      %p458 = por %p456, %p457
      %p459 = scmp.ne.s32.totalorder %s445, %s446
      %p460 = scmp.eq.s32.totalorder %s34, 1
      %p461 = por %p459, %p460
      %p463 = scmp.ne.s32.totalorder %s446, %s462
      %p464 = scmp.eq.s32.totalorder %s34, 0
      %p465 = por %p463, %p464
      %p466 = scmp.le.s32.totalorder 1, %s28
      %p467 = scmp.lt.s32.totalorder %s28, 3
      %p468 = pnand %p466, %p467
      %p469 = pneg %p468
      // Predicated region
      $region9: #{vit_forward.1} parent=5 // pred_check
        _
      $region10: #{vit_forward.1} parent=5 // pred_check_branch
        %471 = sbr.rel (%p468) target = $region12
      $region11: #{vit_forward.1} parent=5 // pred_region
        %s472 = ssub.s32 %s28, 1
        // Predicated region
        $region13: #{vit_forward.1} parent=11 // pred_check
          %p473 = pneg %p75
        $region14: #{vit_forward.1} parent=11 // pred_check_branch
          %475 = sbr.rel (%p473) target = $region16
        $region15: #{vit_forward.1} parent=11 // pred_region
          _
        $region16: #{vit_forward.1} parent=11 // pred_fallthru
          _
        // Predicated region
        $region17: #{vit_forward.1} parent=11 // pred_check
          %p476 = pneg %p96
        $region18: #{vit_forward.1} parent=11 // pred_check_branch
          %478 = sbr.rel (%p476) target = $region20
        $region19: #{vit_forward.1} parent=11 // pred_region
          _
        $region20: #{vit_forward.1} parent=11 // pred_fallthru
          _
        // Predicated region
        $region21: #{vit_forward.1} parent=11 // pred_check
          %p479 = pneg %p117
        $region22: #{vit_forward.1} parent=11 // pred_check_branch
          %481 = sbr.rel (%p479) target = $region24
        $region23: #{vit_forward.1} parent=11 // pred_region
          _
        $region24: #{vit_forward.1} parent=11 // pred_fallthru
          _
        // Predicated region
        $region25: #{vit_forward.1} parent=11 // pred_check
          %p482 = pneg %p138
        $region26: #{vit_forward.1} parent=11 // pred_check_branch
          %484 = sbr.rel (%p482) target = $region28
        $region27: #{vit_forward.1} parent=11 // pred_region
          _
        $region28: #{vit_forward.1} parent=11 // pred_fallthru
          _
        // Predicated region
        $region29: #{vit_forward.1} parent=11 // pred_check
          %p485 = pneg %p159
        $region30: #{vit_forward.1} parent=11 // pred_check_branch
          %487 = sbr.rel (%p485) target = $region32
        $region31: #{vit_forward.1} parent=11 // pred_region
          _
        $region32: #{vit_forward.1} parent=11 // pred_fallthru
          _
        // Predicated region
        $region33: #{vit_forward.1} parent=11 // pred_check
          %p488 = pneg %p180
        $region34: #{vit_forward.1} parent=11 // pred_check_branch
          %490 = sbr.rel (%p488) target = $region36
        $region35: #{vit_forward.1} parent=11 // pred_region
          _
        $region36: #{vit_forward.1} parent=11 // pred_fallthru
          _
        // Predicated region
        $region37: #{vit_forward.1} parent=11 // pred_check
          %p491 = pneg %p201
        $region38: #{vit_forward.1} parent=11 // pred_check_branch
          %493 = sbr.rel (%p491) target = $region40
        $region39: #{vit_forward.1} parent=11 // pred_region
          _
        $region40: #{vit_forward.1} parent=11 // pred_fallthru
          _
        // Predicated region
        $region41: #{vit_forward.1} parent=11 // pred_check
          %p494 = pneg %p222
        $region42: #{vit_forward.1} parent=11 // pred_check_branch
          %496 = sbr.rel (%p494) target = $region44
        $region43: #{vit_forward.1} parent=11 // pred_region
          _
        $region44: #{vit_forward.1} parent=11 // pred_fallthru
          _
        // Predicated region
        $region45: #{vit_forward.1} parent=11 // pred_check
          %p497 = pneg %p243
        $region46: #{vit_forward.1} parent=11 // pred_check_branch
          %499 = sbr.rel (%p497) target = $region48
        $region47: #{vit_forward.1} parent=11 // pred_region
          _
        $region48: #{vit_forward.1} parent=11 // pred_fallthru
          _
        // Predicated region
        $region49: #{vit_forward.1} parent=11 // pred_check
          %p500 = pneg %p264
        $region50: #{vit_forward.1} parent=11 // pred_check_branch
          %502 = sbr.rel (%p500) target = $region52
        $region51: #{vit_forward.1} parent=11 // pred_region
          _
        $region52: #{vit_forward.1} parent=11 // pred_fallthru
          _
        // Predicated region
        $region53: #{vit_forward.1} parent=11 // pred_check
          %p503 = pneg %p285
        $region54: #{vit_forward.1} parent=11 // pred_check_branch
          %505 = sbr.rel (%p503) target = $region56
        $region55: #{vit_forward.1} parent=11 // pred_region
          _
        $region56: #{vit_forward.1} parent=11 // pred_fallthru
          _
        // Predicated region
        $region57: #{vit_forward.1} parent=11 // pred_check
          %p506 = pneg %p306
        $region58: #{vit_forward.1} parent=11 // pred_check_branch
          %508 = sbr.rel (%p506) target = $region60
        $region59: #{vit_forward.1} parent=11 // pred_region
          _
        $region60: #{vit_forward.1} parent=11 // pred_fallthru
          _
        // Predicated region
        $region61: #{vit_forward.1} parent=11 // pred_check
          %p509 = pneg %p327
        $region62: #{vit_forward.1} parent=11 // pred_check_branch
          %511 = sbr.rel (%p509) target = $region64
        $region63: #{vit_forward.1} parent=11 // pred_region
          _
        $region64: #{vit_forward.1} parent=11 // pred_fallthru
          _
        // Predicated region
        $region65: #{vit_forward.1} parent=11 // pred_check
          %p512 = pneg %p348
        $region66: #{vit_forward.1} parent=11 // pred_check_branch
          %514 = sbr.rel (%p512) target = $region68
        $region67: #{vit_forward.1} parent=11 // pred_region
          _
        $region68: #{vit_forward.1} parent=11 // pred_fallthru
          _
        // Predicated region
        $region69: #{vit_forward.1} parent=11 // pred_check
          %p515 = pneg %p369
        $region70: #{vit_forward.1} parent=11 // pred_check_branch
          %517 = sbr.rel (%p515) target = $region72
        $region71: #{vit_forward.1} parent=11 // pred_region
          _
        $region72: #{vit_forward.1} parent=11 // pred_fallthru
          _
        // Predicated region
        $region73: #{vit_forward.1} parent=11 // pred_check
          %p518 = pneg %p390
        $region74: #{vit_forward.1} parent=11 // pred_check_branch
          %520 = sbr.rel (%p518) target = $region76
        $region75: #{vit_forward.1} parent=11 // pred_region
          _
        $region76: #{vit_forward.1} parent=11 // pred_fallthru
          _
        // Predicated region
        $region77: #{vit_forward.1} parent=11 // pred_check
          %p521 = pneg %p411
        $region78: #{vit_forward.1} parent=11 // pred_check_branch
          %523 = sbr.rel (%p521) target = $region80
        $region79: #{vit_forward.1} parent=11 // pred_region
          _
        $region80: #{vit_forward.1} parent=11 // pred_fallthru
          _
        // Predicated region
        $region81: #{vit_forward.1} parent=11 // pred_check
          %p524 = pneg %p432
        $region82: #{vit_forward.1} parent=11 // pred_check_branch
          %526 = sbr.rel (%p524) target = $region84
        $region83: #{vit_forward.1} parent=11 // pred_region
          _
        $region84: #{vit_forward.1} parent=11 // pred_fallthru
          _
      $region12: #{vit_forward.1} parent=5 // pred_fallthru
        _
      %p527 = scmp.lt.s32.totalorder %s28, 2
      // Predicated region
      $region85: #{vit_forward.1} parent=5 // pred_check
        %p528 = pneg %p527
      $region86: #{vit_forward.1} parent=5 // pred_check_branch
        %530 = sbr.rel (%p528) target = $region88
      $region87: #{vit_forward.1} parent=5 // pred_region
        // Predicated region
        $region89: #{vit_forward.1} parent=87 // pred_check
          %p531 = pneg %p48
        $region90: #{vit_forward.1} parent=87 // pred_check_branch
          %533 = sbr.rel (%p531) target = $region92
        $region91: #{vit_forward.1} parent=87 // pred_region
          %p534 = scmp.lt.s32.totalorder %s28, 1
          %s535 = scalar_select %p534, %s28, 1
          %s536 = smul.addr %s535, 6
          %s537 = smul.addr %s536, 8
          %s538 = scalar_lea.vmem %s0, %s537
        $region92: #{vit_forward.1} parent=87 // pred_fallthru
          _
      $region88: #{vit_forward.1} parent=5 // pred_fallthru
        _
      %p539 = scmp.le.s32.totalorder 1, %s28
      %p540 = scmp.lt.s32.totalorder %s28, 3
      %p541 = pnand %p539, %p540
      %p542 = pneg %p541
      // Predicated region
      $region93: #{vit_forward.1} parent=5 // pred_check
        _
      $region94: #{vit_forward.1} parent=5 // pred_check_branch
        %544 = sbr.rel (%p541) target = $region96
      $region95: #{vit_forward.1} parent=5 // pred_region
        %s545 = ssub.s32 %s28, 1
        %p546 = scmp.lt.s32.totalorder %s33, 1
        %s547 = scalar_select %p546, %s33, 1
        %s548 = smul.addr %s547, 6
        %s549 = smul.addr %s548, 8
        %s550 = scalar_lea.vmem %s0, %s549
        %p551 = pneg %p54
        %p552 = pneg %p51
        %p553 = pneg %p75
        %p554 = pneg %p72
        %p555 = pneg %p96
        %p556 = pneg %p93
        %p557 = pneg %p117
        %p558 = pneg %p114
        %p559 = pneg %p138
        %p560 = pneg %p135
        %p561 = pneg %p159
        %p562 = pneg %p156
        %p563 = pneg %p180
        %p564 = pneg %p177
        %p565 = pneg %p201
        %p566 = pneg %p198
        %p567 = pneg %p222
        %p568 = pneg %p219
        %p569 = pneg %p243
        %p570 = pneg %p240
        %p571 = pneg %p264
        %p572 = pneg %p261
        %p573 = pneg %p285
        %p574 = pneg %p282
        %p575 = pneg %p306
        %p576 = pneg %p303
        %p577 = pneg %p327
        %p578 = pneg %p324
        %p579 = pneg %p348
        %p580 = pneg %p345
        %p581 = pneg %p369
        %p582 = pneg %p366
        %p583 = pneg %p390
        %p584 = pneg %p387
        %p585 = pneg %p411
        %p586 = pneg %p408
        %p587 = pneg %p432
        %p588 = pneg %p429
        %p589 = pneg %p458
        %p590 = pneg %p455
        %s591 = sand.u32 %s445, 1
        %s592 = scalar_lea.sflag [#allocation3], %s591
        %s593 = sand.u32 %s445, 1
        %s594 = scalar_lea.vmem [#allocation2], %s593
        %p595 = scmp.lt.s32.totalorder %s33, 1
        %s596 = scalar_select %p595, %s33, 1
        %s597 = smul.addr %s596, 6
        %s598 = smul.addr %s597, 8
        %s599 = scalar_lea.vmem %s0, %s598
        %v600 = vld [vmem:[%s599] sm:$0x1f]
        %v601 = vld [vmem:[%s599 + $0x8] sm:$0x1f]
        %v602 = vld [vmem:[%s599 + $0x10] sm:$0x1f]
        %v603 = vld [vmem:[%s599 + $0x18] sm:$0x1f]
        %v604 = vld [vmem:[%s599 + $0x20] sm:$0x1f]
        %v605 = vld [vmem:[%s599 + $0x28] sm:$0x1f]
        %v606 = vld [vmem:[%s1] sm:$0xff]
        %v607 = vld [vmem:[%s1 + $0x8] sm:$0xff]
        %v608 = vld [vmem:[%s1 + $0x10] sm:$0xff]
        %v609 = vld [vmem:[%s1 + $0x18] sm:$0xff]
        %v610 = vld [vmem:[%s1 + $0x20] sm:$0xff]
        %v611 = vld [vmem:[%s1 + $0x28] sm:$0xff]
        %v612 = vld [vmem:[%s1 + $0x30] sm:$0xff]
        %v613 = vld [vmem:[%s1 + $0x38] sm:$0xff]
        %v614 = vld [vmem:[%s1 + $0x40] sm:$0xff]
        %v615 = vld [vmem:[%s1 + $0x48] sm:$0xff]
        %v616 = vld [vmem:[%s1 + $0x50] sm:$0xff]
        %v617 = vld [vmem:[%s1 + $0x58] sm:$0xff]
        %v618 = vld [vmem:[%s1 + $0x60] sm:$0xff]
        %v619 = vld [vmem:[%s1 + $0x68] sm:$0xff]
        %v620 = vld [vmem:[%s1 + $0x70] sm:$0xff]
        %v621 = vld [vmem:[%s1 + $0x78] sm:$0xff]
        %v622 = vld [vmem:[%s1 + $0x80] sm:$0xff]
        %v623 = vld [vmem:[%s1 + $0x88] sm:$0xff]
        %v624 = vld [vmem:[%s1 + $0x90] sm:$0xff]
        %v625 = vld [vmem:[%s1 + $0x98] sm:$0xff]
        %v626 = vld [vmem:[%s1 + $0xa0] sm:$0xff]
        %v627 = vld [vmem:[%s1 + $0xa8] sm:$0xff]
        %v628 = vld [vmem:[%s1 + $0xb0] sm:$0xff]
        %v629 = vld [vmem:[%s1 + $0xb8] sm:$0xff]
        %v630 = vld [vmem:[%s1 + $0xc0] sm:$0xff]
        %v631 = vld [vmem:[%s1 + $0xc8] sm:$0xff]
        %v632 = vld [vmem:[%s1 + $0xd0] sm:$0xff]
        %v633 = vld [vmem:[%s1 + $0xd8] sm:$0xff]
        %v634 = vld [vmem:[%s1 + $0xe0] sm:$0xff]
        %v635 = vld [vmem:[%s1 + $0xe8] sm:$0xff]
        %v636 = vld [vmem:[%s1 + $0xf0] sm:$0xff]
        %v637 = vld [vmem:[%s1 + $0xf8] sm:$0xff]
        %v638 = vld [vmem:[%s1 + $0x100] sm:$0xff]
        %v639 = vld [vmem:[%s1 + $0x108] sm:$0xff]
        %v640 = vld [vmem:[%s1 + $0x110] sm:$0xff]
        %v641 = vld [vmem:[%s1 + $0x118] sm:$0xff]
        %v642 = vld [vmem:[%s1 + $0x120] sm:$0xff]
        %v643 = vld [vmem:[%s1 + $0x128] sm:$0xff]
        %v644 = vld [vmem:[%s1 + $0x130] sm:$0xff]
        %v645 = vld [vmem:[%s1 + $0x138] sm:$0xff]
        %v646 = vld [vmem:[%s1 + $0x140] sm:$0xff]
        %v647 = vld [vmem:[%s1 + $0x148] sm:$0xff]
        %v648 = vld [vmem:[%s1 + $0x150] sm:$0xff]
        %v649 = vld [vmem:[%s1 + $0x158] sm:$0xff]
        %v650 = vld [vmem:[%s1 + $0x160] sm:$0xff]
        %v651 = vld [vmem:[%s1 + $0x168] sm:$0xff]
        %v652 = vld [vmem:[%s1 + $0x170] sm:$0xff]
        %v653 = vld [vmem:[%s1 + $0x178] sm:$0xff]
        %v654 = vld [vmem:[%s1 + $0x180] sm:$0xff]
        %v655 = vld [vmem:[%s1 + $0x188] sm:$0xff]
        %v656 = vld [vmem:[%s1 + $0x190] sm:$0xff]
        %v657 = vld [vmem:[%s1 + $0x198] sm:$0xff]
        %v658 = vld [vmem:[%s1 + $0x1a0] sm:$0xff]
        %v659 = vld [vmem:[%s1 + $0x1a8] sm:$0xff]
        %v660 = vld [vmem:[%s1 + $0x1b0] sm:$0xff]
        %v661 = vld [vmem:[%s1 + $0x1b8] sm:$0xff]
        %v662 = vld [vmem:[%s1 + $0x1c0] sm:$0xff]
        %v663 = vld [vmem:[%s1 + $0x1c8] sm:$0xff]
        %v664 = vld [vmem:[%s1 + $0x1d0] sm:$0xff]
        %v665 = vld [vmem:[%s1 + $0x1d8] sm:$0xff]
        %v666 = vld [vmem:[%s1 + $0x1e0] sm:$0xff]
        %v667 = vld [vmem:[%s1 + $0x1e8] sm:$0xff]
        %v668 = vld [vmem:[%s1 + $0x1f0] sm:$0xff]
        %v669 = vld [vmem:[%s1 + $0x1f8] sm:$0xff]
        %v670 = vld [vmem:[%s1 + $0x200] sm:$0xff]
        %v671 = vld [vmem:[%s1 + $0x208] sm:$0xff]
        %v672 = vld [vmem:[%s1 + $0x210] sm:$0xff]
        %v673 = vld [vmem:[%s1 + $0x218] sm:$0xff]
        %v674 = vld [vmem:[%s1 + $0x220] sm:$0xff]
        %v675 = vld [vmem:[%s1 + $0x228] sm:$0xff]
        %v676 = vld [vmem:[%s1 + $0x230] sm:$0xff]
        %v677 = vld [vmem:[%s1 + $0x238] sm:$0xff]
        %v678 = vld [vmem:[%s1 + $0x240] sm:$0xff]
        %v679 = vld [vmem:[%s1 + $0x248] sm:$0xff]
        %v680 = vld [vmem:[%s1 + $0x250] sm:$0xff]
        %v681 = vld [vmem:[%s1 + $0x258] sm:$0xff]
        %v682 = vld [vmem:[%s1 + $0x260] sm:$0xff]
        %v683 = vld [vmem:[%s1 + $0x268] sm:$0xff]
        %v684 = vld [vmem:[%s1 + $0x270] sm:$0xff]
        %v685 = vld [vmem:[%s1 + $0x278] sm:$0xff]
        %v686 = vld [vmem:[%s1 + $0x280] sm:$0xff]
        %v687 = vld [vmem:[%s1 + $0x288] sm:$0xff]
        %v688 = vld [vmem:[%s1 + $0x290] sm:$0xff]
        %v689 = vld [vmem:[%s1 + $0x298] sm:$0xff]
        %v690 = vld [vmem:[%s1 + $0x2a0] sm:$0xff]
        %v691 = vld [vmem:[%s1 + $0x2a8] sm:$0xff]
        %v692 = vld [vmem:[%s1 + $0x2b0] sm:$0xff]
        %v693 = vld [vmem:[%s1 + $0x2b8] sm:$0xff]
        %v694 = vld [vmem:[%s1 + $0x2c0] sm:$0xff]
        %v695 = vld [vmem:[%s1 + $0x2c8] sm:$0xff]
        %v696 = vld [vmem:[%s1 + $0x2d0] sm:$0xff]
        %v697 = vld [vmem:[%s1 + $0x2d8] sm:$0xff]
        %v698 = vld [vmem:[%s1 + $0x2e0] sm:$0xff]
        %v699 = vld [vmem:[%s1 + $0x2e8] sm:$0xff]
        %v700 = vld [vmem:[%s1 + $0x2f0] sm:$0xff]
        %v701 = vld [vmem:[%s1 + $0x2f8] sm:$0xff]
        %v702 = vld [vmem:[%s2] sm:$0x1f]
        %703 = vmatprep.subr.mxu0 0.0
        %704 = vmatpush1.msra.mxu0 %v606
        %705 = vmatprep.subr.mxu0 0.0
        %706 = vmatpush1.msra.mxu0 %v607
        %707 = vmatprep.subr.mxu0 0.0
        %708 = vmatpush1.msra.mxu0 %v608
        %709 = vmatprep.subr.mxu0 0.0
        %710 = vmatpush1.msra.mxu0 %v609
        %711 = vmatprep.subr.mxu0 0.0
        %712 = vmatpush1.msra.mxu0 %v610
        %713 = vmatprep.subr.mxu0 0.0
        %714 = vmatpush1.msra.mxu0 %v611
        %715 = vmatprep.subr.mxu0 0.0
        %716 = vmatpush1.msra.mxu0 %v612
        %717 = vmatprep.subr.mxu0 0.0
        %718 = vmatpush1.msra.mxu0 %v613
        %719 = vmatprep.subr.mxu0 0.0
        %720 = vmatpush1.msra.mxu0 %v614
        %721 = vmatprep.subr.mxu0 0.0
        %722 = vmatpush1.msra.mxu0 %v615
        %723 = vmatprep.subr.mxu0 0.0
        %724 = vmatpush1.msra.mxu0 %v616
        %725 = vmatprep.subr.mxu0 0.0
        %726 = vmatpush1.msra.mxu0 %v617
        %727 = vmatprep.subr.mxu0 0.0
        %728 = vmatpush1.msra.mxu0 %v618
        %729 = vmatprep.subr.mxu0 0.0
        %730 = vmatpush1.msra.mxu0 %v619
        %731 = vmatprep.subr.mxu0 0.0
        %732 = vmatpush1.msra.mxu0 %v620
        %733 = vmatprep.subr.mxu0 0.0
        %734 = vmatpush1.msra.mxu0 %v621
        %735 = vmatprep.subr.mxu0 0.0
        %736 = vmatpush1.msra.mxu0 %v622
        %737 = vmatprep.subr.mxu0 0.0
        %738 = vmatpush1.msra.mxu0 %v623
        %739 = vmatprep.subr.mxu0 0.0
        %740 = vmatpush1.msra.mxu0 %v624
        %741 = vmatprep.subr.mxu0 0.0
        %742 = vmatpush1.msra.mxu0 %v625
        %743 = vmatprep.subr.mxu0 0.0
        %744 = vmatpush1.msra.mxu0 %v626
        %745 = vmatprep.subr.mxu0 0.0
        %746 = vmatpush1.msra.mxu0 %v627
        %747 = vmatprep.subr.mxu0 0.0
        %748 = vmatpush1.msra.mxu0 %v628
        %749 = vmatprep.subr.mxu0 0.0
        %750 = vmatpush1.msra.mxu0 %v629
        %751 = vmatprep.subr.mxu0 0.0
        %752 = vmatpush1.msra.mxu0 %v630
        %753 = vmatprep.subr.mxu0 0.0
        %754 = vmatpush1.msra.mxu0 %v631
        %755 = vmatprep.subr.mxu0 0.0
        %756 = vmatpush1.msra.mxu0 %v632
        %757 = vmatprep.subr.mxu0 0.0
        %758 = vmatpush1.msra.mxu0 %v633
        %759 = vmatprep.subr.mxu0 0.0
        %760 = vmatpush1.msra.mxu0 %v634
        %761 = vmatprep.subr.mxu0 0.0
        %762 = vmatpush1.msra.mxu0 %v635
        %763 = vmatprep.subr.mxu0 0.0
        %764 = vmatpush1.msra.mxu0 %v636
        %765 = vmatprep.subr.mxu0 0.0
        %766 = vmatpush1.msra.mxu0 %v637
        %767 = vmatprep.mubr.f32.mxu0 %v601
        %768 = vmatmul.mubr.f32.gmra.mrb[0].mxu0 %v600
        %v769 = vpop.f32.mrb[0].mxu0
        %v770 = vadd.f32 %v702, %v769
        %v771 = vpop.f32.mrb[0].mxu0
        %772 = vdwg.mxu0
        %773 = vmatprep.subr.mxu0 0.0
        %774 = vmatpush1.msra.mxu0 %v638
        %775 = vmatprep.subr.mxu0 0.0
        %776 = vmatpush1.msra.mxu0 %v639
        %777 = vmatprep.subr.mxu0 0.0
        %778 = vmatpush1.msra.mxu0 %v640
        %779 = vmatprep.subr.mxu0 0.0
        %780 = vmatpush1.msra.mxu0 %v641
        %781 = vmatprep.subr.mxu0 0.0
        %782 = vmatpush1.msra.mxu0 %v642
        %783 = vmatprep.subr.mxu0 0.0
        %784 = vmatpush1.msra.mxu0 %v643
        %785 = vmatprep.subr.mxu0 0.0
        %786 = vmatpush1.msra.mxu0 %v644
        %787 = vmatprep.subr.mxu0 0.0
        %788 = vmatpush1.msra.mxu0 %v645
        %789 = vmatprep.subr.mxu0 0.0
        %790 = vmatpush1.msra.mxu0 %v646
        %791 = vmatprep.subr.mxu0 0.0
        %792 = vmatpush1.msra.mxu0 %v647
        %793 = vmatprep.subr.mxu0 0.0
        %794 = vmatpush1.msra.mxu0 %v648
        %795 = vmatprep.subr.mxu0 0.0
        %796 = vmatpush1.msra.mxu0 %v649
        %797 = vmatprep.subr.mxu0 0.0
        %798 = vmatpush1.msra.mxu0 %v650
        %799 = vmatprep.subr.mxu0 0.0
        %800 = vmatpush1.msra.mxu0 %v651
        %801 = vmatprep.subr.mxu0 0.0
        %802 = vmatpush1.msra.mxu0 %v652
        %803 = vmatprep.subr.mxu0 0.0
        %804 = vmatpush1.msra.mxu0 %v653
        %805 = vmatprep.subr.mxu0 0.0
        %806 = vmatpush1.msra.mxu0 %v654
        %807 = vmatprep.subr.mxu0 0.0
        %808 = vmatpush1.msra.mxu0 %v655
        %809 = vmatprep.subr.mxu0 0.0
        %810 = vmatpush1.msra.mxu0 %v656
        %811 = vmatprep.subr.mxu0 0.0
        %812 = vmatpush1.msra.mxu0 %v657
        %813 = vmatprep.subr.mxu0 0.0
        %814 = vmatpush1.msra.mxu0 %v658
        %815 = vmatprep.subr.mxu0 0.0
        %816 = vmatpush1.msra.mxu0 %v659
        %817 = vmatprep.subr.mxu0 0.0
        %818 = vmatpush1.msra.mxu0 %v660
        %819 = vmatprep.subr.mxu0 0.0
        %820 = vmatpush1.msra.mxu0 %v661
        %821 = vmatprep.subr.mxu0 0.0
        %822 = vmatpush1.msra.mxu0 %v662
        %823 = vmatprep.subr.mxu0 0.0
        %824 = vmatpush1.msra.mxu0 %v663
        %825 = vmatprep.subr.mxu0 0.0
        %826 = vmatpush1.msra.mxu0 %v664
        %827 = vmatprep.subr.mxu0 0.0
        %828 = vmatpush1.msra.mxu0 %v665
        %829 = vmatprep.subr.mxu0 0.0
        %830 = vmatpush1.msra.mxu0 %v666
        %831 = vmatprep.subr.mxu0 0.0
        %832 = vmatpush1.msra.mxu0 %v667
        %833 = vmatprep.subr.mxu0 0.0
        %834 = vmatpush1.msra.mxu0 %v668
        %835 = vmatprep.subr.mxu0 0.0
        %836 = vmatpush1.msra.mxu0 %v669
        %837 = vmatprep.mubr.f32.mxu0 %v603
        %838 = vmatmul.mubr.f32.gmra.mrb[0].mxu0 %v602
        %v839 = vpop.f32.mrb[0].mxu0
        %v840 = vadd.f32 %v770, %v839
        %v841 = vpop.f32.mrb[0].mxu0
        %842 = vdwg.mxu0
        %843 = vmatprep.subr.mxu0 0.0
        %844 = vmatpush1.msra.mxu0 %v670
        %845 = vmatprep.subr.mxu0 0.0
        %846 = vmatpush1.msra.mxu0 %v671
        %847 = vmatprep.subr.mxu0 0.0
        %848 = vmatpush1.msra.mxu0 %v672
        %849 = vmatprep.subr.mxu0 0.0
        %850 = vmatpush1.msra.mxu0 %v673
        %851 = vmatprep.subr.mxu0 0.0
        %852 = vmatpush1.msra.mxu0 %v674
        %853 = vmatprep.subr.mxu0 0.0
        %854 = vmatpush1.msra.mxu0 %v675
        %855 = vmatprep.subr.mxu0 0.0
        %856 = vmatpush1.msra.mxu0 %v676
        %857 = vmatprep.subr.mxu0 0.0
        %858 = vmatpush1.msra.mxu0 %v677
        %859 = vmatprep.subr.mxu0 0.0
        %860 = vmatpush1.msra.mxu0 %v678
        %861 = vmatprep.subr.mxu0 0.0
        %862 = vmatpush1.msra.mxu0 %v679
        %863 = vmatprep.subr.mxu0 0.0
        %864 = vmatpush1.msra.mxu0 %v680
        %865 = vmatprep.subr.mxu0 0.0
        %866 = vmatpush1.msra.mxu0 %v681
        %867 = vmatprep.subr.mxu0 0.0
        %868 = vmatpush1.msra.mxu0 %v682
        %869 = vmatprep.subr.mxu0 0.0
        %870 = vmatpush1.msra.mxu0 %v683
        %871 = vmatprep.subr.mxu0 0.0
        %872 = vmatpush1.msra.mxu0 %v684
        %873 = vmatprep.subr.mxu0 0.0
        %874 = vmatpush1.msra.mxu0 %v685
        %875 = vmatprep.subr.mxu0 0.0
        %876 = vmatpush1.msra.mxu0 %v686
        %877 = vmatprep.subr.mxu0 0.0
        %878 = vmatpush1.msra.mxu0 %v687
        %879 = vmatprep.subr.mxu0 0.0
        %880 = vmatpush1.msra.mxu0 %v688
        %881 = vmatprep.subr.mxu0 0.0
        %882 = vmatpush1.msra.mxu0 %v689
        %883 = vmatprep.subr.mxu0 0.0
        %884 = vmatpush1.msra.mxu0 %v690
        %885 = vmatprep.subr.mxu0 0.0
        %886 = vmatpush1.msra.mxu0 %v691
        %887 = vmatprep.subr.mxu0 0.0
        %888 = vmatpush1.msra.mxu0 %v692
        %889 = vmatprep.subr.mxu0 0.0
        %890 = vmatpush1.msra.mxu0 %v693
        %891 = vmatprep.subr.mxu0 0.0
        %892 = vmatpush1.msra.mxu0 %v694
        %893 = vmatprep.subr.mxu0 0.0
        %894 = vmatpush1.msra.mxu0 %v695
        %895 = vmatprep.subr.mxu0 0.0
        %896 = vmatpush1.msra.mxu0 %v696
        %897 = vmatprep.subr.mxu0 0.0
        %898 = vmatpush1.msra.mxu0 %v697
        %899 = vmatprep.subr.mxu0 0.0
        %900 = vmatpush1.msra.mxu0 %v698
        %901 = vmatprep.subr.mxu0 0.0
        %902 = vmatpush1.msra.mxu0 %v699
        %903 = vmatprep.subr.mxu0 0.0
        %904 = vmatpush1.msra.mxu0 %v700
        %905 = vmatprep.subr.mxu0 0.0
        %906 = vmatpush1.msra.mxu0 %v701
        %907 = vmatprep.mubr.f32.mxu0 %v605
        %908 = vmatmul.mubr.f32.gmra.mrb[0].mxu0 %v604
        %v909 = vpop.f32.mrb[0].mxu0
        %v910 = vadd.f32 %v840, %v909
        %v911 = vpop.f32.mrb[0].mxu0
        %912 = vdwg.mxu0
        %v913 = vld [vmem:[%s3] sm:$0x1]
        %v914 = vld [vmem:[%s4] sm:$0x1]
        %vm915 = vcmask 258048
        %v916 = vsel %vm915, %v910, 0.0
        %917 = vadd.xlane.f32.xlu0 %v916
        %v918 = vpop.xlane.xlu0 %917
        %v919 = vrcp.pop 32.0
        %v920 = vmul.f32 %v918, %v919
        %v921 = vsub.f32 %v910, %v920
        %v922 = vmul.f32 %v921, %v921
        %v923 = vsel %vm915, %v922, 0.0
        %924 = vadd.xlane.f32.xlu0 %v923
        %v925 = vpop.xlane.xlu0 %924
        %v926 = vmul.f32 %v925, %v919
        %v927 = vadd.f32 %v926, 1e-12
        %v928 = vrsqrt.pop %v927
        %v929 = vmul.f32 %v921, %v928
        %v931 = vlaneseq
        %v932 = vshrl.u32 %v931, 7
        %v933 = vsub.s32 0, %v932
        %v934 = vrot.slane %v913, %v933
        %v936 = vmul.f32 %v929, %v934
        %v938 = vlaneseq
        %v939 = vshrl.u32 %v938, 7
        %v940 = vsub.s32 0, %v939
        %v941 = vrot.slane %v914, %v940
        %v943 = vadd.f32 %v936, %v941
        %v944 = vld [vmem:[%s5] sm:$0xff]
        %v945 = vld [vmem:[%s5 + $0x8] sm:$0xff]
        %v946 = vld [vmem:[%s5 + $0x10] sm:$0xff]
        %v947 = vld [vmem:[%s5 + $0x18] sm:$0xff]
        %v948 = vld [vmem:[%s6] sm:$0x1]
        %v950 = vlaneseq
        %v951 = vshrl.u32 %v950, 7
        %v952 = vsub.s32 0, %v951
        %v953 = vrot.slane %v948, %v952
        %vm955 = vcmask 261120
        %v957 = vsel %vm955, %v943, 0
        %959 = vmatprep.subr.mxu0 0.0
        %960 = vmatpush1.msra.mxu0 %v944
        %961 = vmatprep.subr.mxu0 0.0
        %962 = vmatpush1.msra.mxu0 %v945
        %963 = vmatprep.subr.mxu0 0.0
        %964 = vmatpush1.msra.mxu0 %v946
        %965 = vmatprep.subr.mxu0 0.0
        %966 = vmatpush1.msra.mxu0 %v947
        %967 = vmatprep.subr.mxu0 0.0
        %968 = vmatpush1.msra.mxu0 0.0
        %969 = vmatprep.subr.mxu0 0.0
        %970 = vmatpush1.msra.mxu0 0.0
        %971 = vmatprep.subr.mxu0 0.0
        %972 = vmatpush1.msra.mxu0 0.0
        %973 = vmatprep.subr.mxu0 0.0
        %974 = vmatpush1.msra.mxu0 0.0
        %975 = vmatprep.subr.mxu0 0.0
        %976 = vmatpush1.msra.mxu0 0.0
        %977 = vmatprep.subr.mxu0 0.0
        %978 = vmatpush1.msra.mxu0 0.0
        %979 = vmatprep.subr.mxu0 0.0
        %980 = vmatpush1.msra.mxu0 0.0
        %981 = vmatprep.subr.mxu0 0.0
        %982 = vmatpush1.msra.mxu0 0.0
        %983 = vmatprep.subr.mxu0 0.0
        %984 = vmatpush1.msra.mxu0 0.0
        %985 = vmatprep.subr.mxu0 0.0
        %986 = vmatpush1.msra.mxu0 0.0
        %987 = vmatprep.subr.mxu0 0.0
        %988 = vmatpush1.msra.mxu0 0.0
        %989 = vmatprep.subr.mxu0 0.0
        %990 = vmatpush1.msra.mxu0 0.0
        %991 = vmatprep.subr.mxu0 0.0
        %992 = vmatpush1.msra.mxu0 0.0
        %993 = vmatprep.subr.mxu0 0.0
        %994 = vmatpush1.msra.mxu0 0.0
        %995 = vmatprep.subr.mxu0 0.0
        %996 = vmatpush1.msra.mxu0 0.0
        %997 = vmatprep.subr.mxu0 0.0
        %998 = vmatpush1.msra.mxu0 0.0
        %999 = vmatprep.subr.mxu0 0.0
        %1000 = vmatpush1.msra.mxu0 0.0
        %1001 = vmatprep.subr.mxu0 0.0
        %1002 = vmatpush1.msra.mxu0 0.0
        %1003 = vmatprep.subr.mxu0 0.0
        %1004 = vmatpush1.msra.mxu0 0.0
        %1005 = vmatprep.subr.mxu0 0.0
        %1006 = vmatpush1.msra.mxu0 0.0
        %1007 = vmatprep.subr.mxu0 0.0
        %1008 = vmatpush1.msra.mxu0 0.0
        %1009 = vmatprep.subr.mxu0 0.0
        %1010 = vmatpush1.msra.mxu0 0.0
        %1011 = vmatprep.subr.mxu0 0.0
        %1012 = vmatpush1.msra.mxu0 0.0
        %1013 = vmatprep.subr.mxu0 0.0
        %1014 = vmatpush1.msra.mxu0 0.0
        %1015 = vmatprep.subr.mxu0 0.0
        %1016 = vmatpush1.msra.mxu0 0.0
        %1017 = vmatprep.subr.mxu0 0.0
        %1018 = vmatpush1.msra.mxu0 0.0
        %1019 = vmatprep.subr.mxu0 0.0
        %1020 = vmatpush1.msra.mxu0 0.0
        %1021 = vmatprep.subr.mxu0 0.0
        %1022 = vmatpush1.msra.mxu0 0.0
        %1023 = vmatprep.mubr.f32.mxu0 0.0
        %1024 = vmatmul.mubr.f32.gmra.mrb[0].mxu0 %v957
        %v1025 = vpop.f32.mrb[0].mxu0
        %v1026 = vadd.f32 %v953, %v1025
        %v1027 = vpop.f32.mrb[0].mxu0
        %1028 = vdwg.mxu0
        %v1029 = vld [vmem:[%s7] sm:$0xff]
        %v1030 = vld [vmem:[%s7 + $0x8] sm:$0xff]
        %v1031 = vld [vmem:[%s7 + $0x10] sm:$0xff]
        %v1032 = vld [vmem:[%s7 + $0x18] sm:$0xff]
        %v1033 = vld [vmem:[%s8] sm:$0x1]
        %v1035 = vlaneseq
        %v1036 = vshrl.u32 %v1035, 7
        %v1037 = vsub.s32 0, %v1036
        %v1038 = vrot.slane %v1033, %v1037
        %v1040 = vadd.f32 %v1038, %v910
        %1042 = vrot.lane.b32.xlu0 %v1026, 96
        %v1043 = vpop.permute.xlu0 %1042
        %vm1044 = vcmask 64512
        %v1045 = vsel %vm1044, %v1026, 0
        %v1047 = vsel %vm1044, %v1043, 0
        %1049 = vmatprep.subr.mxu0 0.0
        %1050 = vmatpush1.xpose.msra.mxu0 %v1047
        %1051 = vmatprep.subr.mxu0 0.0
        %1052 = vmatpush1.xpose.msra.mxu0 0.0
        %1053 = vmatprep.subr.mxu0 0.0
        %1054 = vmatpush1.xpose.msra.mxu0 0.0
        %1055 = vmatprep.subr.mxu0 0.0
        %1056 = vmatpush1.xpose.msra.mxu0 0.0
        %1057 = vmatprep.subr.mxu0 0.0
        %1058 = vmatpush1.xpose.msra.mxu0 0.0
        %1059 = vmatprep.subr.mxu0 0.0
        %1060 = vmatpush1.xpose.msra.mxu0 0.0
        %1061 = vmatprep.subr.mxu0 0.0
        %1062 = vmatpush1.xpose.msra.mxu0 0.0
        %1063 = vmatprep.subr.mxu0 0.0
        %1064 = vmatpush1.xpose.msra.mxu0 0.0
        %1065 = vmatprep.subr.mxu0 0.0
        %1066 = vmatpush1.xpose.msra.mxu0 0.0
        %1067 = vmatprep.subr.mxu0 0.0
        %1068 = vmatpush1.xpose.msra.mxu0 0.0
        %1069 = vmatprep.subr.mxu0 0.0
        %1070 = vmatpush1.xpose.msra.mxu0 0.0
        %1071 = vmatprep.subr.mxu0 0.0
        %1072 = vmatpush1.xpose.msra.mxu0 0.0
        %1073 = vmatprep.subr.mxu0 0.0
        %1074 = vmatpush1.xpose.msra.mxu0 0.0
        %1075 = vmatprep.subr.mxu0 0.0
        %1076 = vmatpush1.xpose.msra.mxu0 0.0
        %1077 = vmatprep.subr.mxu0 0.0
        %1078 = vmatpush1.xpose.msra.mxu0 0.0
        %1079 = vmatprep.subr.mxu0 0.0
        %1080 = vmatpush1.xpose.msra.mxu0 0.0
        %1081 = vmatprep.subr.mxu0 0.0
        %1082 = vmatpush1.xpose.msra.mxu0 0.0
        %1083 = vmatprep.subr.mxu0 0.0
        %1084 = vmatpush1.xpose.msra.mxu0 0.0
        %1085 = vmatprep.subr.mxu0 0.0
        %1086 = vmatpush1.xpose.msra.mxu0 0.0
        %1087 = vmatprep.subr.mxu0 0.0
        %1088 = vmatpush1.xpose.msra.mxu0 0.0
        %1089 = vmatprep.subr.mxu0 0.0
        %1090 = vmatpush1.xpose.msra.mxu0 0.0
        %1091 = vmatprep.subr.mxu0 0.0
        %1092 = vmatpush1.xpose.msra.mxu0 0.0
        %1093 = vmatprep.subr.mxu0 0.0
        %1094 = vmatpush1.xpose.msra.mxu0 0.0
        %1095 = vmatprep.subr.mxu0 0.0
        %1096 = vmatpush1.xpose.msra.mxu0 0.0
        %1097 = vmatprep.subr.mxu0 0.0
        %1098 = vmatpush1.xpose.msra.mxu0 0.0
        %1099 = vmatprep.subr.mxu0 0.0
        %1100 = vmatpush1.xpose.msra.mxu0 0.0
        %1101 = vmatprep.subr.mxu0 0.0
        %1102 = vmatpush1.xpose.msra.mxu0 0.0
        %1103 = vmatprep.subr.mxu0 0.0
        %1104 = vmatpush1.xpose.msra.mxu0 0.0
        %1105 = vmatprep.subr.mxu0 0.0
        %1106 = vmatpush1.xpose.msra.mxu0 0.0
        %1107 = vmatprep.subr.mxu0 0.0
        %1108 = vmatpush1.xpose.msra.mxu0 0.0
        %1109 = vmatprep.subr.mxu0 0.0
        %1110 = vmatpush1.xpose.msra.mxu0 0.0
        %1111 = vmatprep.subr.mxu0 0.0
        %1112 = vmatpush1.xpose.msra.mxu0 0.0
        %1113 = vmatprep.mubr.f32.mxu0 0.0
        %1114 = vmatmul.mubr.f32.gmra.mrb[0].mxu0 %v1045
        %v1115 = vpop.f32.mrb[0].mxu0
        %v1116 = vadd.f32 0.0, %v1115
        %v1117 = vpop.f32.mrb[0].mxu0
        %1118 = vdwg.mxu0
        %vm1119 = vcmask 36864
        %v1120 = vsel %vm1119, %v1116, -inf
        %1121 = vmax.xlane.f32.xlu0 %v1120
        %v1122 = vpop.xlane.xlu0 %1121
        %v1123 = vsub.f32 %v1116, %v1122
        %v1124 = vmul.f32 %v1123, 1.442695
        %v1125 = vpow.pop %v1124
        %v1126 = vsel %vm1119, %v1125, 0.0
        %1127 = vadd.xlane.f32.xlu0 %v1126
        %v1128 = vpop.xlane.xlu0 %1127
        %v1129 = vrcp.pop %v1128
        %v1130 = vmul.f32 %v1125, %v1129
        %1131 = vrot.lane.b32.xlu0 %v1026, 64
        %v1132 = vpop.permute.xlu0 %1131
        %vm1133 = vcmask 39936
        %v1135 = vsel %vm1133, %v1130, 0
        %vm1137 = vcmask 1044480
        %v1138 = vsel %vm1137, %v1132, 0
        %1140 = vmatprep.subr.mxu0 0.0
        %1141 = vmatpush1.msra.mxu0 %v1138
        %1142 = vmatprep.subr.mxu0 0.0
        %1143 = vmatpush1.msra.mxu0 0.0
        %1144 = vmatprep.subr.mxu0 0.0
        %1145 = vmatpush1.msra.mxu0 0.0
        %1146 = vmatprep.subr.mxu0 0.0
        %1147 = vmatpush1.msra.mxu0 0.0
        %1148 = vmatprep.subr.mxu0 0.0
        %1149 = vmatpush1.msra.mxu0 0.0
        %1150 = vmatprep.subr.mxu0 0.0
        %1151 = vmatpush1.msra.mxu0 0.0
        %1152 = vmatprep.subr.mxu0 0.0
        %1153 = vmatpush1.msra.mxu0 0.0
        %1154 = vmatprep.subr.mxu0 0.0
        %1155 = vmatpush1.msra.mxu0 0.0
        %1156 = vmatprep.subr.mxu0 0.0
        %1157 = vmatpush1.msra.mxu0 0.0
        %1158 = vmatprep.subr.mxu0 0.0
        %1159 = vmatpush1.msra.mxu0 0.0
        %1160 = vmatprep.subr.mxu0 0.0
        %1161 = vmatpush1.msra.mxu0 0.0
        %1162 = vmatprep.subr.mxu0 0.0
        %1163 = vmatpush1.msra.mxu0 0.0
        %1164 = vmatprep.subr.mxu0 0.0
        %1165 = vmatpush1.msra.mxu0 0.0
        %1166 = vmatprep.subr.mxu0 0.0
        %1167 = vmatpush1.msra.mxu0 0.0
        %1168 = vmatprep.subr.mxu0 0.0
        %1169 = vmatpush1.msra.mxu0 0.0
        %1170 = vmatprep.subr.mxu0 0.0
        %1171 = vmatpush1.msra.mxu0 0.0
        %1172 = vmatprep.subr.mxu0 0.0
        %1173 = vmatpush1.msra.mxu0 0.0
        %1174 = vmatprep.subr.mxu0 0.0
        %1175 = vmatpush1.msra.mxu0 0.0
        %1176 = vmatprep.subr.mxu0 0.0
        %1177 = vmatpush1.msra.mxu0 0.0
        %1178 = vmatprep.subr.mxu0 0.0
        %1179 = vmatpush1.msra.mxu0 0.0
        %1180 = vmatprep.subr.mxu0 0.0
        %1181 = vmatpush1.msra.mxu0 0.0
        %1182 = vmatprep.subr.mxu0 0.0
        %1183 = vmatpush1.msra.mxu0 0.0
        %1184 = vmatprep.subr.mxu0 0.0
        %1185 = vmatpush1.msra.mxu0 0.0
        %1186 = vmatprep.subr.mxu0 0.0
        %1187 = vmatpush1.msra.mxu0 0.0
        %1188 = vmatprep.subr.mxu0 0.0
        %1189 = vmatpush1.msra.mxu0 0.0
        %1190 = vmatprep.subr.mxu0 0.0
        %1191 = vmatpush1.msra.mxu0 0.0
        %1192 = vmatprep.subr.mxu0 0.0
        %1193 = vmatpush1.msra.mxu0 0.0
        %1194 = vmatprep.subr.mxu0 0.0
        %1195 = vmatpush1.msra.mxu0 0.0
        %1196 = vmatprep.subr.mxu0 0.0
        %1197 = vmatpush1.msra.mxu0 0.0
        %1198 = vmatprep.subr.mxu0 0.0
        %1199 = vmatpush1.msra.mxu0 0.0
        %1200 = vmatprep.subr.mxu0 0.0
        %1201 = vmatpush1.msra.mxu0 0.0
        %1202 = vmatprep.subr.mxu0 0.0
        %1203 = vmatpush1.msra.mxu0 0.0
        %1204 = vmatprep.mubr.f32.mxu0 0.0
        %1205 = vmatmul.mubr.f32.gmra.mrb[0].mxu0 %v1135
        %v1206 = vpop.f32.mrb[0].mxu0
        %v1207 = vadd.f32 0.0, %v1206
        %v1208 = vpop.f32.mrb[0].mxu0
        %1209 = vdwg.mxu0
        %v1211 = vsel %vm1044, %v1207, 0
        %1213 = vmatprep.subr.mxu0 0.0
        %1214 = vmatpush1.msra.mxu0 %v1029
        %1215 = vmatprep.subr.mxu0 0.0
        %1216 = vmatpush1.msra.mxu0 0.0
        %1217 = vmatprep.subr.mxu0 0.0
        %1218 = vmatpush1.msra.mxu0 0.0
        %1219 = vmatprep.subr.mxu0 0.0
        %1220 = vmatpush1.msra.mxu0 0.0
        %1221 = vmatprep.subr.mxu0 0.0
        %1222 = vmatpush1.msra.mxu0 0.0
        %1223 = vmatprep.subr.mxu0 0.0
        %1224 = vmatpush1.msra.mxu0 0.0
        %1225 = vmatprep.subr.mxu0 0.0
        %1226 = vmatpush1.msra.mxu0 0.0
        %1227 = vmatprep.subr.mxu0 0.0
        %1228 = vmatpush1.msra.mxu0 0.0
        %1229 = vmatprep.subr.mxu0 0.0
        %1230 = vmatpush1.msra.mxu0 0.0
        %1231 = vmatprep.subr.mxu0 0.0
        %1232 = vmatpush1.msra.mxu0 0.0
        %1233 = vmatprep.subr.mxu0 0.0
        %1234 = vmatpush1.msra.mxu0 0.0
        %1235 = vmatprep.subr.mxu0 0.0
        %1236 = vmatpush1.msra.mxu0 0.0
        %1237 = vmatprep.subr.mxu0 0.0
        %1238 = vmatpush1.msra.mxu0 0.0
        %1239 = vmatprep.subr.mxu0 0.0
        %1240 = vmatpush1.msra.mxu0 0.0
        %1241 = vmatprep.subr.mxu0 0.0
        %1242 = vmatpush1.msra.mxu0 0.0
        %1243 = vmatprep.subr.mxu0 0.0
        %1244 = vmatpush1.msra.mxu0 0.0
        %1245 = vmatprep.subr.mxu0 0.0
        %1246 = vmatpush1.msra.mxu0 0.0
        %1247 = vmatprep.subr.mxu0 0.0
        %1248 = vmatpush1.msra.mxu0 0.0
        %1249 = vmatprep.subr.mxu0 0.0
        %1250 = vmatpush1.msra.mxu0 0.0
        %1251 = vmatprep.subr.mxu0 0.0
        %1252 = vmatpush1.msra.mxu0 0.0
        %1253 = vmatprep.subr.mxu0 0.0
        %1254 = vmatpush1.msra.mxu0 0.0
        %1255 = vmatprep.subr.mxu0 0.0
        %1256 = vmatpush1.msra.mxu0 0.0
        %1257 = vmatprep.subr.mxu0 0.0
        %1258 = vmatpush1.msra.mxu0 0.0
        %1259 = vmatprep.subr.mxu0 0.0
        %1260 = vmatpush1.msra.mxu0 0.0
        %1261 = vmatprep.subr.mxu0 0.0
        %1262 = vmatpush1.msra.mxu0 0.0
        %1263 = vmatprep.subr.mxu0 0.0
        %1264 = vmatpush1.msra.mxu0 0.0
        %1265 = vmatprep.subr.mxu0 0.0
        %1266 = vmatpush1.msra.mxu0 0.0
        %1267 = vmatprep.subr.mxu0 0.0
        %1268 = vmatpush1.msra.mxu0 0.0
        %1269 = vmatprep.subr.mxu0 0.0
        %1270 = vmatpush1.msra.mxu0 0.0
        %1271 = vmatprep.subr.mxu0 0.0
        %1272 = vmatpush1.msra.mxu0 0.0
        %1273 = vmatprep.subr.mxu0 0.0
        %1274 = vmatpush1.msra.mxu0 0.0
        %1275 = vmatprep.subr.mxu0 0.0
        %1276 = vmatpush1.msra.mxu0 0.0
        %1277 = vmatprep.mubr.f32.mxu0 0.0
        %1278 = vmatmul.mubr.f32.gmra.mrb[0].mxu0 %v1211
        %v1279 = vpop.f32.mrb[0].mxu0
        %v1280 = vadd.f32 0.0, %v1279
        %v1281 = vpop.f32.mrb[0].mxu0
        %1282 = vdwg.mxu0
        %v1283 = vadd.f32 %v1040, %v1280
        %1284 = vrot.lane.b32.xlu0 %v1026, 120
        %v1285 = vpop.permute.xlu0 %1284
        %1286 = vrot.lane.b32.xlu0 %v1026, 88
        %v1287 = vpop.permute.xlu0 %1286
        %v1288 = vsel %vm1044, %v1285, 0
        %v1290 = vsel %vm1044, %v1287, 0
        %1292 = vmatprep.subr.mxu0 0.0
        %1293 = vmatpush1.xpose.msra.mxu0 %v1290
        %1294 = vmatprep.subr.mxu0 0.0
        %1295 = vmatpush1.xpose.msra.mxu0 0.0
        %1296 = vmatprep.subr.mxu0 0.0
        %1297 = vmatpush1.xpose.msra.mxu0 0.0
        %1298 = vmatprep.subr.mxu0 0.0
        %1299 = vmatpush1.xpose.msra.mxu0 0.0
        %1300 = vmatprep.subr.mxu0 0.0
        %1301 = vmatpush1.xpose.msra.mxu0 0.0
        %1302 = vmatprep.subr.mxu0 0.0
        %1303 = vmatpush1.xpose.msra.mxu0 0.0
        %1304 = vmatprep.subr.mxu0 0.0
        %1305 = vmatpush1.xpose.msra.mxu0 0.0
        %1306 = vmatprep.subr.mxu0 0.0
        %1307 = vmatpush1.xpose.msra.mxu0 0.0
        %1308 = vmatprep.subr.mxu0 0.0
        %1309 = vmatpush1.xpose.msra.mxu0 0.0
        %1310 = vmatprep.subr.mxu0 0.0
        %1311 = vmatpush1.xpose.msra.mxu0 0.0
        %1312 = vmatprep.subr.mxu0 0.0
        %1313 = vmatpush1.xpose.msra.mxu0 0.0
        %1314 = vmatprep.subr.mxu0 0.0
        %1315 = vmatpush1.xpose.msra.mxu0 0.0
        %1316 = vmatprep.subr.mxu0 0.0
        %1317 = vmatpush1.xpose.msra.mxu0 0.0
        %1318 = vmatprep.subr.mxu0 0.0
        %1319 = vmatpush1.xpose.msra.mxu0 0.0
        %1320 = vmatprep.subr.mxu0 0.0
        %1321 = vmatpush1.xpose.msra.mxu0 0.0
        %1322 = vmatprep.subr.mxu0 0.0
        %1323 = vmatpush1.xpose.msra.mxu0 0.0
        %1324 = vmatprep.subr.mxu0 0.0
        %1325 = vmatpush1.xpose.msra.mxu0 0.0
        %1326 = vmatprep.subr.mxu0 0.0
        %1327 = vmatpush1.xpose.msra.mxu0 0.0
        %1328 = vmatprep.subr.mxu0 0.0
        %1329 = vmatpush1.xpose.msra.mxu0 0.0
        %1330 = vmatprep.subr.mxu0 0.0
        %1331 = vmatpush1.xpose.msra.mxu0 0.0
        %1332 = vmatprep.subr.mxu0 0.0
        %1333 = vmatpush1.xpose.msra.mxu0 0.0
        %1334 = vmatprep.subr.mxu0 0.0
        %1335 = vmatpush1.xpose.msra.mxu0 0.0
        %1336 = vmatprep.subr.mxu0 0.0
        %1337 = vmatpush1.xpose.msra.mxu0 0.0
        %1338 = vmatprep.subr.mxu0 0.0
        %1339 = vmatpush1.xpose.msra.mxu0 0.0
        %1340 = vmatprep.subr.mxu0 0.0
        %1341 = vmatpush1.xpose.msra.mxu0 0.0
        %1342 = vmatprep.subr.mxu0 0.0
        %1343 = vmatpush1.xpose.msra.mxu0 0.0
        %1344 = vmatprep.subr.mxu0 0.0
        %1345 = vmatpush1.xpose.msra.mxu0 0.0
        %1346 = vmatprep.subr.mxu0 0.0
        %1347 = vmatpush1.xpose.msra.mxu0 0.0
        %1348 = vmatprep.subr.mxu0 0.0
        %1349 = vmatpush1.xpose.msra.mxu0 0.0
        %1350 = vmatprep.subr.mxu0 0.0
        %1351 = vmatpush1.xpose.msra.mxu0 0.0
        %1352 = vmatprep.subr.mxu0 0.0
        %1353 = vmatpush1.xpose.msra.mxu0 0.0
        %1354 = vmatprep.subr.mxu0 0.0
        %1355 = vmatpush1.xpose.msra.mxu0 0.0
        %1356 = vmatprep.mubr.f32.mxu0 0.0
        %1357 = vmatmul.mubr.f32.gmra.mrb[0].mxu0 %v1288
        %v1358 = vpop.f32.mrb[0].mxu0
        %v1359 = vadd.f32 0.0, %v1358
        %v1360 = vpop.f32.mrb[0].mxu0
        %1361 = vdwg.mxu0
        %v1362 = vsel %vm1119, %v1359, -inf
        %1363 = vmax.xlane.f32.xlu0 %v1362
        %v1364 = vpop.xlane.xlu0 %1363
        %v1365 = vsub.f32 %v1359, %v1364
        %v1366 = vmul.f32 %v1365, 1.442695
        %v1367 = vpow.pop %v1366
        %v1368 = vsel %vm1119, %v1367, 0.0
        %1369 = vadd.xlane.f32.xlu0 %v1368
        %v1370 = vpop.xlane.xlu0 %1369
        %v1371 = vrcp.pop %v1370
        %v1372 = vmul.f32 %v1367, %v1371
        %1373 = vrot.lane.b32.xlu0 %v1026, 56
        %v1374 = vpop.permute.xlu0 %1373
        %v1376 = vsel %vm1133, %v1372, 0
        %v1378 = vsel %vm1137, %v1374, 0
        %1380 = vmatprep.subr.mxu0 0.0
        %1381 = vmatpush1.msra.mxu0 %v1378
        %1382 = vmatprep.subr.mxu0 0.0
        %1383 = vmatpush1.msra.mxu0 0.0
        %1384 = vmatprep.subr.mxu0 0.0
        %1385 = vmatpush1.msra.mxu0 0.0
        %1386 = vmatprep.subr.mxu0 0.0
        %1387 = vmatpush1.msra.mxu0 0.0
        %1388 = vmatprep.subr.mxu0 0.0
        %1389 = vmatpush1.msra.mxu0 0.0
        %1390 = vmatprep.subr.mxu0 0.0
        %1391 = vmatpush1.msra.mxu0 0.0
        %1392 = vmatprep.subr.mxu0 0.0
        %1393 = vmatpush1.msra.mxu0 0.0
        %1394 = vmatprep.subr.mxu0 0.0
        %1395 = vmatpush1.msra.mxu0 0.0
        %1396 = vmatprep.subr.mxu0 0.0
        %1397 = vmatpush1.msra.mxu0 0.0
        %1398 = vmatprep.subr.mxu0 0.0
        %1399 = vmatpush1.msra.mxu0 0.0
        %1400 = vmatprep.subr.mxu0 0.0
        %1401 = vmatpush1.msra.mxu0 0.0
        %1402 = vmatprep.subr.mxu0 0.0
        %1403 = vmatpush1.msra.mxu0 0.0
        %1404 = vmatprep.subr.mxu0 0.0
        %1405 = vmatpush1.msra.mxu0 0.0
        %1406 = vmatprep.subr.mxu0 0.0
        %1407 = vmatpush1.msra.mxu0 0.0
        %1408 = vmatprep.subr.mxu0 0.0
        %1409 = vmatpush1.msra.mxu0 0.0
        %1410 = vmatprep.subr.mxu0 0.0
        %1411 = vmatpush1.msra.mxu0 0.0
        %1412 = vmatprep.subr.mxu0 0.0
        %1413 = vmatpush1.msra.mxu0 0.0
        %1414 = vmatprep.subr.mxu0 0.0
        %1415 = vmatpush1.msra.mxu0 0.0
        %1416 = vmatprep.subr.mxu0 0.0
        %1417 = vmatpush1.msra.mxu0 0.0
        %1418 = vmatprep.subr.mxu0 0.0
        %1419 = vmatpush1.msra.mxu0 0.0
        %1420 = vmatprep.subr.mxu0 0.0
        %1421 = vmatpush1.msra.mxu0 0.0
        %1422 = vmatprep.subr.mxu0 0.0
        %1423 = vmatpush1.msra.mxu0 0.0
        %1424 = vmatprep.subr.mxu0 0.0
        %1425 = vmatpush1.msra.mxu0 0.0
        %1426 = vmatprep.subr.mxu0 0.0
        %1427 = vmatpush1.msra.mxu0 0.0
        %1428 = vmatprep.subr.mxu0 0.0
        %1429 = vmatpush1.msra.mxu0 0.0
        %1430 = vmatprep.subr.mxu0 0.0
        %1431 = vmatpush1.msra.mxu0 0.0
        %1432 = vmatprep.subr.mxu0 0.0
        %1433 = vmatpush1.msra.mxu0 0.0
        %1434 = vmatprep.subr.mxu0 0.0
        %1435 = vmatpush1.msra.mxu0 0.0
        %1436 = vmatprep.subr.mxu0 0.0
        %1437 = vmatpush1.msra.mxu0 0.0
        %1438 = vmatprep.subr.mxu0 0.0
        %1439 = vmatpush1.msra.mxu0 0.0
        %1440 = vmatprep.subr.mxu0 0.0
        %1441 = vmatpush1.msra.mxu0 0.0
        %1442 = vmatprep.subr.mxu0 0.0
        %1443 = vmatpush1.msra.mxu0 0.0
        %1444 = vmatprep.mubr.f32.mxu0 0.0
        %1445 = vmatmul.mubr.f32.gmra.mrb[0].mxu0 %v1376
        %v1446 = vpop.f32.mrb[0].mxu0
        %v1447 = vadd.f32 0.0, %v1446
        %v1448 = vpop.f32.mrb[0].mxu0
        %1449 = vdwg.mxu0
        %v1451 = vsel %vm1044, %v1447, 0
        %1453 = vmatprep.subr.mxu0 0.0
        %1454 = vmatpush1.msra.mxu0 %v1030
        %1455 = vmatprep.subr.mxu0 0.0
        %1456 = vmatpush1.msra.mxu0 0.0
        %1457 = vmatprep.subr.mxu0 0.0
        %1458 = vmatpush1.msra.mxu0 0.0
        %1459 = vmatprep.subr.mxu0 0.0
        %1460 = vmatpush1.msra.mxu0 0.0
        %1461 = vmatprep.subr.mxu0 0.0
        %1462 = vmatpush1.msra.mxu0 0.0
        %1463 = vmatprep.subr.mxu0 0.0
        %1464 = vmatpush1.msra.mxu0 0.0
        %1465 = vmatprep.subr.mxu0 0.0
        %1466 = vmatpush1.msra.mxu0 0.0
        %1467 = vmatprep.subr.mxu0 0.0
        %1468 = vmatpush1.msra.mxu0 0.0
        %1469 = vmatprep.subr.mxu0 0.0
        %1470 = vmatpush1.msra.mxu0 0.0
        %1471 = vmatprep.subr.mxu0 0.0
        %1472 = vmatpush1.msra.mxu0 0.0
        %1473 = vmatprep.subr.mxu0 0.0
        %1474 = vmatpush1.msra.mxu0 0.0
        %1475 = vmatprep.subr.mxu0 0.0
        %1476 = vmatpush1.msra.mxu0 0.0
        %1477 = vmatprep.subr.mxu0 0.0
        %1478 = vmatpush1.msra.mxu0 0.0
        %1479 = vmatprep.subr.mxu0 0.0
        %1480 = vmatpush1.msra.mxu0 0.0
        %1481 = vmatprep.subr.mxu0 0.0
        %1482 = vmatpush1.msra.mxu0 0.0
        %1483 = vmatprep.subr.mxu0 0.0
        %1484 = vmatpush1.msra.mxu0 0.0
        %1485 = vmatprep.subr.mxu0 0.0
        %1486 = vmatpush1.msra.mxu0 0.0
        %1487 = vmatprep.subr.mxu0 0.0
        %1488 = vmatpush1.msra.mxu0 0.0
        %1489 = vmatprep.subr.mxu0 0.0
        %1490 = vmatpush1.msra.mxu0 0.0
        %1491 = vmatprep.subr.mxu0 0.0
        %1492 = vmatpush1.msra.mxu0 0.0
        %1493 = vmatprep.subr.mxu0 0.0
        %1494 = vmatpush1.msra.mxu0 0.0
        %1495 = vmatprep.subr.mxu0 0.0
        %1496 = vmatpush1.msra.mxu0 0.0
        %1497 = vmatprep.subr.mxu0 0.0
        %1498 = vmatpush1.msra.mxu0 0.0
        %1499 = vmatprep.subr.mxu0 0.0
        %1500 = vmatpush1.msra.mxu0 0.0
        %1501 = vmatprep.subr.mxu0 0.0
        %1502 = vmatpush1.msra.mxu0 0.0
        %1503 = vmatprep.subr.mxu0 0.0
        %1504 = vmatpush1.msra.mxu0 0.0
        %1505 = vmatprep.subr.mxu0 0.0
        %1506 = vmatpush1.msra.mxu0 0.0
        %1507 = vmatprep.subr.mxu0 0.0
        %1508 = vmatpush1.msra.mxu0 0.0
        %1509 = vmatprep.subr.mxu0 0.0
        %1510 = vmatpush1.msra.mxu0 0.0
        %1511 = vmatprep.subr.mxu0 0.0
        %1512 = vmatpush1.msra.mxu0 0.0
        %1513 = vmatprep.subr.mxu0 0.0
        %1514 = vmatpush1.msra.mxu0 0.0
        %1515 = vmatprep.subr.mxu0 0.0
        %1516 = vmatpush1.msra.mxu0 0.0
        %1517 = vmatprep.mubr.f32.mxu0 0.0
        %1518 = vmatmul.mubr.f32.gmra.mrb[0].mxu0 %v1451
        %v1519 = vpop.f32.mrb[0].mxu0
        %v1520 = vadd.f32 0.0, %v1519
        %v1521 = vpop.f32.mrb[0].mxu0
        %1522 = vdwg.mxu0
        %v1523 = vadd.f32 %v1283, %v1520
        %1524 = vrot.lane.b32.xlu0 %v1026, 112
        %v1525 = vpop.permute.xlu0 %1524
        %1526 = vrot.lane.b32.xlu0 %v1026, 80
        %v1527 = vpop.permute.xlu0 %1526
        %v1528 = vsel %vm1044, %v1525, 0
        %v1530 = vsel %vm1044, %v1527, 0
        %1532 = vmatprep.subr.mxu0 0.0
        %1533 = vmatpush1.xpose.msra.mxu0 %v1530
        %1534 = vmatprep.subr.mxu0 0.0
        %1535 = vmatpush1.xpose.msra.mxu0 0.0
        %1536 = vmatprep.subr.mxu0 0.0
        %1537 = vmatpush1.xpose.msra.mxu0 0.0
        %1538 = vmatprep.subr.mxu0 0.0
        %1539 = vmatpush1.xpose.msra.mxu0 0.0
        %1540 = vmatprep.subr.mxu0 0.0
        %1541 = vmatpush1.xpose.msra.mxu0 0.0
        %1542 = vmatprep.subr.mxu0 0.0
        %1543 = vmatpush1.xpose.msra.mxu0 0.0
        %1544 = vmatprep.subr.mxu0 0.0
        %1545 = vmatpush1.xpose.msra.mxu0 0.0
        %1546 = vmatprep.subr.mxu0 0.0
        %1547 = vmatpush1.xpose.msra.mxu0 0.0
        %1548 = vmatprep.subr.mxu0 0.0
        %1549 = vmatpush1.xpose.msra.mxu0 0.0
        %1550 = vmatprep.subr.mxu0 0.0
        %1551 = vmatpush1.xpose.msra.mxu0 0.0
        %1552 = vmatprep.subr.mxu0 0.0
        %1553 = vmatpush1.xpose.msra.mxu0 0.0
        %1554 = vmatprep.subr.mxu0 0.0
        %1555 = vmatpush1.xpose.msra.mxu0 0.0
        %1556 = vmatprep.subr.mxu0 0.0
        %1557 = vmatpush1.xpose.msra.mxu0 0.0
        %1558 = vmatprep.subr.mxu0 0.0
        %1559 = vmatpush1.xpose.msra.mxu0 0.0
        %1560 = vmatprep.subr.mxu0 0.0
        %1561 = vmatpush1.xpose.msra.mxu0 0.0
        %1562 = vmatprep.subr.mxu0 0.0
        %1563 = vmatpush1.xpose.msra.mxu0 0.0
        %1564 = vmatprep.subr.mxu0 0.0
        %1565 = vmatpush1.xpose.msra.mxu0 0.0
        %1566 = vmatprep.subr.mxu0 0.0
        %1567 = vmatpush1.xpose.msra.mxu0 0.0
        %1568 = vmatprep.subr.mxu0 0.0
        %1569 = vmatpush1.xpose.msra.mxu0 0.0
        %1570 = vmatprep.subr.mxu0 0.0
        %1571 = vmatpush1.xpose.msra.mxu0 0.0
        %1572 = vmatprep.subr.mxu0 0.0
        %1573 = vmatpush1.xpose.msra.mxu0 0.0
        %1574 = vmatprep.subr.mxu0 0.0
        %1575 = vmatpush1.xpose.msra.mxu0 0.0
        %1576 = vmatprep.subr.mxu0 0.0
        %1577 = vmatpush1.xpose.msra.mxu0 0.0
        %1578 = vmatprep.subr.mxu0 0.0
        %1579 = vmatpush1.xpose.msra.mxu0 0.0
        %1580 = vmatprep.subr.mxu0 0.0
        %1581 = vmatpush1.xpose.msra.mxu0 0.0
        %1582 = vmatprep.subr.mxu0 0.0
        %1583 = vmatpush1.xpose.msra.mxu0 0.0
        %1584 = vmatprep.subr.mxu0 0.0
        %1585 = vmatpush1.xpose.msra.mxu0 0.0
        %1586 = vmatprep.subr.mxu0 0.0
        %1587 = vmatpush1.xpose.msra.mxu0 0.0
        %1588 = vmatprep.subr.mxu0 0.0
        %1589 = vmatpush1.xpose.msra.mxu0 0.0
        %1590 = vmatprep.subr.mxu0 0.0
        %1591 = vmatpush1.xpose.msra.mxu0 0.0
        %1592 = vmatprep.subr.mxu0 0.0
        %1593 = vmatpush1.xpose.msra.mxu0 0.0
        %1594 = vmatprep.subr.mxu0 0.0
        %1595 = vmatpush1.xpose.msra.mxu0 0.0
        %1596 = vmatprep.mubr.f32.mxu0 0.0
        %1597 = vmatmul.mubr.f32.gmra.mrb[0].mxu0 %v1528
        %v1598 = vpop.f32.mrb[0].mxu0
        %v1599 = vadd.f32 0.0, %v1598
        %v1600 = vpop.f32.mrb[0].mxu0
        %1601 = vdwg.mxu0
        %v1602 = vsel %vm1119, %v1599, -inf
        %1603 = vmax.xlane.f32.xlu0 %v1602
        %v1604 = vpop.xlane.xlu0 %1603
        %v1605 = vsub.f32 %v1599, %v1604
        %v1606 = vmul.f32 %v1605, 1.442695
        %v1607 = vpow.pop %v1606
        %v1608 = vsel %vm1119, %v1607, 0.0
        %1609 = vadd.xlane.f32.xlu0 %v1608
        %v1610 = vpop.xlane.xlu0 %1609
        %v1611 = vrcp.pop %v1610
        %v1612 = vmul.f32 %v1607, %v1611
        %1613 = vrot.lane.b32.xlu0 %v1026, 48
        %v1614 = vpop.permute.xlu0 %1613
        %v1616 = vsel %vm1133, %v1612, 0
        %v1618 = vsel %vm1137, %v1614, 0
        %1620 = vmatprep.subr.mxu0 0.0
        %1621 = vmatpush1.msra.mxu0 %v1618
        %1622 = vmatprep.subr.mxu0 0.0
        %1623 = vmatpush1.msra.mxu0 0.0
        %1624 = vmatprep.subr.mxu0 0.0
        %1625 = vmatpush1.msra.mxu0 0.0
        %1626 = vmatprep.subr.mxu0 0.0
        %1627 = vmatpush1.msra.mxu0 0.0
        %1628 = vmatprep.subr.mxu0 0.0
        %1629 = vmatpush1.msra.mxu0 0.0
        %1630 = vmatprep.subr.mxu0 0.0
        %1631 = vmatpush1.msra.mxu0 0.0
        %1632 = vmatprep.subr.mxu0 0.0
        %1633 = vmatpush1.msra.mxu0 0.0
        %1634 = vmatprep.subr.mxu0 0.0
        %1635 = vmatpush1.msra.mxu0 0.0
        %1636 = vmatprep.subr.mxu0 0.0
        %1637 = vmatpush1.msra.mxu0 0.0
        %1638 = vmatprep.subr.mxu0 0.0
        %1639 = vmatpush1.msra.mxu0 0.0
        %1640 = vmatprep.subr.mxu0 0.0
        %1641 = vmatpush1.msra.mxu0 0.0
        %1642 = vmatprep.subr.mxu0 0.0
        %1643 = vmatpush1.msra.mxu0 0.0
        %1644 = vmatprep.subr.mxu0 0.0
        %1645 = vmatpush1.msra.mxu0 0.0
        %1646 = vmatprep.subr.mxu0 0.0
        %1647 = vmatpush1.msra.mxu0 0.0
        %1648 = vmatprep.subr.mxu0 0.0
        %1649 = vmatpush1.msra.mxu0 0.0
        %1650 = vmatprep.subr.mxu0 0.0
        %1651 = vmatpush1.msra.mxu0 0.0
        %1652 = vmatprep.subr.mxu0 0.0
        %1653 = vmatpush1.msra.mxu0 0.0
        %1654 = vmatprep.subr.mxu0 0.0
        %1655 = vmatpush1.msra.mxu0 0.0
        %1656 = vmatprep.subr.mxu0 0.0
        %1657 = vmatpush1.msra.mxu0 0.0
        %1658 = vmatprep.subr.mxu0 0.0
        %1659 = vmatpush1.msra.mxu0 0.0
        %1660 = vmatprep.subr.mxu0 0.0
        %1661 = vmatpush1.msra.mxu0 0.0
        %1662 = vmatprep.subr.mxu0 0.0
        %1663 = vmatpush1.msra.mxu0 0.0
        %1664 = vmatprep.subr.mxu0 0.0
        %1665 = vmatpush1.msra.mxu0 0.0
        %1666 = vmatprep.subr.mxu0 0.0
        %1667 = vmatpush1.msra.mxu0 0.0
        %1668 = vmatprep.subr.mxu0 0.0
        %1669 = vmatpush1.msra.mxu0 0.0
        %1670 = vmatprep.subr.mxu0 0.0
        %1671 = vmatpush1.msra.mxu0 0.0
        %1672 = vmatprep.subr.mxu0 0.0
        %1673 = vmatpush1.msra.mxu0 0.0
        %1674 = vmatprep.subr.mxu0 0.0
        %1675 = vmatpush1.msra.mxu0 0.0
        %1676 = vmatprep.subr.mxu0 0.0
        %1677 = vmatpush1.msra.mxu0 0.0
        %1678 = vmatprep.subr.mxu0 0.0
        %1679 = vmatpush1.msra.mxu0 0.0
        %1680 = vmatprep.subr.mxu0 0.0
        %1681 = vmatpush1.msra.mxu0 0.0
        %1682 = vmatprep.subr.mxu0 0.0
        %1683 = vmatpush1.msra.mxu0 0.0
        %1684 = vmatprep.mubr.f32.mxu0 0.0
        %1685 = vmatmul.mubr.f32.gmra.mrb[0].mxu0 %v1616
        %v1686 = vpop.f32.mrb[0].mxu0
        %v1687 = vadd.f32 0.0, %v1686
        %v1688 = vpop.f32.mrb[0].mxu0
        %1689 = vdwg.mxu0
        %v1691 = vsel %vm1044, %v1687, 0
        %1693 = vmatprep.subr.mxu0 0.0
        %1694 = vmatpush1.msra.mxu0 %v1031
        %1695 = vmatprep.subr.mxu0 0.0
        %1696 = vmatpush1.msra.mxu0 0.0
        %1697 = vmatprep.subr.mxu0 0.0
        %1698 = vmatpush1.msra.mxu0 0.0
        %1699 = vmatprep.subr.mxu0 0.0
        %1700 = vmatpush1.msra.mxu0 0.0
        %1701 = vmatprep.subr.mxu0 0.0
        %1702 = vmatpush1.msra.mxu0 0.0
        %1703 = vmatprep.subr.mxu0 0.0
        %1704 = vmatpush1.msra.mxu0 0.0
        %1705 = vmatprep.subr.mxu0 0.0
        %1706 = vmatpush1.msra.mxu0 0.0
        %1707 = vmatprep.subr.mxu0 0.0
        %1708 = vmatpush1.msra.mxu0 0.0
        %1709 = vmatprep.subr.mxu0 0.0
        %1710 = vmatpush1.msra.mxu0 0.0
        %1711 = vmatprep.subr.mxu0 0.0
        %1712 = vmatpush1.msra.mxu0 0.0
        %1713 = vmatprep.subr.mxu0 0.0
        %1714 = vmatpush1.msra.mxu0 0.0
        %1715 = vmatprep.subr.mxu0 0.0
        %1716 = vmatpush1.msra.mxu0 0.0
        %1717 = vmatprep.subr.mxu0 0.0
        %1718 = vmatpush1.msra.mxu0 0.0
        %1719 = vmatprep.subr.mxu0 0.0
        %1720 = vmatpush1.msra.mxu0 0.0
        %1721 = vmatprep.subr.mxu0 0.0
        %1722 = vmatpush1.msra.mxu0 0.0
        %1723 = vmatprep.subr.mxu0 0.0
        %1724 = vmatpush1.msra.mxu0 0.0
        %1725 = vmatprep.subr.mxu0 0.0
        %1726 = vmatpush1.msra.mxu0 0.0
        %1727 = vmatprep.subr.mxu0 0.0
        %1728 = vmatpush1.msra.mxu0 0.0
        %1729 = vmatprep.subr.mxu0 0.0
        %1730 = vmatpush1.msra.mxu0 0.0
        %1731 = vmatprep.subr.mxu0 0.0
        %1732 = vmatpush1.msra.mxu0 0.0
        %1733 = vmatprep.subr.mxu0 0.0
        %1734 = vmatpush1.msra.mxu0 0.0
        %1735 = vmatprep.subr.mxu0 0.0
        %1736 = vmatpush1.msra.mxu0 0.0
        %1737 = vmatprep.subr.mxu0 0.0
        %1738 = vmatpush1.msra.mxu0 0.0
        %1739 = vmatprep.subr.mxu0 0.0
        %1740 = vmatpush1.msra.mxu0 0.0
        %1741 = vmatprep.subr.mxu0 0.0
        %1742 = vmatpush1.msra.mxu0 0.0
        %1743 = vmatprep.subr.mxu0 0.0
        %1744 = vmatpush1.msra.mxu0 0.0
        %1745 = vmatprep.subr.mxu0 0.0
        %1746 = vmatpush1.msra.mxu0 0.0
        %1747 = vmatprep.subr.mxu0 0.0
        %1748 = vmatpush1.msra.mxu0 0.0
        %1749 = vmatprep.subr.mxu0 0.0
        %1750 = vmatpush1.msra.mxu0 0.0
        %1751 = vmatprep.subr.mxu0 0.0
        %1752 = vmatpush1.msra.mxu0 0.0
        %1753 = vmatprep.subr.mxu0 0.0
        %1754 = vmatpush1.msra.mxu0 0.0
        %1755 = vmatprep.subr.mxu0 0.0
        %1756 = vmatpush1.msra.mxu0 0.0
        %1757 = vmatprep.mubr.f32.mxu0 0.0
        %1758 = vmatmul.mubr.f32.gmra.mrb[0].mxu0 %v1691
        %v1759 = vpop.f32.mrb[0].mxu0
        %v1760 = vadd.f32 0.0, %v1759
        %v1761 = vpop.f32.mrb[0].mxu0
        %1762 = vdwg.mxu0
        %v1763 = vadd.f32 %v1523, %v1760
        %1764 = vrot.lane.b32.xlu0 %v1026, 104
        %v1765 = vpop.permute.xlu0 %1764
        %1766 = vrot.lane.b32.xlu0 %v1026, 72
        %v1767 = vpop.permute.xlu0 %1766
        %v1768 = vsel %vm1044, %v1765, 0
        %v1770 = vsel %vm1044, %v1767, 0
        %1772 = vmatprep.subr.mxu0 0.0
        %1773 = vmatpush1.xpose.msra.mxu0 %v1770
        %1774 = vmatprep.subr.mxu0 0.0
        %1775 = vmatpush1.xpose.msra.mxu0 0.0
        %1776 = vmatprep.subr.mxu0 0.0
        %1777 = vmatpush1.xpose.msra.mxu0 0.0
        %1778 = vmatprep.subr.mxu0 0.0
        %1779 = vmatpush1.xpose.msra.mxu0 0.0
        %1780 = vmatprep.subr.mxu0 0.0
        %1781 = vmatpush1.xpose.msra.mxu0 0.0
        %1782 = vmatprep.subr.mxu0 0.0
        %1783 = vmatpush1.xpose.msra.mxu0 0.0
        %1784 = vmatprep.subr.mxu0 0.0
        %1785 = vmatpush1.xpose.msra.mxu0 0.0
        %1786 = vmatprep.subr.mxu0 0.0
        %1787 = vmatpush1.xpose.msra.mxu0 0.0
        %1788 = vmatprep.subr.mxu0 0.0
        %1789 = vmatpush1.xpose.msra.mxu0 0.0
        %1790 = vmatprep.subr.mxu0 0.0
        %1791 = vmatpush1.xpose.msra.mxu0 0.0
        %1792 = vmatprep.subr.mxu0 0.0
        %1793 = vmatpush1.xpose.msra.mxu0 0.0
        %1794 = vmatprep.subr.mxu0 0.0
        %1795 = vmatpush1.xpose.msra.mxu0 0.0
        %1796 = vmatprep.subr.mxu0 0.0
        %1797 = vmatpush1.xpose.msra.mxu0 0.0
        %1798 = vmatprep.subr.mxu0 0.0
        %1799 = vmatpush1.xpose.msra.mxu0 0.0
        %1800 = vmatprep.subr.mxu0 0.0
        %1801 = vmatpush1.xpose.msra.mxu0 0.0
        %1802 = vmatprep.subr.mxu0 0.0
        %1803 = vmatpush1.xpose.msra.mxu0 0.0
        %1804 = vmatprep.subr.mxu0 0.0
        %1805 = vmatpush1.xpose.msra.mxu0 0.0
        %1806 = vmatprep.subr.mxu0 0.0
        %1807 = vmatpush1.xpose.msra.mxu0 0.0
        %1808 = vmatprep.subr.mxu0 0.0
        %1809 = vmatpush1.xpose.msra.mxu0 0.0
        %1810 = vmatprep.subr.mxu0 0.0
        %1811 = vmatpush1.xpose.msra.mxu0 0.0
        %1812 = vmatprep.subr.mxu0 0.0
        %1813 = vmatpush1.xpose.msra.mxu0 0.0
        %1814 = vmatprep.subr.mxu0 0.0
        %1815 = vmatpush1.xpose.msra.mxu0 0.0
        %1816 = vmatprep.subr.mxu0 0.0
        %1817 = vmatpush1.xpose.msra.mxu0 0.0
        %1818 = vmatprep.subr.mxu0 0.0
        %1819 = vmatpush1.xpose.msra.mxu0 0.0
        %1820 = vmatprep.subr.mxu0 0.0
        %1821 = vmatpush1.xpose.msra.mxu0 0.0
        %1822 = vmatprep.subr.mxu0 0.0
        %1823 = vmatpush1.xpose.msra.mxu0 0.0
        %1824 = vmatprep.subr.mxu0 0.0
        %1825 = vmatpush1.xpose.msra.mxu0 0.0
        %1826 = vmatprep.subr.mxu0 0.0
        %1827 = vmatpush1.xpose.msra.mxu0 0.0
        %1828 = vmatprep.subr.mxu0 0.0
        %1829 = vmatpush1.xpose.msra.mxu0 0.0
        %1830 = vmatprep.subr.mxu0 0.0
        %1831 = vmatpush1.xpose.msra.mxu0 0.0
        %1832 = vmatprep.subr.mxu0 0.0
        %1833 = vmatpush1.xpose.msra.mxu0 0.0
        %1834 = vmatprep.subr.mxu0 0.0
        %1835 = vmatpush1.xpose.msra.mxu0 0.0
        %1836 = vmatprep.mubr.f32.mxu0 0.0
        %1837 = vmatmul.mubr.f32.gmra.mrb[0].mxu0 %v1768
        %v1838 = vpop.f32.mrb[0].mxu0
        %v1839 = vadd.f32 0.0, %v1838
        %v1840 = vpop.f32.mrb[0].mxu0
        %1841 = vdwg.mxu0
        %v1842 = vsel %vm1119, %v1839, -inf
        %1843 = vmax.xlane.f32.xlu0 %v1842
        %v1844 = vpop.xlane.xlu0 %1843
        %v1845 = vsub.f32 %v1839, %v1844
        %v1846 = vmul.f32 %v1845, 1.442695
        %v1847 = vpow.pop %v1846
        %v1848 = vsel %vm1119, %v1847, 0.0
        %1849 = vadd.xlane.f32.xlu0 %v1848
        %v1850 = vpop.xlane.xlu0 %1849
        %v1851 = vrcp.pop %v1850
        %v1852 = vmul.f32 %v1847, %v1851
        %1853 = vrot.lane.b32.xlu0 %v1026, 40
        %v1854 = vpop.permute.xlu0 %1853
        %v1856 = vsel %vm1133, %v1852, 0
        %v1858 = vsel %vm1137, %v1854, 0
        %1860 = vmatprep.subr.mxu0 0.0
        %1861 = vmatpush1.msra.mxu0 %v1858
        %1862 = vmatprep.subr.mxu0 0.0
        %1863 = vmatpush1.msra.mxu0 0.0
        %1864 = vmatprep.subr.mxu0 0.0
        %1865 = vmatpush1.msra.mxu0 0.0
        %1866 = vmatprep.subr.mxu0 0.0
        %1867 = vmatpush1.msra.mxu0 0.0
        %1868 = vmatprep.subr.mxu0 0.0
        %1869 = vmatpush1.msra.mxu0 0.0
        %1870 = vmatprep.subr.mxu0 0.0
        %1871 = vmatpush1.msra.mxu0 0.0
        %1872 = vmatprep.subr.mxu0 0.0
        %1873 = vmatpush1.msra.mxu0 0.0
        %1874 = vmatprep.subr.mxu0 0.0
        %1875 = vmatpush1.msra.mxu0 0.0
        %1876 = vmatprep.subr.mxu0 0.0
        %1877 = vmatpush1.msra.mxu0 0.0
        %1878 = vmatprep.subr.mxu0 0.0
        %1879 = vmatpush1.msra.mxu0 0.0
        %1880 = vmatprep.subr.mxu0 0.0
        %1881 = vmatpush1.msra.mxu0 0.0
        %1882 = vmatprep.subr.mxu0 0.0
        %1883 = vmatpush1.msra.mxu0 0.0
        %1884 = vmatprep.subr.mxu0 0.0
        %1885 = vmatpush1.msra.mxu0 0.0
        %1886 = vmatprep.subr.mxu0 0.0
        %1887 = vmatpush1.msra.mxu0 0.0
        %1888 = vmatprep.subr.mxu0 0.0
        %1889 = vmatpush1.msra.mxu0 0.0
        %1890 = vmatprep.subr.mxu0 0.0
        %1891 = vmatpush1.msra.mxu0 0.0
        %1892 = vmatprep.subr.mxu0 0.0
        %1893 = vmatpush1.msra.mxu0 0.0
        %1894 = vmatprep.subr.mxu0 0.0
        %1895 = vmatpush1.msra.mxu0 0.0
        %1896 = vmatprep.subr.mxu0 0.0
        %1897 = vmatpush1.msra.mxu0 0.0
        %1898 = vmatprep.subr.mxu0 0.0
        %1899 = vmatpush1.msra.mxu0 0.0
        %1900 = vmatprep.subr.mxu0 0.0
        %1901 = vmatpush1.msra.mxu0 0.0
        %1902 = vmatprep.subr.mxu0 0.0
        %1903 = vmatpush1.msra.mxu0 0.0
        %1904 = vmatprep.subr.mxu0 0.0
        %1905 = vmatpush1.msra.mxu0 0.0
        %1906 = vmatprep.subr.mxu0 0.0
        %1907 = vmatpush1.msra.mxu0 0.0
        %1908 = vmatprep.subr.mxu0 0.0
        %1909 = vmatpush1.msra.mxu0 0.0
        %1910 = vmatprep.subr.mxu0 0.0
        %1911 = vmatpush1.msra.mxu0 0.0
        %1912 = vmatprep.subr.mxu0 0.0
        %1913 = vmatpush1.msra.mxu0 0.0
        %1914 = vmatprep.subr.mxu0 0.0
        %1915 = vmatpush1.msra.mxu0 0.0
        %1916 = vmatprep.subr.mxu0 0.0
        %1917 = vmatpush1.msra.mxu0 0.0
        %1918 = vmatprep.subr.mxu0 0.0
        %1919 = vmatpush1.msra.mxu0 0.0
        %1920 = vmatprep.subr.mxu0 0.0
        %1921 = vmatpush1.msra.mxu0 0.0
        %1922 = vmatprep.subr.mxu0 0.0
        %1923 = vmatpush1.msra.mxu0 0.0
        %1924 = vmatprep.mubr.f32.mxu0 0.0
        %1925 = vmatmul.mubr.f32.gmra.mrb[0].mxu0 %v1856
        %v1926 = vpop.f32.mrb[0].mxu0
        %v1927 = vadd.f32 0.0, %v1926
        %v1928 = vpop.f32.mrb[0].mxu0
        %1929 = vdwg.mxu0
        %v1931 = vsel %vm1044, %v1927, 0
        %1933 = vmatprep.subr.mxu0 0.0
        %1934 = vmatpush1.msra.mxu0 %v1032
        %1935 = vmatprep.subr.mxu0 0.0
        %1936 = vmatpush1.msra.mxu0 0.0
        %1937 = vmatprep.subr.mxu0 0.0
        %1938 = vmatpush1.msra.mxu0 0.0
        %1939 = vmatprep.subr.mxu0 0.0
        %1940 = vmatpush1.msra.mxu0 0.0
        %1941 = vmatprep.subr.mxu0 0.0
        %1942 = vmatpush1.msra.mxu0 0.0
        %1943 = vmatprep.subr.mxu0 0.0
        %1944 = vmatpush1.msra.mxu0 0.0
        %1945 = vmatprep.subr.mxu0 0.0
        %1946 = vmatpush1.msra.mxu0 0.0
        %1947 = vmatprep.subr.mxu0 0.0
        %1948 = vmatpush1.msra.mxu0 0.0
        %1949 = vmatprep.subr.mxu0 0.0
        %1950 = vmatpush1.msra.mxu0 0.0
        %1951 = vmatprep.subr.mxu0 0.0
        %1952 = vmatpush1.msra.mxu0 0.0
        %1953 = vmatprep.subr.mxu0 0.0
        %1954 = vmatpush1.msra.mxu0 0.0
        %1955 = vmatprep.subr.mxu0 0.0
        %1956 = vmatpush1.msra.mxu0 0.0
        %1957 = vmatprep.subr.mxu0 0.0
        %1958 = vmatpush1.msra.mxu0 0.0
        %1959 = vmatprep.subr.mxu0 0.0
        %1960 = vmatpush1.msra.mxu0 0.0
        %1961 = vmatprep.subr.mxu0 0.0
        %1962 = vmatpush1.msra.mxu0 0.0
        %1963 = vmatprep.subr.mxu0 0.0
        %1964 = vmatpush1.msra.mxu0 0.0
        %1965 = vmatprep.subr.mxu0 0.0
        %1966 = vmatpush1.msra.mxu0 0.0
        %1967 = vmatprep.subr.mxu0 0.0
        %1968 = vmatpush1.msra.mxu0 0.0
        %1969 = vmatprep.subr.mxu0 0.0
        %1970 = vmatpush1.msra.mxu0 0.0
        %1971 = vmatprep.subr.mxu0 0.0
        %1972 = vmatpush1.msra.mxu0 0.0
        %1973 = vmatprep.subr.mxu0 0.0
        %1974 = vmatpush1.msra.mxu0 0.0
        %1975 = vmatprep.subr.mxu0 0.0
        %1976 = vmatpush1.msra.mxu0 0.0
        %1977 = vmatprep.subr.mxu0 0.0
        %1978 = vmatpush1.msra.mxu0 0.0
        %1979 = vmatprep.subr.mxu0 0.0
        %1980 = vmatpush1.msra.mxu0 0.0
        %1981 = vmatprep.subr.mxu0 0.0
        %1982 = vmatpush1.msra.mxu0 0.0
        %1983 = vmatprep.subr.mxu0 0.0
        %1984 = vmatpush1.msra.mxu0 0.0
        %1985 = vmatprep.subr.mxu0 0.0
        %1986 = vmatpush1.msra.mxu0 0.0
        %1987 = vmatprep.subr.mxu0 0.0
        %1988 = vmatpush1.msra.mxu0 0.0
        %1989 = vmatprep.subr.mxu0 0.0
        %1990 = vmatpush1.msra.mxu0 0.0
        %1991 = vmatprep.subr.mxu0 0.0
        %1992 = vmatpush1.msra.mxu0 0.0
        %1993 = vmatprep.subr.mxu0 0.0
        %1994 = vmatpush1.msra.mxu0 0.0
        %1995 = vmatprep.subr.mxu0 0.0
        %1996 = vmatpush1.msra.mxu0 0.0
        %1997 = vmatprep.mubr.f32.mxu0 0.0
        %1998 = vmatmul.mubr.f32.gmra.mrb[0].mxu0 %v1931
        %v1999 = vpop.f32.mrb[0].mxu0
        %v2000 = vadd.f32 0.0, %v1999
        %v2001 = vpop.f32.mrb[0].mxu0
        %2002 = vdwg.mxu0
        %v2003 = vadd.f32 %v1763, %v2000
        %v2004 = vld [vmem:[%s9] sm:$0x1]
        %v2005 = vld [vmem:[%s10] sm:$0x1]
        %v2006 = vsel %vm915, %v2003, 0.0
        %2007 = vadd.xlane.f32.xlu0 %v2006
        %v2008 = vpop.xlane.xlu0 %2007
        %v2009 = vmul.f32 %v2008, %v919
        %v2010 = vsub.f32 %v2003, %v2009
        %v2011 = vmul.f32 %v2010, %v2010
        %v2012 = vsel %vm915, %v2011, 0.0
        %2013 = vadd.xlane.f32.xlu0 %v2012
        %v2014 = vpop.xlane.xlu0 %2013
        %v2015 = vmul.f32 %v2014, %v919
        %v2016 = vadd.f32 %v2015, 1e-12
        %v2017 = vrsqrt.pop %v2016
        %v2018 = vmul.f32 %v2010, %v2017
        %v2020 = vlaneseq
        %v2021 = vshrl.u32 %v2020, 7
        %v2022 = vsub.s32 0, %v2021
        %v2023 = vrot.slane %v2004, %v2022
        %v2025 = vmul.f32 %v2018, %v2023
        %v2027 = vlaneseq
        %v2028 = vshrl.u32 %v2027, 7
        %v2029 = vsub.s32 0, %v2028
        %v2030 = vrot.slane %v2005, %v2029
        %v2032 = vadd.f32 %v2025, %v2030
        %v2033 = vld [vmem:[%s11] sm:$0xff]
        %v2034 = vld [vmem:[%s11 + $0x8] sm:$0xff]
        %v2035 = vld [vmem:[%s11 + $0x10] sm:$0xff]
        %v2036 = vld [vmem:[%s11 + $0x18] sm:$0xff]
        %v2037 = vld [vmem:[%s12] sm:$0x1]
        %v2039 = vlaneseq
        %v2040 = vshrl.u32 %v2039, 7
        %v2041 = vsub.s32 0, %v2040
        %v2042 = vrot.slane %v2037, %v2041
        %v2045 = vsel %vm955, %v2032, 0
        %2047 = vmatprep.subr.mxu0 0.0
        %2048 = vmatpush1.msra.mxu0 %v2033
        %2049 = vmatprep.subr.mxu0 0.0
        %2050 = vmatpush1.msra.mxu0 %v2034
        %2051 = vmatprep.subr.mxu0 0.0
        %2052 = vmatpush1.msra.mxu0 %v2035
        %2053 = vmatprep.subr.mxu0 0.0
        %2054 = vmatpush1.msra.mxu0 %v2036
        %2055 = vmatprep.subr.mxu0 0.0
        %2056 = vmatpush1.msra.mxu0 0.0
        %2057 = vmatprep.subr.mxu0 0.0
        %2058 = vmatpush1.msra.mxu0 0.0
        %2059 = vmatprep.subr.mxu0 0.0
        %2060 = vmatpush1.msra.mxu0 0.0
        %2061 = vmatprep.subr.mxu0 0.0
        %2062 = vmatpush1.msra.mxu0 0.0
        %2063 = vmatprep.subr.mxu0 0.0
        %2064 = vmatpush1.msra.mxu0 0.0
        %2065 = vmatprep.subr.mxu0 0.0
        %2066 = vmatpush1.msra.mxu0 0.0
        %2067 = vmatprep.subr.mxu0 0.0
        %2068 = vmatpush1.msra.mxu0 0.0
        %2069 = vmatprep.subr.mxu0 0.0
        %2070 = vmatpush1.msra.mxu0 0.0
        %2071 = vmatprep.subr.mxu0 0.0
        %2072 = vmatpush1.msra.mxu0 0.0
        %2073 = vmatprep.subr.mxu0 0.0
        %2074 = vmatpush1.msra.mxu0 0.0
        %2075 = vmatprep.subr.mxu0 0.0
        %2076 = vmatpush1.msra.mxu0 0.0
        %2077 = vmatprep.subr.mxu0 0.0
        %2078 = vmatpush1.msra.mxu0 0.0
        %2079 = vmatprep.subr.mxu0 0.0
        %2080 = vmatpush1.msra.mxu0 0.0
        %2081 = vmatprep.subr.mxu0 0.0
        %2082 = vmatpush1.msra.mxu0 0.0
        %2083 = vmatprep.subr.mxu0 0.0
        %2084 = vmatpush1.msra.mxu0 0.0
        %2085 = vmatprep.subr.mxu0 0.0
        %2086 = vmatpush1.msra.mxu0 0.0
        %2087 = vmatprep.subr.mxu0 0.0
        %2088 = vmatpush1.msra.mxu0 0.0
        %2089 = vmatprep.subr.mxu0 0.0
        %2090 = vmatpush1.msra.mxu0 0.0
        %2091 = vmatprep.subr.mxu0 0.0
        %2092 = vmatpush1.msra.mxu0 0.0
        %2093 = vmatprep.subr.mxu0 0.0
        %2094 = vmatpush1.msra.mxu0 0.0
        %2095 = vmatprep.subr.mxu0 0.0
        %2096 = vmatpush1.msra.mxu0 0.0
        %2097 = vmatprep.subr.mxu0 0.0
        %2098 = vmatpush1.msra.mxu0 0.0
        %2099 = vmatprep.subr.mxu0 0.0
        %2100 = vmatpush1.msra.mxu0 0.0
        %2101 = vmatprep.subr.mxu0 0.0
        %2102 = vmatpush1.msra.mxu0 0.0
        %2103 = vmatprep.subr.mxu0 0.0
        %2104 = vmatpush1.msra.mxu0 0.0
        %2105 = vmatprep.subr.mxu0 0.0
        %2106 = vmatpush1.msra.mxu0 0.0
        %2107 = vmatprep.subr.mxu0 0.0
        %2108 = vmatpush1.msra.mxu0 0.0
        %2109 = vmatprep.subr.mxu0 0.0
        %2110 = vmatpush1.msra.mxu0 0.0
        %2111 = vmatprep.mubr.f32.mxu0 0.0
        %2112 = vmatmul.mubr.f32.gmra.mrb[0].mxu0 %v2045
        %v2113 = vpop.f32.mrb[0].mxu0
        %v2114 = vadd.f32 %v2042, %v2113
        %v2115 = vpop.f32.mrb[0].mxu0
        %2116 = vdwg.mxu0
        %v2117 = vmul.f32 %v2114, 0.5
        %v2118 = vmul.f32 %v2114, 0.70710677
        %v2119 = verf.f32.pop %v2118
        %v2120 = vadd.f32 %v2119, 1.0
        %v2121 = vmul.f32 %v2117, %v2120
        %v2122 = vld [vmem:[%s13] sm:$0xff]
        %v2123 = vld [vmem:[%s13 + $0x8] sm:$0xff]
        %v2124 = vld [vmem:[%s13 + $0x10] sm:$0xff]
        %v2125 = vld [vmem:[%s13 + $0x18] sm:$0xff]
        %v2126 = vld [vmem:[%s13 + $0x20] sm:$0xff]
        %v2127 = vld [vmem:[%s13 + $0x28] sm:$0xff]
        %v2128 = vld [vmem:[%s13 + $0x30] sm:$0xff]
        %v2129 = vld [vmem:[%s13 + $0x38] sm:$0xff]
        %v2130 = vld [vmem:[%s13 + $0x40] sm:$0xff]
        %v2131 = vld [vmem:[%s13 + $0x48] sm:$0xff]
        %v2132 = vld [vmem:[%s13 + $0x50] sm:$0xff]
        %v2133 = vld [vmem:[%s13 + $0x58] sm:$0xff]
        %v2134 = vld [vmem:[%s13 + $0x60] sm:$0xff]
        %v2135 = vld [vmem:[%s13 + $0x68] sm:$0xff]
        %v2136 = vld [vmem:[%s13 + $0x70] sm:$0xff]
        %v2137 = vld [vmem:[%s13 + $0x78] sm:$0xff]
        %v2138 = vld [vmem:[%s14] sm:$0x1]
        %v2140 = vlaneseq
        %v2141 = vshrl.u32 %v2140, 7
        %v2142 = vsub.s32 0, %v2141
        %v2143 = vrot.slane %v2138, %v2142
        %2145 = vmatprep.subr.mxu0 0.0
        %2146 = vmatpush1.msra.mxu0 %v2122
        %2147 = vmatprep.subr.mxu0 0.0
        %2148 = vmatpush1.msra.mxu0 %v2123
        %2149 = vmatprep.subr.mxu0 0.0
        %2150 = vmatpush1.msra.mxu0 %v2124
        %2151 = vmatprep.subr.mxu0 0.0
        %2152 = vmatpush1.msra.mxu0 %v2125
        %2153 = vmatprep.subr.mxu0 0.0
        %2154 = vmatpush1.msra.mxu0 %v2126
        %2155 = vmatprep.subr.mxu0 0.0
        %2156 = vmatpush1.msra.mxu0 %v2127
        %2157 = vmatprep.subr.mxu0 0.0
        %2158 = vmatpush1.msra.mxu0 %v2128
        %2159 = vmatprep.subr.mxu0 0.0
        %2160 = vmatpush1.msra.mxu0 %v2129
        %2161 = vmatprep.subr.mxu0 0.0
        %2162 = vmatpush1.msra.mxu0 %v2130
        %2163 = vmatprep.subr.mxu0 0.0
        %2164 = vmatpush1.msra.mxu0 %v2131
        %2165 = vmatprep.subr.mxu0 0.0
        %2166 = vmatpush1.msra.mxu0 %v2132
        %2167 = vmatprep.subr.mxu0 0.0
        %2168 = vmatpush1.msra.mxu0 %v2133
        %2169 = vmatprep.subr.mxu0 0.0
        %2170 = vmatpush1.msra.mxu0 %v2134
        %2171 = vmatprep.subr.mxu0 0.0
        %2172 = vmatpush1.msra.mxu0 %v2135
        %2173 = vmatprep.subr.mxu0 0.0
        %2174 = vmatpush1.msra.mxu0 %v2136
        %2175 = vmatprep.subr.mxu0 0.0
        %2176 = vmatpush1.msra.mxu0 %v2137
        %2177 = vmatprep.subr.mxu0 0.0
        %2178 = vmatpush1.msra.mxu0 0.0
        %2179 = vmatprep.subr.mxu0 0.0
        %2180 = vmatpush1.msra.mxu0 0.0
        %2181 = vmatprep.subr.mxu0 0.0
        %2182 = vmatpush1.msra.mxu0 0.0
        %2183 = vmatprep.subr.mxu0 0.0
        %2184 = vmatpush1.msra.mxu0 0.0
        %2185 = vmatprep.subr.mxu0 0.0
        %2186 = vmatpush1.msra.mxu0 0.0
        %2187 = vmatprep.subr.mxu0 0.0
        %2188 = vmatpush1.msra.mxu0 0.0
        %2189 = vmatprep.subr.mxu0 0.0
        %2190 = vmatpush1.msra.mxu0 0.0
        %2191 = vmatprep.subr.mxu0 0.0
        %2192 = vmatpush1.msra.mxu0 0.0
        %2193 = vmatprep.subr.mxu0 0.0
        %2194 = vmatpush1.msra.mxu0 0.0
        %2195 = vmatprep.subr.mxu0 0.0
        %2196 = vmatpush1.msra.mxu0 0.0
        %2197 = vmatprep.subr.mxu0 0.0
        %2198 = vmatpush1.msra.mxu0 0.0
        %2199 = vmatprep.subr.mxu0 0.0
        %2200 = vmatpush1.msra.mxu0 0.0
        %2201 = vmatprep.subr.mxu0 0.0
        %2202 = vmatpush1.msra.mxu0 0.0
        %2203 = vmatprep.subr.mxu0 0.0
        %2204 = vmatpush1.msra.mxu0 0.0
        %2205 = vmatprep.subr.mxu0 0.0
        %2206 = vmatpush1.msra.mxu0 0.0
        %2207 = vmatprep.subr.mxu0 0.0
        %2208 = vmatpush1.msra.mxu0 0.0
        %2209 = vmatprep.mubr.f32.mxu0 0.0
        %2210 = vmatmul.mubr.f32.gmra.mrb[0].mxu0 %v2121
        %v2211 = vpop.f32.mrb[0].mxu0
        %v2212 = vadd.f32 %v2143, %v2211
        %v2213 = vpop.f32.mrb[0].mxu0
        %2214 = vdwg.mxu0
        %v2215 = vadd.f32 %v2212, %v2003
        %s2216 = scalar_lea.vmem %s3, 1
        %v2217 = vld [vmem:[%s2216] sm:$0x1]
        %s2218 = scalar_lea.vmem %s4, 1
        %v2219 = vld [vmem:[%s2218] sm:$0x1]
        %v2220 = vsel %vm915, %v2215, 0.0
        %2221 = vadd.xlane.f32.xlu0 %v2220
        %v2222 = vpop.xlane.xlu0 %2221
        %v2223 = vmul.f32 %v2222, %v919
        %v2224 = vsub.f32 %v2215, %v2223
        %v2225 = vmul.f32 %v2224, %v2224
        %v2226 = vsel %vm915, %v2225, 0.0
        %2227 = vadd.xlane.f32.xlu0 %v2226
        %v2228 = vpop.xlane.xlu0 %2227
        %v2229 = vmul.f32 %v2228, %v919
        %v2230 = vadd.f32 %v2229, 1e-12
        %v2231 = vrsqrt.pop %v2230
        %v2232 = vmul.f32 %v2224, %v2231
        %v2234 = vlaneseq
        %v2235 = vshrl.u32 %v2234, 7
        %v2236 = vsub.s32 0, %v2235
        %v2237 = vrot.slane %v2217, %v2236
        %v2239 = vmul.f32 %v2232, %v2237
        %v2241 = vlaneseq
        %v2242 = vshrl.u32 %v2241, 7
        %v2243 = vsub.s32 0, %v2242
        %v2244 = vrot.slane %v2219, %v2243
        %v2246 = vadd.f32 %v2239, %v2244
        %s2247 = scalar_lea.vmem %s5, 32
        %v2248 = vld [vmem:[%s2247] sm:$0xff]
        %v2249 = vld [vmem:[%s2247 + $0x8] sm:$0xff]
        %v2250 = vld [vmem:[%s2247 + $0x10] sm:$0xff]
        %v2251 = vld [vmem:[%s2247 + $0x18] sm:$0xff]
        %s2252 = scalar_lea.vmem %s6, 1
        %v2253 = vld [vmem:[%s2252] sm:$0x1]
        %v2255 = vlaneseq
        %v2256 = vshrl.u32 %v2255, 7
        %v2257 = vsub.s32 0, %v2256
        %v2258 = vrot.slane %v2253, %v2257
        %v2261 = vsel %vm955, %v2246, 0
        %2263 = vmatprep.subr.mxu0 0.0
        %2264 = vmatpush1.msra.mxu0 %v2248
        %2265 = vmatprep.subr.mxu0 0.0
        %2266 = vmatpush1.msra.mxu0 %v2249
        %2267 = vmatprep.subr.mxu0 0.0
        %2268 = vmatpush1.msra.mxu0 %v2250
        %2269 = vmatprep.subr.mxu0 0.0
        %2270 = vmatpush1.msra.mxu0 %v2251
        %2271 = vmatprep.subr.mxu0 0.0
        %2272 = vmatpush1.msra.mxu0 0.0
        %2273 = vmatprep.subr.mxu0 0.0
        %2274 = vmatpush1.msra.mxu0 0.0
        %2275 = vmatprep.subr.mxu0 0.0
        %2276 = vmatpush1.msra.mxu0 0.0
        %2277 = vmatprep.subr.mxu0 0.0
        %2278 = vmatpush1.msra.mxu0 0.0
        %2279 = vmatprep.subr.mxu0 0.0
        %2280 = vmatpush1.msra.mxu0 0.0
        %2281 = vmatprep.subr.mxu0 0.0
        %2282 = vmatpush1.msra.mxu0 0.0
        %2283 = vmatprep.subr.mxu0 0.0
        %2284 = vmatpush1.msra.mxu0 0.0
        %2285 = vmatprep.subr.mxu0 0.0
        %2286 = vmatpush1.msra.mxu0 0.0
        %2287 = vmatprep.subr.mxu0 0.0
        %2288 = vmatpush1.msra.mxu0 0.0
        %2289 = vmatprep.subr.mxu0 0.0
        %2290 = vmatpush1.msra.mxu0 0.0
        %2291 = vmatprep.subr.mxu0 0.0
        %2292 = vmatpush1.msra.mxu0 0.0
        %2293 = vmatprep.subr.mxu0 0.0
        %2294 = vmatpush1.msra.mxu0 0.0
        %2295 = vmatprep.subr.mxu0 0.0
        %2296 = vmatpush1.msra.mxu0 0.0
        %2297 = vmatprep.subr.mxu0 0.0
        %2298 = vmatpush1.msra.mxu0 0.0
        %2299 = vmatprep.subr.mxu0 0.0
        %2300 = vmatpush1.msra.mxu0 0.0
        %2301 = vmatprep.subr.mxu0 0.0
        %2302 = vmatpush1.msra.mxu0 0.0
        %2303 = vmatprep.subr.mxu0 0.0
        %2304 = vmatpush1.msra.mxu0 0.0
        %2305 = vmatprep.subr.mxu0 0.0
        %2306 = vmatpush1.msra.mxu0 0.0
        %2307 = vmatprep.subr.mxu0 0.0
        %2308 = vmatpush1.msra.mxu0 0.0
        %2309 = vmatprep.subr.mxu0 0.0
        %2310 = vmatpush1.msra.mxu0 0.0
        %2311 = vmatprep.subr.mxu0 0.0
        %2312 = vmatpush1.msra.mxu0 0.0
        %2313 = vmatprep.subr.mxu0 0.0
        %2314 = vmatpush1.msra.mxu0 0.0
        %2315 = vmatprep.subr.mxu0 0.0
        %2316 = vmatpush1.msra.mxu0 0.0
        %2317 = vmatprep.subr.mxu0 0.0
        %2318 = vmatpush1.msra.mxu0 0.0
        %2319 = vmatprep.subr.mxu0 0.0
        %2320 = vmatpush1.msra.mxu0 0.0
        %2321 = vmatprep.subr.mxu0 0.0
        %2322 = vmatpush1.msra.mxu0 0.0
        %2323 = vmatprep.subr.mxu0 0.0
        %2324 = vmatpush1.msra.mxu0 0.0
        %2325 = vmatprep.subr.mxu0 0.0
        %2326 = vmatpush1.msra.mxu0 0.0
        %2327 = vmatprep.mubr.f32.mxu0 0.0
        %2328 = vmatmul.mubr.f32.gmra.mrb[0].mxu0 %v2261
        %v2329 = vpop.f32.mrb[0].mxu0
        %v2330 = vadd.f32 %v2258, %v2329
        %v2331 = vpop.f32.mrb[0].mxu0
        %2332 = vdwg.mxu0
        %s2333 = scalar_lea.vmem %s7, 32
        %v2334 = vld [vmem:[%s2333] sm:$0xff]
        %v2335 = vld [vmem:[%s2333 + $0x8] sm:$0xff]
        %v2336 = vld [vmem:[%s2333 + $0x10] sm:$0xff]
        %v2337 = vld [vmem:[%s2333 + $0x18] sm:$0xff]
        %s2338 = scalar_lea.vmem %s8, 1
        %v2339 = vld [vmem:[%s2338] sm:$0x1]
        %v2340 = vadd.f32 %v2339, %v2215
        %2342 = vrot.lane.b32.xlu0 %v2330, 96
        %v2343 = vpop.permute.xlu0 %2342
        %v2344 = vsel %vm1044, %v2330, 0
        %v2346 = vsel %vm1044, %v2343, 0
        %2348 = vmatprep.subr.mxu0 0.0
        %2349 = vmatpush1.xpose.msra.mxu0 %v2346
        %2350 = vmatprep.subr.mxu0 0.0
        %2351 = vmatpush1.xpose.msra.mxu0 0.0
        %2352 = vmatprep.subr.mxu0 0.0
        %2353 = vmatpush1.xpose.msra.mxu0 0.0
        %2354 = vmatprep.subr.mxu0 0.0
        %2355 = vmatpush1.xpose.msra.mxu0 0.0
        %2356 = vmatprep.subr.mxu0 0.0
        %2357 = vmatpush1.xpose.msra.mxu0 0.0
        %2358 = vmatprep.subr.mxu0 0.0
        %2359 = vmatpush1.xpose.msra.mxu0 0.0
        %2360 = vmatprep.subr.mxu0 0.0
        %2361 = vmatpush1.xpose.msra.mxu0 0.0
        %2362 = vmatprep.subr.mxu0 0.0
        %2363 = vmatpush1.xpose.msra.mxu0 0.0
        %2364 = vmatprep.subr.mxu0 0.0
        %2365 = vmatpush1.xpose.msra.mxu0 0.0
        %2366 = vmatprep.subr.mxu0 0.0
        %2367 = vmatpush1.xpose.msra.mxu0 0.0
        %2368 = vmatprep.subr.mxu0 0.0
        %2369 = vmatpush1.xpose.msra.mxu0 0.0
        %2370 = vmatprep.subr.mxu0 0.0
        %2371 = vmatpush1.xpose.msra.mxu0 0.0
        %2372 = vmatprep.subr.mxu0 0.0
        %2373 = vmatpush1.xpose.msra.mxu0 0.0
        %2374 = vmatprep.subr.mxu0 0.0
        %2375 = vmatpush1.xpose.msra.mxu0 0.0
        %2376 = vmatprep.subr.mxu0 0.0
        %2377 = vmatpush1.xpose.msra.mxu0 0.0
        %2378 = vmatprep.subr.mxu0 0.0
        %2379 = vmatpush1.xpose.msra.mxu0 0.0
        %2380 = vmatprep.subr.mxu0 0.0
        %2381 = vmatpush1.xpose.msra.mxu0 0.0
        %2382 = vmatprep.subr.mxu0 0.0
        %2383 = vmatpush1.xpose.msra.mxu0 0.0
        %2384 = vmatprep.subr.mxu0 0.0
        %2385 = vmatpush1.xpose.msra.mxu0 0.0
        %2386 = vmatprep.subr.mxu0 0.0
        %2387 = vmatpush1.xpose.msra.mxu0 0.0
        %2388 = vmatprep.subr.mxu0 0.0
        %2389 = vmatpush1.xpose.msra.mxu0 0.0
        %2390 = vmatprep.subr.mxu0 0.0
        %2391 = vmatpush1.xpose.msra.mxu0 0.0
        %2392 = vmatprep.subr.mxu0 0.0
        %2393 = vmatpush1.xpose.msra.mxu0 0.0
        %2394 = vmatprep.subr.mxu0 0.0
        %2395 = vmatpush1.xpose.msra.mxu0 0.0
        %2396 = vmatprep.subr.mxu0 0.0
        %2397 = vmatpush1.xpose.msra.mxu0 0.0
        %2398 = vmatprep.subr.mxu0 0.0
        %2399 = vmatpush1.xpose.msra.mxu0 0.0
        %2400 = vmatprep.subr.mxu0 0.0
        %2401 = vmatpush1.xpose.msra.mxu0 0.0
        %2402 = vmatprep.subr.mxu0 0.0
        %2403 = vmatpush1.xpose.msra.mxu0 0.0
        %2404 = vmatprep.subr.mxu0 0.0
        %2405 = vmatpush1.xpose.msra.mxu0 0.0
        %2406 = vmatprep.subr.mxu0 0.0
        %2407 = vmatpush1.xpose.msra.mxu0 0.0
        %2408 = vmatprep.subr.mxu0 0.0
        %2409 = vmatpush1.xpose.msra.mxu0 0.0
        %2410 = vmatprep.subr.mxu0 0.0
        %2411 = vmatpush1.xpose.msra.mxu0 0.0
        %2412 = vmatprep.mubr.f32.mxu0 0.0
        %2413 = vmatmul.mubr.f32.gmra.mrb[0].mxu0 %v2344
        %v2414 = vpop.f32.mrb[0].mxu0
        %v2415 = vadd.f32 0.0, %v2414
        %v2416 = vpop.f32.mrb[0].mxu0
        %2417 = vdwg.mxu0
        %vm2418 = vcmask 32768
        %v2419 = vsel %vm2418, %v2415, -inf
        %2420 = vmax.xlane.f32.xlu0 %v2419
        %v2421 = vpop.xlane.xlu0 %2420
        %v2422 = vsub.f32 %v2415, %v2421
        %v2423 = vmul.f32 %v2422, 1.442695
        %v2424 = vpow.pop %v2423
        %v2425 = vsel %vm2418, %v2424, 0.0
        %2426 = vadd.xlane.f32.xlu0 %v2425
        %v2427 = vpop.xlane.xlu0 %2426
        %v2428 = vrcp.pop %v2427
        %v2429 = vmul.f32 %v2424, %v2428
        %2430 = vrot.lane.b32.xlu0 %v2330, 64
        %v2431 = vpop.permute.xlu0 %2430
        %v2433 = vsel %vm1133, %v2429, 0
        %v2435 = vsel %vm1137, %v2431, 0
        %2437 = vmatprep.subr.mxu0 0.0
        %2438 = vmatpush1.msra.mxu0 %v2435
        %2439 = vmatprep.subr.mxu0 0.0
        %2440 = vmatpush1.msra.mxu0 0.0
        %2441 = vmatprep.subr.mxu0 0.0
        %2442 = vmatpush1.msra.mxu0 0.0
        %2443 = vmatprep.subr.mxu0 0.0
        %2444 = vmatpush1.msra.mxu0 0.0
        %2445 = vmatprep.subr.mxu0 0.0
        %2446 = vmatpush1.msra.mxu0 0.0
        %2447 = vmatprep.subr.mxu0 0.0
        %2448 = vmatpush1.msra.mxu0 0.0
        %2449 = vmatprep.subr.mxu0 0.0
        %2450 = vmatpush1.msra.mxu0 0.0
        %2451 = vmatprep.subr.mxu0 0.0
        %2452 = vmatpush1.msra.mxu0 0.0
        %2453 = vmatprep.subr.mxu0 0.0
        %2454 = vmatpush1.msra.mxu0 0.0
        %2455 = vmatprep.subr.mxu0 0.0
        %2456 = vmatpush1.msra.mxu0 0.0
        %2457 = vmatprep.subr.mxu0 0.0
        %2458 = vmatpush1.msra.mxu0 0.0
        %2459 = vmatprep.subr.mxu0 0.0
        %2460 = vmatpush1.msra.mxu0 0.0
        %2461 = vmatprep.subr.mxu0 0.0
        %2462 = vmatpush1.msra.mxu0 0.0
        %2463 = vmatprep.subr.mxu0 0.0
        %2464 = vmatpush1.msra.mxu0 0.0
        %2465 = vmatprep.subr.mxu0 0.0
        %2466 = vmatpush1.msra.mxu0 0.0
        %2467 = vmatprep.subr.mxu0 0.0
        %2468 = vmatpush1.msra.mxu0 0.0
        %2469 = vmatprep.subr.mxu0 0.0
        %2470 = vmatpush1.msra.mxu0 0.0
        %2471 = vmatprep.subr.mxu0 0.0
        %2472 = vmatpush1.msra.mxu0 0.0
        %2473 = vmatprep.subr.mxu0 0.0
        %2474 = vmatpush1.msra.mxu0 0.0
        %2475 = vmatprep.subr.mxu0 0.0
        %2476 = vmatpush1.msra.mxu0 0.0
        %2477 = vmatprep.subr.mxu0 0.0
        %2478 = vmatpush1.msra.mxu0 0.0
        %2479 = vmatprep.subr.mxu0 0.0
        %2480 = vmatpush1.msra.mxu0 0.0
        %2481 = vmatprep.subr.mxu0 0.0
        %2482 = vmatpush1.msra.mxu0 0.0
        %2483 = vmatprep.subr.mxu0 0.0
        %2484 = vmatpush1.msra.mxu0 0.0
        %2485 = vmatprep.subr.mxu0 0.0
        %2486 = vmatpush1.msra.mxu0 0.0
        %2487 = vmatprep.subr.mxu0 0.0
        %2488 = vmatpush1.msra.mxu0 0.0
        %2489 = vmatprep.subr.mxu0 0.0
        %2490 = vmatpush1.msra.mxu0 0.0
        %2491 = vmatprep.subr.mxu0 0.0
        %2492 = vmatpush1.msra.mxu0 0.0
        %2493 = vmatprep.subr.mxu0 0.0
        %2494 = vmatpush1.msra.mxu0 0.0
        %2495 = vmatprep.subr.mxu0 0.0
        %2496 = vmatpush1.msra.mxu0 0.0
        %2497 = vmatprep.subr.mxu0 0.0
        %2498 = vmatpush1.msra.mxu0 0.0
        %2499 = vmatprep.subr.mxu0 0.0
        %2500 = vmatpush1.msra.mxu0 0.0
        %2501 = vmatprep.mubr.f32.mxu0 0.0
        %2502 = vmatmul.mubr.f32.gmra.mrb[0].mxu0 %v2433
        %v2503 = vpop.f32.mrb[0].mxu0
        %v2504 = vadd.f32 0.0, %v2503
        %v2505 = vpop.f32.mrb[0].mxu0
        %2506 = vdwg.mxu0
        %v2508 = vsel %vm1044, %v2504, 0
        %2510 = vmatprep.subr.mxu0 0.0
        %2511 = vmatpush1.msra.mxu0 %v2334
        %2512 = vmatprep.subr.mxu0 0.0
        %2513 = vmatpush1.msra.mxu0 0.0
        %2514 = vmatprep.subr.mxu0 0.0
        %2515 = vmatpush1.msra.mxu0 0.0
        %2516 = vmatprep.subr.mxu0 0.0
        %2517 = vmatpush1.msra.mxu0 0.0
        %2518 = vmatprep.subr.mxu0 0.0
        %2519 = vmatpush1.msra.mxu0 0.0
        %2520 = vmatprep.subr.mxu0 0.0
        %2521 = vmatpush1.msra.mxu0 0.0
        %2522 = vmatprep.subr.mxu0 0.0
        %2523 = vmatpush1.msra.mxu0 0.0
        %2524 = vmatprep.subr.mxu0 0.0
        %2525 = vmatpush1.msra.mxu0 0.0
        %2526 = vmatprep.subr.mxu0 0.0
        %2527 = vmatpush1.msra.mxu0 0.0
        %2528 = vmatprep.subr.mxu0 0.0
        %2529 = vmatpush1.msra.mxu0 0.0
        %2530 = vmatprep.subr.mxu0 0.0
        %2531 = vmatpush1.msra.mxu0 0.0
        %2532 = vmatprep.subr.mxu0 0.0
        %2533 = vmatpush1.msra.mxu0 0.0
        %2534 = vmatprep.subr.mxu0 0.0
        %2535 = vmatpush1.msra.mxu0 0.0
        %2536 = vmatprep.subr.mxu0 0.0
        %2537 = vmatpush1.msra.mxu0 0.0
        %2538 = vmatprep.subr.mxu0 0.0
        %2539 = vmatpush1.msra.mxu0 0.0
        %2540 = vmatprep.subr.mxu0 0.0
        %2541 = vmatpush1.msra.mxu0 0.0
        %2542 = vmatprep.subr.mxu0 0.0
        %2543 = vmatpush1.msra.mxu0 0.0
        %2544 = vmatprep.subr.mxu0 0.0
        %2545 = vmatpush1.msra.mxu0 0.0
        %2546 = vmatprep.subr.mxu0 0.0
        %2547 = vmatpush1.msra.mxu0 0.0
        %2548 = vmatprep.subr.mxu0 0.0
        %2549 = vmatpush1.msra.mxu0 0.0
        %2550 = vmatprep.subr.mxu0 0.0
        %2551 = vmatpush1.msra.mxu0 0.0
        %2552 = vmatprep.subr.mxu0 0.0
        %2553 = vmatpush1.msra.mxu0 0.0
        %2554 = vmatprep.subr.mxu0 0.0
        %2555 = vmatpush1.msra.mxu0 0.0
        %2556 = vmatprep.subr.mxu0 0.0
        %2557 = vmatpush1.msra.mxu0 0.0
        %2558 = vmatprep.subr.mxu0 0.0
        %2559 = vmatpush1.msra.mxu0 0.0
        %2560 = vmatprep.subr.mxu0 0.0
        %2561 = vmatpush1.msra.mxu0 0.0
        %2562 = vmatprep.subr.mxu0 0.0
        %2563 = vmatpush1.msra.mxu0 0.0
        %2564 = vmatprep.subr.mxu0 0.0
        %2565 = vmatpush1.msra.mxu0 0.0
        %2566 = vmatprep.subr.mxu0 0.0
        %2567 = vmatpush1.msra.mxu0 0.0
        %2568 = vmatprep.subr.mxu0 0.0
        %2569 = vmatpush1.msra.mxu0 0.0
        %2570 = vmatprep.subr.mxu0 0.0
        %2571 = vmatpush1.msra.mxu0 0.0
        %2572 = vmatprep.subr.mxu0 0.0
        %2573 = vmatpush1.msra.mxu0 0.0
        %2574 = vmatprep.mubr.f32.mxu0 0.0
        %2575 = vmatmul.mubr.f32.gmra.mrb[0].mxu0 %v2508
        %v2576 = vpop.f32.mrb[0].mxu0
        %v2577 = vadd.f32 0.0, %v2576
        %v2578 = vpop.f32.mrb[0].mxu0
        %2579 = vdwg.mxu0
        %v2580 = vadd.f32 %v2340, %v2577
        %2581 = vrot.lane.b32.xlu0 %v2330, 120
        %v2582 = vpop.permute.xlu0 %2581
        %2583 = vrot.lane.b32.xlu0 %v2330, 88
        %v2584 = vpop.permute.xlu0 %2583
        %v2585 = vsel %vm1044, %v2582, 0
        %v2587 = vsel %vm1044, %v2584, 0
        %2589 = vmatprep.subr.mxu0 0.0
        %2590 = vmatpush1.xpose.msra.mxu0 %v2587
        %2591 = vmatprep.subr.mxu0 0.0
        %2592 = vmatpush1.xpose.msra.mxu0 0.0
        %2593 = vmatprep.subr.mxu0 0.0
        %2594 = vmatpush1.xpose.msra.mxu0 0.0
        %2595 = vmatprep.subr.mxu0 0.0
        %2596 = vmatpush1.xpose.msra.mxu0 0.0
        %2597 = vmatprep.subr.mxu0 0.0
        %2598 = vmatpush1.xpose.msra.mxu0 0.0
        %2599 = vmatprep.subr.mxu0 0.0
        %2600 = vmatpush1.xpose.msra.mxu0 0.0
        %2601 = vmatprep.subr.mxu0 0.0
        %2602 = vmatpush1.xpose.msra.mxu0 0.0
        %2603 = vmatprep.subr.mxu0 0.0
        %2604 = vmatpush1.xpose.msra.mxu0 0.0
        %2605 = vmatprep.subr.mxu0 0.0
        %2606 = vmatpush1.xpose.msra.mxu0 0.0
        %2607 = vmatprep.subr.mxu0 0.0
        %2608 = vmatpush1.xpose.msra.mxu0 0.0
        %2609 = vmatprep.subr.mxu0 0.0
        %2610 = vmatpush1.xpose.msra.mxu0 0.0
        %2611 = vmatprep.subr.mxu0 0.0
        %2612 = vmatpush1.xpose.msra.mxu0 0.0
        %2613 = vmatprep.subr.mxu0 0.0
        %2614 = vmatpush1.xpose.msra.mxu0 0.0
        %2615 = vmatprep.subr.mxu0 0.0
        %2616 = vmatpush1.xpose.msra.mxu0 0.0
        %2617 = vmatprep.subr.mxu0 0.0
        %2618 = vmatpush1.xpose.msra.mxu0 0.0
        %2619 = vmatprep.subr.mxu0 0.0
        %2620 = vmatpush1.xpose.msra.mxu0 0.0
        %2621 = vmatprep.subr.mxu0 0.0
        %2622 = vmatpush1.xpose.msra.mxu0 0.0
        %2623 = vmatprep.subr.mxu0 0.0
        %2624 = vmatpush1.xpose.msra.mxu0 0.0
        %2625 = vmatprep.subr.mxu0 0.0
        %2626 = vmatpush1.xpose.msra.mxu0 0.0
        %2627 = vmatprep.subr.mxu0 0.0
        %2628 = vmatpush1.xpose.msra.mxu0 0.0
        %2629 = vmatprep.subr.mxu0 0.0
        %2630 = vmatpush1.xpose.msra.mxu0 0.0
        %2631 = vmatprep.subr.mxu0 0.0
        %2632 = vmatpush1.xpose.msra.mxu0 0.0
        %2633 = vmatprep.subr.mxu0 0.0
        %2634 = vmatpush1.xpose.msra.mxu0 0.0
        %2635 = vmatprep.subr.mxu0 0.0
        %2636 = vmatpush1.xpose.msra.mxu0 0.0
        %2637 = vmatprep.subr.mxu0 0.0
        %2638 = vmatpush1.xpose.msra.mxu0 0.0
        %2639 = vmatprep.subr.mxu0 0.0
        %2640 = vmatpush1.xpose.msra.mxu0 0.0
        %2641 = vmatprep.subr.mxu0 0.0
        %2642 = vmatpush1.xpose.msra.mxu0 0.0
        %2643 = vmatprep.subr.mxu0 0.0
        %2644 = vmatpush1.xpose.msra.mxu0 0.0
        %2645 = vmatprep.subr.mxu0 0.0
        %2646 = vmatpush1.xpose.msra.mxu0 0.0
        %2647 = vmatprep.subr.mxu0 0.0
        %2648 = vmatpush1.xpose.msra.mxu0 0.0
        %2649 = vmatprep.subr.mxu0 0.0
        %2650 = vmatpush1.xpose.msra.mxu0 0.0
        %2651 = vmatprep.subr.mxu0 0.0
        %2652 = vmatpush1.xpose.msra.mxu0 0.0
        %2653 = vmatprep.mubr.f32.mxu0 0.0
        %2654 = vmatmul.mubr.f32.gmra.mrb[0].mxu0 %v2585
        %v2655 = vpop.f32.mrb[0].mxu0
        %v2656 = vadd.f32 0.0, %v2655
        %v2657 = vpop.f32.mrb[0].mxu0
        %2658 = vdwg.mxu0
        %v2659 = vsel %vm2418, %v2656, -inf
        %2660 = vmax.xlane.f32.xlu0 %v2659
        %v2661 = vpop.xlane.xlu0 %2660
        %v2662 = vsub.f32 %v2656, %v2661
        %v2663 = vmul.f32 %v2662, 1.442695
        %v2664 = vpow.pop %v2663
        %v2665 = vsel %vm2418, %v2664, 0.0
        %2666 = vadd.xlane.f32.xlu0 %v2665
        %v2667 = vpop.xlane.xlu0 %2666
        %v2668 = vrcp.pop %v2667
        %v2669 = vmul.f32 %v2664, %v2668
        %2670 = vrot.lane.b32.xlu0 %v2330, 56
        %v2671 = vpop.permute.xlu0 %2670
        %v2673 = vsel %vm1133, %v2669, 0
        %v2675 = vsel %vm1137, %v2671, 0
        %2677 = vmatprep.subr.mxu0 0.0
        %2678 = vmatpush1.msra.mxu0 %v2675
        %2679 = vmatprep.subr.mxu0 0.0
        %2680 = vmatpush1.msra.mxu0 0.0
        %2681 = vmatprep.subr.mxu0 0.0
        %2682 = vmatpush1.msra.mxu0 0.0
        %2683 = vmatprep.subr.mxu0 0.0
        %2684 = vmatpush1.msra.mxu0 0.0
        %2685 = vmatprep.subr.mxu0 0.0
        %2686 = vmatpush1.msra.mxu0 0.0
        %2687 = vmatprep.subr.mxu0 0.0
        %2688 = vmatpush1.msra.mxu0 0.0
        %2689 = vmatprep.subr.mxu0 0.0
        %2690 = vmatpush1.msra.mxu0 0.0
        %2691 = vmatprep.subr.mxu0 0.0
        %2692 = vmatpush1.msra.mxu0 0.0
        %2693 = vmatprep.subr.mxu0 0.0
        %2694 = vmatpush1.msra.mxu0 0.0
        %2695 = vmatprep.subr.mxu0 0.0
        %2696 = vmatpush1.msra.mxu0 0.0
        %2697 = vmatprep.subr.mxu0 0.0
        %2698 = vmatpush1.msra.mxu0 0.0
        %2699 = vmatprep.subr.mxu0 0.0
        %2700 = vmatpush1.msra.mxu0 0.0
        %2701 = vmatprep.subr.mxu0 0.0
        %2702 = vmatpush1.msra.mxu0 0.0
        %2703 = vmatprep.subr.mxu0 0.0
        %2704 = vmatpush1.msra.mxu0 0.0
        %2705 = vmatprep.subr.mxu0 0.0
        %2706 = vmatpush1.msra.mxu0 0.0
        %2707 = vmatprep.subr.mxu0 0.0
        %2708 = vmatpush1.msra.mxu0 0.0
        %2709 = vmatprep.subr.mxu0 0.0
        %2710 = vmatpush1.msra.mxu0 0.0
        %2711 = vmatprep.subr.mxu0 0.0
        %2712 = vmatpush1.msra.mxu0 0.0
        %2713 = vmatprep.subr.mxu0 0.0
        %2714 = vmatpush1.msra.mxu0 0.0
        %2715 = vmatprep.subr.mxu0 0.0
        %2716 = vmatpush1.msra.mxu0 0.0
        %2717 = vmatprep.subr.mxu0 0.0
        %2718 = vmatpush1.msra.mxu0 0.0
        %2719 = vmatprep.subr.mxu0 0.0
        %2720 = vmatpush1.msra.mxu0 0.0
        %2721 = vmatprep.subr.mxu0 0.0
        %2722 = vmatpush1.msra.mxu0 0.0
        %2723 = vmatprep.subr.mxu0 0.0
        %2724 = vmatpush1.msra.mxu0 0.0
        %2725 = vmatprep.subr.mxu0 0.0
        %2726 = vmatpush1.msra.mxu0 0.0
        %2727 = vmatprep.subr.mxu0 0.0
        %2728 = vmatpush1.msra.mxu0 0.0
        %2729 = vmatprep.subr.mxu0 0.0
        %2730 = vmatpush1.msra.mxu0 0.0
        %2731 = vmatprep.subr.mxu0 0.0
        %2732 = vmatpush1.msra.mxu0 0.0
        %2733 = vmatprep.subr.mxu0 0.0
        %2734 = vmatpush1.msra.mxu0 0.0
        %2735 = vmatprep.subr.mxu0 0.0
        %2736 = vmatpush1.msra.mxu0 0.0
        %2737 = vmatprep.subr.mxu0 0.0
        %2738 = vmatpush1.msra.mxu0 0.0
        %2739 = vmatprep.subr.mxu0 0.0
        %2740 = vmatpush1.msra.mxu0 0.0
        %2741 = vmatprep.mubr.f32.mxu0 0.0
        %2742 = vmatmul.mubr.f32.gmra.mrb[0].mxu0 %v2673
        %v2743 = vpop.f32.mrb[0].mxu0
        %v2744 = vadd.f32 0.0, %v2743
        %v2745 = vpop.f32.mrb[0].mxu0
        %2746 = vdwg.mxu0
        %v2748 = vsel %vm1044, %v2744, 0
        %2750 = vmatprep.subr.mxu0 0.0
        %2751 = vmatpush1.msra.mxu0 %v2335
        %2752 = vmatprep.subr.mxu0 0.0
        %2753 = vmatpush1.msra.mxu0 0.0
        %2754 = vmatprep.subr.mxu0 0.0
        %2755 = vmatpush1.msra.mxu0 0.0
        %2756 = vmatprep.subr.mxu0 0.0
        %2757 = vmatpush1.msra.mxu0 0.0
        %2758 = vmatprep.subr.mxu0 0.0
        %2759 = vmatpush1.msra.mxu0 0.0
        %2760 = vmatprep.subr.mxu0 0.0
        %2761 = vmatpush1.msra.mxu0 0.0
        %2762 = vmatprep.subr.mxu0 0.0
        %2763 = vmatpush1.msra.mxu0 0.0
        %2764 = vmatprep.subr.mxu0 0.0
        %2765 = vmatpush1.msra.mxu0 0.0
        %2766 = vmatprep.subr.mxu0 0.0
        %2767 = vmatpush1.msra.mxu0 0.0
        %2768 = vmatprep.subr.mxu0 0.0
        %2769 = vmatpush1.msra.mxu0 0.0
        %2770 = vmatprep.subr.mxu0 0.0
        %2771 = vmatpush1.msra.mxu0 0.0
        %2772 = vmatprep.subr.mxu0 0.0
        %2773 = vmatpush1.msra.mxu0 0.0
        %2774 = vmatprep.subr.mxu0 0.0
        %2775 = vmatpush1.msra.mxu0 0.0
        %2776 = vmatprep.subr.mxu0 0.0
        %2777 = vmatpush1.msra.mxu0 0.0
        %2778 = vmatprep.subr.mxu0 0.0
        %2779 = vmatpush1.msra.mxu0 0.0
        %2780 = vmatprep.subr.mxu0 0.0
        %2781 = vmatpush1.msra.mxu0 0.0
        %2782 = vmatprep.subr.mxu0 0.0
        %2783 = vmatpush1.msra.mxu0 0.0
        %2784 = vmatprep.subr.mxu0 0.0
        %2785 = vmatpush1.msra.mxu0 0.0
        %2786 = vmatprep.subr.mxu0 0.0
        %2787 = vmatpush1.msra.mxu0 0.0
        %2788 = vmatprep.subr.mxu0 0.0
        %2789 = vmatpush1.msra.mxu0 0.0
        %2790 = vmatprep.subr.mxu0 0.0
        %2791 = vmatpush1.msra.mxu0 0.0
        %2792 = vmatprep.subr.mxu0 0.0
        %2793 = vmatpush1.msra.mxu0 0.0
        %2794 = vmatprep.subr.mxu0 0.0
        %2795 = vmatpush1.msra.mxu0 0.0
        %2796 = vmatprep.subr.mxu0 0.0
        %2797 = vmatpush1.msra.mxu0 0.0
        %2798 = vmatprep.subr.mxu0 0.0
        %2799 = vmatpush1.msra.mxu0 0.0
        %2800 = vmatprep.subr.mxu0 0.0
        %2801 = vmatpush1.msra.mxu0 0.0
        %2802 = vmatprep.subr.mxu0 0.0
        %2803 = vmatpush1.msra.mxu0 0.0
        %2804 = vmatprep.subr.mxu0 0.0
        %2805 = vmatpush1.msra.mxu0 0.0
        %2806 = vmatprep.subr.mxu0 0.0
        %2807 = vmatpush1.msra.mxu0 0.0
        %2808 = vmatprep.subr.mxu0 0.0
        %2809 = vmatpush1.msra.mxu0 0.0
        %2810 = vmatprep.subr.mxu0 0.0
        %2811 = vmatpush1.msra.mxu0 0.0
        %2812 = vmatprep.subr.mxu0 0.0
        %2813 = vmatpush1.msra.mxu0 0.0
        %2814 = vmatprep.mubr.f32.mxu0 0.0
        %2815 = vmatmul.mubr.f32.gmra.mrb[0].mxu0 %v2748
        %v2816 = vpop.f32.mrb[0].mxu0
        %v2817 = vadd.f32 0.0, %v2816
        %v2818 = vpop.f32.mrb[0].mxu0
        %2819 = vdwg.mxu0
        %v2820 = vadd.f32 %v2580, %v2817
        %2821 = vrot.lane.b32.xlu0 %v2330, 112
        %v2822 = vpop.permute.xlu0 %2821
        %2823 = vrot.lane.b32.xlu0 %v2330, 80
        %v2824 = vpop.permute.xlu0 %2823
        %v2825 = vsel %vm1044, %v2822, 0
        %v2827 = vsel %vm1044, %v2824, 0
        %2829 = vmatprep.subr.mxu0 0.0
        %2830 = vmatpush1.xpose.msra.mxu0 %v2827
        %2831 = vmatprep.subr.mxu0 0.0
        %2832 = vmatpush1.xpose.msra.mxu0 0.0
        %2833 = vmatprep.subr.mxu0 0.0
        %2834 = vmatpush1.xpose.msra.mxu0 0.0
        %2835 = vmatprep.subr.mxu0 0.0
        %2836 = vmatpush1.xpose.msra.mxu0 0.0
        %2837 = vmatprep.subr.mxu0 0.0
        %2838 = vmatpush1.xpose.msra.mxu0 0.0
        %2839 = vmatprep.subr.mxu0 0.0
        %2840 = vmatpush1.xpose.msra.mxu0 0.0
        %2841 = vmatprep.subr.mxu0 0.0
        %2842 = vmatpush1.xpose.msra.mxu0 0.0
        %2843 = vmatprep.subr.mxu0 0.0
        %2844 = vmatpush1.xpose.msra.mxu0 0.0
        %2845 = vmatprep.subr.mxu0 0.0
        %2846 = vmatpush1.xpose.msra.mxu0 0.0
        %2847 = vmatprep.subr.mxu0 0.0
        %2848 = vmatpush1.xpose.msra.mxu0 0.0
        %2849 = vmatprep.subr.mxu0 0.0
        %2850 = vmatpush1.xpose.msra.mxu0 0.0
        %2851 = vmatprep.subr.mxu0 0.0
        %2852 = vmatpush1.xpose.msra.mxu0 0.0
        %2853 = vmatprep.subr.mxu0 0.0
        %2854 = vmatpush1.xpose.msra.mxu0 0.0
        %2855 = vmatprep.subr.mxu0 0.0
        %2856 = vmatpush1.xpose.msra.mxu0 0.0
        %2857 = vmatprep.subr.mxu0 0.0
        %2858 = vmatpush1.xpose.msra.mxu0 0.0
        %2859 = vmatprep.subr.mxu0 0.0
        %2860 = vmatpush1.xpose.msra.mxu0 0.0
        %2861 = vmatprep.subr.mxu0 0.0
        %2862 = vmatpush1.xpose.msra.mxu0 0.0
        %2863 = vmatprep.subr.mxu0 0.0
        %2864 = vmatpush1.xpose.msra.mxu0 0.0
        %2865 = vmatprep.subr.mxu0 0.0
        %2866 = vmatpush1.xpose.msra.mxu0 0.0
        %2867 = vmatprep.subr.mxu0 0.0
        %2868 = vmatpush1.xpose.msra.mxu0 0.0
        %2869 = vmatprep.subr.mxu0 0.0
        %2870 = vmatpush1.xpose.msra.mxu0 0.0
        %2871 = vmatprep.subr.mxu0 0.0
        %2872 = vmatpush1.xpose.msra.mxu0 0.0
        %2873 = vmatprep.subr.mxu0 0.0
        %2874 = vmatpush1.xpose.msra.mxu0 0.0
        %2875 = vmatprep.subr.mxu0 0.0
        %2876 = vmatpush1.xpose.msra.mxu0 0.0
        %2877 = vmatprep.subr.mxu0 0.0
        %2878 = vmatpush1.xpose.msra.mxu0 0.0
        %2879 = vmatprep.subr.mxu0 0.0
        %2880 = vmatpush1.xpose.msra.mxu0 0.0
        %2881 = vmatprep.subr.mxu0 0.0
        %2882 = vmatpush1.xpose.msra.mxu0 0.0
        %2883 = vmatprep.subr.mxu0 0.0
        %2884 = vmatpush1.xpose.msra.mxu0 0.0
        %2885 = vmatprep.subr.mxu0 0.0
        %2886 = vmatpush1.xpose.msra.mxu0 0.0
        %2887 = vmatprep.subr.mxu0 0.0
        %2888 = vmatpush1.xpose.msra.mxu0 0.0
        %2889 = vmatprep.subr.mxu0 0.0
        %2890 = vmatpush1.xpose.msra.mxu0 0.0
        %2891 = vmatprep.subr.mxu0 0.0
        %2892 = vmatpush1.xpose.msra.mxu0 0.0
        %2893 = vmatprep.mubr.f32.mxu0 0.0
        %2894 = vmatmul.mubr.f32.gmra.mrb[0].mxu0 %v2825
        %v2895 = vpop.f32.mrb[0].mxu0
        %v2896 = vadd.f32 0.0, %v2895
        %v2897 = vpop.f32.mrb[0].mxu0
        %2898 = vdwg.mxu0
        %v2899 = vsel %vm2418, %v2896, -inf
        %2900 = vmax.xlane.f32.xlu0 %v2899
        %v2901 = vpop.xlane.xlu0 %2900
        %v2902 = vsub.f32 %v2896, %v2901
        %v2903 = vmul.f32 %v2902, 1.442695
        %v2904 = vpow.pop %v2903
        %v2905 = vsel %vm2418, %v2904, 0.0
        %2906 = vadd.xlane.f32.xlu0 %v2905
        %v2907 = vpop.xlane.xlu0 %2906
        %v2908 = vrcp.pop %v2907
        %v2909 = vmul.f32 %v2904, %v2908
        %2910 = vrot.lane.b32.xlu0 %v2330, 48
        %v2911 = vpop.permute.xlu0 %2910
        %v2913 = vsel %vm1133, %v2909, 0
        %v2915 = vsel %vm1137, %v2911, 0
        %2917 = vmatprep.subr.mxu0 0.0
        %2918 = vmatpush1.msra.mxu0 %v2915
        %2919 = vmatprep.subr.mxu0 0.0
        %2920 = vmatpush1.msra.mxu0 0.0
        %2921 = vmatprep.subr.mxu0 0.0
        %2922 = vmatpush1.msra.mxu0 0.0
        %2923 = vmatprep.subr.mxu0 0.0
        %2924 = vmatpush1.msra.mxu0 0.0
        %2925 = vmatprep.subr.mxu0 0.0
        %2926 = vmatpush1.msra.mxu0 0.0
        %2927 = vmatprep.subr.mxu0 0.0
        %2928 = vmatpush1.msra.mxu0 0.0
        %2929 = vmatprep.subr.mxu0 0.0
        %2930 = vmatpush1.msra.mxu0 0.0
        %2931 = vmatprep.subr.mxu0 0.0
        %2932 = vmatpush1.msra.mxu0 0.0
        %2933 = vmatprep.subr.mxu0 0.0
        %2934 = vmatpush1.msra.mxu0 0.0
        %2935 = vmatprep.subr.mxu0 0.0
        %2936 = vmatpush1.msra.mxu0 0.0
        %2937 = vmatprep.subr.mxu0 0.0
        %2938 = vmatpush1.msra.mxu0 0.0
        %2939 = vmatprep.subr.mxu0 0.0
        %2940 = vmatpush1.msra.mxu0 0.0
        %2941 = vmatprep.subr.mxu0 0.0
        %2942 = vmatpush1.msra.mxu0 0.0
        %2943 = vmatprep.subr.mxu0 0.0
        %2944 = vmatpush1.msra.mxu0 0.0
        %2945 = vmatprep.subr.mxu0 0.0
        %2946 = vmatpush1.msra.mxu0 0.0
        %2947 = vmatprep.subr.mxu0 0.0
        %2948 = vmatpush1.msra.mxu0 0.0
        %2949 = vmatprep.subr.mxu0 0.0
        %2950 = vmatpush1.msra.mxu0 0.0
        %2951 = vmatprep.subr.mxu0 0.0
        %2952 = vmatpush1.msra.mxu0 0.0
        %2953 = vmatprep.subr.mxu0 0.0
        %2954 = vmatpush1.msra.mxu0 0.0
        %2955 = vmatprep.subr.mxu0 0.0
        %2956 = vmatpush1.msra.mxu0 0.0
        %2957 = vmatprep.subr.mxu0 0.0
        %2958 = vmatpush1.msra.mxu0 0.0
        %2959 = vmatprep.subr.mxu0 0.0
        %2960 = vmatpush1.msra.mxu0 0.0
        %2961 = vmatprep.subr.mxu0 0.0
        %2962 = vmatpush1.msra.mxu0 0.0
        %2963 = vmatprep.subr.mxu0 0.0
        %2964 = vmatpush1.msra.mxu0 0.0
        %2965 = vmatprep.subr.mxu0 0.0
        %2966 = vmatpush1.msra.mxu0 0.0
        %2967 = vmatprep.subr.mxu0 0.0
        %2968 = vmatpush1.msra.mxu0 0.0
        %2969 = vmatprep.subr.mxu0 0.0
        %2970 = vmatpush1.msra.mxu0 0.0
        %2971 = vmatprep.subr.mxu0 0.0
        %2972 = vmatpush1.msra.mxu0 0.0
        %2973 = vmatprep.subr.mxu0 0.0
        %2974 = vmatpush1.msra.mxu0 0.0
        %2975 = vmatprep.subr.mxu0 0.0
        %2976 = vmatpush1.msra.mxu0 0.0
        %2977 = vmatprep.subr.mxu0 0.0
        %2978 = vmatpush1.msra.mxu0 0.0
        %2979 = vmatprep.subr.mxu0 0.0
        %2980 = vmatpush1.msra.mxu0 0.0
        %2981 = vmatprep.mubr.f32.mxu0 0.0
        %2982 = vmatmul.mubr.f32.gmra.mrb[0].mxu0 %v2913
        %v2983 = vpop.f32.mrb[0].mxu0
        %v2984 = vadd.f32 0.0, %v2983
        %v2985 = vpop.f32.mrb[0].mxu0
        %2986 = vdwg.mxu0
        %v2988 = vsel %vm1044, %v2984, 0
        %2990 = vmatprep.subr.mxu0 0.0
        %2991 = vmatpush1.msra.mxu0 %v2336
        %2992 = vmatprep.subr.mxu0 0.0
        %2993 = vmatpush1.msra.mxu0 0.0
        %2994 = vmatprep.subr.mxu0 0.0
        %2995 = vmatpush1.msra.mxu0 0.0
        %2996 = vmatprep.subr.mxu0 0.0
        %2997 = vmatpush1.msra.mxu0 0.0
        %2998 = vmatprep.subr.mxu0 0.0
        %2999 = vmatpush1.msra.mxu0 0.0
        %3000 = vmatprep.subr.mxu0 0.0
        %3001 = vmatpush1.msra.mxu0 0.0
        %3002 = vmatprep.subr.mxu0 0.0
        %3003 = vmatpush1.msra.mxu0 0.0
        %3004 = vmatprep.subr.mxu0 0.0
        %3005 = vmatpush1.msra.mxu0 0.0
        %3006 = vmatprep.subr.mxu0 0.0
        %3007 = vmatpush1.msra.mxu0 0.0
        %3008 = vmatprep.subr.mxu0 0.0
        %3009 = vmatpush1.msra.mxu0 0.0
        %3010 = vmatprep.subr.mxu0 0.0
        %3011 = vmatpush1.msra.mxu0 0.0
        %3012 = vmatprep.subr.mxu0 0.0
        %3013 = vmatpush1.msra.mxu0 0.0
        %3014 = vmatprep.subr.mxu0 0.0
        %3015 = vmatpush1.msra.mxu0 0.0
        %3016 = vmatprep.subr.mxu0 0.0
        %3017 = vmatpush1.msra.mxu0 0.0
        %3018 = vmatprep.subr.mxu0 0.0
        %3019 = vmatpush1.msra.mxu0 0.0
        %3020 = vmatprep.subr.mxu0 0.0
        %3021 = vmatpush1.msra.mxu0 0.0
        %3022 = vmatprep.subr.mxu0 0.0
        %3023 = vmatpush1.msra.mxu0 0.0
        %3024 = vmatprep.subr.mxu0 0.0
        %3025 = vmatpush1.msra.mxu0 0.0
        %3026 = vmatprep.subr.mxu0 0.0
        %3027 = vmatpush1.msra.mxu0 0.0
        %3028 = vmatprep.subr.mxu0 0.0
        %3029 = vmatpush1.msra.mxu0 0.0
        %3030 = vmatprep.subr.mxu0 0.0
        %3031 = vmatpush1.msra.mxu0 0.0
        %3032 = vmatprep.subr.mxu0 0.0
        %3033 = vmatpush1.msra.mxu0 0.0
        %3034 = vmatprep.subr.mxu0 0.0
        %3035 = vmatpush1.msra.mxu0 0.0
        %3036 = vmatprep.subr.mxu0 0.0
        %3037 = vmatpush1.msra.mxu0 0.0
        %3038 = vmatprep.subr.mxu0 0.0
        %3039 = vmatpush1.msra.mxu0 0.0
        %3040 = vmatprep.subr.mxu0 0.0
        %3041 = vmatpush1.msra.mxu0 0.0
        %3042 = vmatprep.subr.mxu0 0.0
        %3043 = vmatpush1.msra.mxu0 0.0
        %3044 = vmatprep.subr.mxu0 0.0
        %3045 = vmatpush1.msra.mxu0 0.0
        %3046 = vmatprep.subr.mxu0 0.0
        %3047 = vmatpush1.msra.mxu0 0.0
        %3048 = vmatprep.subr.mxu0 0.0
        %3049 = vmatpush1.msra.mxu0 0.0
        %3050 = vmatprep.subr.mxu0 0.0
        %3051 = vmatpush1.msra.mxu0 0.0
        %3052 = vmatprep.subr.mxu0 0.0
        %3053 = vmatpush1.msra.mxu0 0.0
        %3054 = vmatprep.mubr.f32.mxu0 0.0
        %3055 = vmatmul.mubr.f32.gmra.mrb[0].mxu0 %v2988
        %v3056 = vpop.f32.mrb[0].mxu0
        %v3057 = vadd.f32 0.0, %v3056
        %v3058 = vpop.f32.mrb[0].mxu0
        %3059 = vdwg.mxu0
        %v3060 = vadd.f32 %v2820, %v3057
        %3061 = vrot.lane.b32.xlu0 %v2330, 104
        %v3062 = vpop.permute.xlu0 %3061
        %3063 = vrot.lane.b32.xlu0 %v2330, 72
        %v3064 = vpop.permute.xlu0 %3063
        %v3065 = vsel %vm1044, %v3062, 0
        %v3067 = vsel %vm1044, %v3064, 0
        %3069 = vmatprep.subr.mxu0 0.0
        %3070 = vmatpush1.xpose.msra.mxu0 %v3067
        %3071 = vmatprep.subr.mxu0 0.0
        %3072 = vmatpush1.xpose.msra.mxu0 0.0
        %3073 = vmatprep.subr.mxu0 0.0
        %3074 = vmatpush1.xpose.msra.mxu0 0.0
        %3075 = vmatprep.subr.mxu0 0.0
        %3076 = vmatpush1.xpose.msra.mxu0 0.0
        %3077 = vmatprep.subr.mxu0 0.0
        %3078 = vmatpush1.xpose.msra.mxu0 0.0
        %3079 = vmatprep.subr.mxu0 0.0
        %3080 = vmatpush1.xpose.msra.mxu0 0.0
        %3081 = vmatprep.subr.mxu0 0.0
        %3082 = vmatpush1.xpose.msra.mxu0 0.0
        %3083 = vmatprep.subr.mxu0 0.0
        %3084 = vmatpush1.xpose.msra.mxu0 0.0
        %3085 = vmatprep.subr.mxu0 0.0
        %3086 = vmatpush1.xpose.msra.mxu0 0.0
        %3087 = vmatprep.subr.mxu0 0.0
        %3088 = vmatpush1.xpose.msra.mxu0 0.0
        %3089 = vmatprep.subr.mxu0 0.0
        %3090 = vmatpush1.xpose.msra.mxu0 0.0
        %3091 = vmatprep.subr.mxu0 0.0
        %3092 = vmatpush1.xpose.msra.mxu0 0.0
        %3093 = vmatprep.subr.mxu0 0.0
        %3094 = vmatpush1.xpose.msra.mxu0 0.0
        %3095 = vmatprep.subr.mxu0 0.0
        %3096 = vmatpush1.xpose.msra.mxu0 0.0
        %3097 = vmatprep.subr.mxu0 0.0
        %3098 = vmatpush1.xpose.msra.mxu0 0.0
        %3099 = vmatprep.subr.mxu0 0.0
        %3100 = vmatpush1.xpose.msra.mxu0 0.0
        %3101 = vmatprep.subr.mxu0 0.0
        %3102 = vmatpush1.xpose.msra.mxu0 0.0
        %3103 = vmatprep.subr.mxu0 0.0
        %3104 = vmatpush1.xpose.msra.mxu0 0.0
        %3105 = vmatprep.subr.mxu0 0.0
        %3106 = vmatpush1.xpose.msra.mxu0 0.0
        %3107 = vmatprep.subr.mxu0 0.0
        %3108 = vmatpush1.xpose.msra.mxu0 0.0
        %3109 = vmatprep.subr.mxu0 0.0
        %3110 = vmatpush1.xpose.msra.mxu0 0.0
        %3111 = vmatprep.subr.mxu0 0.0
        %3112 = vmatpush1.xpose.msra.mxu0 0.0
        %3113 = vmatprep.subr.mxu0 0.0
        %3114 = vmatpush1.xpose.msra.mxu0 0.0
        %3115 = vmatprep.subr.mxu0 0.0
        %3116 = vmatpush1.xpose.msra.mxu0 0.0
        %3117 = vmatprep.subr.mxu0 0.0
        %3118 = vmatpush1.xpose.msra.mxu0 0.0
        %3119 = vmatprep.subr.mxu0 0.0
        %3120 = vmatpush1.xpose.msra.mxu0 0.0
        %3121 = vmatprep.subr.mxu0 0.0
        %3122 = vmatpush1.xpose.msra.mxu0 0.0
        %3123 = vmatprep.subr.mxu0 0.0
        %3124 = vmatpush1.xpose.msra.mxu0 0.0
        %3125 = vmatprep.subr.mxu0 0.0
        %3126 = vmatpush1.xpose.msra.mxu0 0.0
        %3127 = vmatprep.subr.mxu0 0.0
        %3128 = vmatpush1.xpose.msra.mxu0 0.0
        %3129 = vmatprep.subr.mxu0 0.0
        %3130 = vmatpush1.xpose.msra.mxu0 0.0
        %3131 = vmatprep.subr.mxu0 0.0
        %3132 = vmatpush1.xpose.msra.mxu0 0.0
        %3133 = vmatprep.mubr.f32.mxu0 0.0
        %3134 = vmatmul.mubr.f32.gmra.mrb[0].mxu0 %v3065
        %v3135 = vpop.f32.mrb[0].mxu0
        %v3136 = vadd.f32 0.0, %v3135
        %v3137 = vpop.f32.mrb[0].mxu0
        %3138 = vdwg.mxu0
        %v3139 = vsel %vm2418, %v3136, -inf
        %3140 = vmax.xlane.f32.xlu0 %v3139
        %v3141 = vpop.xlane.xlu0 %3140
        %v3142 = vsub.f32 %v3136, %v3141
        %v3143 = vmul.f32 %v3142, 1.442695
        %v3144 = vpow.pop %v3143
        %v3145 = vsel %vm2418, %v3144, 0.0
        %3146 = vadd.xlane.f32.xlu0 %v3145
        %v3147 = vpop.xlane.xlu0 %3146
        %v3148 = vrcp.pop %v3147
        %v3149 = vmul.f32 %v3144, %v3148
        %3150 = vrot.lane.b32.xlu0 %v2330, 40
        %v3151 = vpop.permute.xlu0 %3150
        %v3153 = vsel %vm1133, %v3149, 0
        %v3155 = vsel %vm1137, %v3151, 0
        %3157 = vmatprep.subr.mxu0 0.0
        %3158 = vmatpush1.msra.mxu0 %v3155
        %3159 = vmatprep.subr.mxu0 0.0
        %3160 = vmatpush1.msra.mxu0 0.0
        %3161 = vmatprep.subr.mxu0 0.0
        %3162 = vmatpush1.msra.mxu0 0.0
        %3163 = vmatprep.subr.mxu0 0.0
        %3164 = vmatpush1.msra.mxu0 0.0
        %3165 = vmatprep.subr.mxu0 0.0
        %3166 = vmatpush1.msra.mxu0 0.0
        %3167 = vmatprep.subr.mxu0 0.0
        %3168 = vmatpush1.msra.mxu0 0.0
        %3169 = vmatprep.subr.mxu0 0.0
        %3170 = vmatpush1.msra.mxu0 0.0
        %3171 = vmatprep.subr.mxu0 0.0
        %3172 = vmatpush1.msra.mxu0 0.0
        %3173 = vmatprep.subr.mxu0 0.0
        %3174 = vmatpush1.msra.mxu0 0.0
        %3175 = vmatprep.subr.mxu0 0.0
        %3176 = vmatpush1.msra.mxu0 0.0
        %3177 = vmatprep.subr.mxu0 0.0
        %3178 = vmatpush1.msra.mxu0 0.0
        %3179 = vmatprep.subr.mxu0 0.0
        %3180 = vmatpush1.msra.mxu0 0.0
        %3181 = vmatprep.subr.mxu0 0.0
        %3182 = vmatpush1.msra.mxu0 0.0
        %3183 = vmatprep.subr.mxu0 0.0
        %3184 = vmatpush1.msra.mxu0 0.0
        %3185 = vmatprep.subr.mxu0 0.0
        %3186 = vmatpush1.msra.mxu0 0.0
        %3187 = vmatprep.subr.mxu0 0.0
        %3188 = vmatpush1.msra.mxu0 0.0
        %3189 = vmatprep.subr.mxu0 0.0
        %3190 = vmatpush1.msra.mxu0 0.0
        %3191 = vmatprep.subr.mxu0 0.0
        %3192 = vmatpush1.msra.mxu0 0.0
        %3193 = vmatprep.subr.mxu0 0.0
        %3194 = vmatpush1.msra.mxu0 0.0
        %3195 = vmatprep.subr.mxu0 0.0
        %3196 = vmatpush1.msra.mxu0 0.0
        %3197 = vmatprep.subr.mxu0 0.0
        %3198 = vmatpush1.msra.mxu0 0.0
        %3199 = vmatprep.subr.mxu0 0.0
        %3200 = vmatpush1.msra.mxu0 0.0
        %3201 = vmatprep.subr.mxu0 0.0
        %3202 = vmatpush1.msra.mxu0 0.0
        %3203 = vmatprep.subr.mxu0 0.0
        %3204 = vmatpush1.msra.mxu0 0.0
        %3205 = vmatprep.subr.mxu0 0.0
        %3206 = vmatpush1.msra.mxu0 0.0
        %3207 = vmatprep.subr.mxu0 0.0
        %3208 = vmatpush1.msra.mxu0 0.0
        %3209 = vmatprep.subr.mxu0 0.0
        %3210 = vmatpush1.msra.mxu0 0.0
        %3211 = vmatprep.subr.mxu0 0.0
        %3212 = vmatpush1.msra.mxu0 0.0
        %3213 = vmatprep.subr.mxu0 0.0
        %3214 = vmatpush1.msra.mxu0 0.0
        %3215 = vmatprep.subr.mxu0 0.0
        %3216 = vmatpush1.msra.mxu0 0.0
        %3217 = vmatprep.subr.mxu0 0.0
        %3218 = vmatpush1.msra.mxu0 0.0
        %3219 = vmatprep.subr.mxu0 0.0
        %3220 = vmatpush1.msra.mxu0 0.0
        %3221 = vmatprep.mubr.f32.mxu0 0.0
        %3222 = vmatmul.mubr.f32.gmra.mrb[0].mxu0 %v3153
        %v3223 = vpop.f32.mrb[0].mxu0
        %v3224 = vadd.f32 0.0, %v3223
        %v3225 = vpop.f32.mrb[0].mxu0
        %3226 = vdwg.mxu0
        %v3228 = vsel %vm1044, %v3224, 0
        %3230 = vmatprep.subr.mxu0 0.0
        %3231 = vmatpush1.msra.mxu0 %v2337
        %3232 = vmatprep.subr.mxu0 0.0
        %3233 = vmatpush1.msra.mxu0 0.0
        %3234 = vmatprep.subr.mxu0 0.0
        %3235 = vmatpush1.msra.mxu0 0.0
        %3236 = vmatprep.subr.mxu0 0.0
        %3237 = vmatpush1.msra.mxu0 0.0
        %3238 = vmatprep.subr.mxu0 0.0
        %3239 = vmatpush1.msra.mxu0 0.0
        %3240 = vmatprep.subr.mxu0 0.0
        %3241 = vmatpush1.msra.mxu0 0.0
        %3242 = vmatprep.subr.mxu0 0.0
        %3243 = vmatpush1.msra.mxu0 0.0
        %3244 = vmatprep.subr.mxu0 0.0
        %3245 = vmatpush1.msra.mxu0 0.0
        %3246 = vmatprep.subr.mxu0 0.0
        %3247 = vmatpush1.msra.mxu0 0.0
        %3248 = vmatprep.subr.mxu0 0.0
        %3249 = vmatpush1.msra.mxu0 0.0
        %3250 = vmatprep.subr.mxu0 0.0
        %3251 = vmatpush1.msra.mxu0 0.0
        %3252 = vmatprep.subr.mxu0 0.0
        %3253 = vmatpush1.msra.mxu0 0.0
        %3254 = vmatprep.subr.mxu0 0.0
        %3255 = vmatpush1.msra.mxu0 0.0
        %3256 = vmatprep.subr.mxu0 0.0
        %3257 = vmatpush1.msra.mxu0 0.0
        %3258 = vmatprep.subr.mxu0 0.0
        %3259 = vmatpush1.msra.mxu0 0.0
        %3260 = vmatprep.subr.mxu0 0.0
        %3261 = vmatpush1.msra.mxu0 0.0
        %3262 = vmatprep.subr.mxu0 0.0
        %3263 = vmatpush1.msra.mxu0 0.0
        %3264 = vmatprep.subr.mxu0 0.0
        %3265 = vmatpush1.msra.mxu0 0.0
        %3266 = vmatprep.subr.mxu0 0.0
        %3267 = vmatpush1.msra.mxu0 0.0
        %3268 = vmatprep.subr.mxu0 0.0
        %3269 = vmatpush1.msra.mxu0 0.0
        %3270 = vmatprep.subr.mxu0 0.0
        %3271 = vmatpush1.msra.mxu0 0.0
        %3272 = vmatprep.subr.mxu0 0.0
        %3273 = vmatpush1.msra.mxu0 0.0
        %3274 = vmatprep.subr.mxu0 0.0
        %3275 = vmatpush1.msra.mxu0 0.0
        %3276 = vmatprep.subr.mxu0 0.0
        %3277 = vmatpush1.msra.mxu0 0.0
        %3278 = vmatprep.subr.mxu0 0.0
        %3279 = vmatpush1.msra.mxu0 0.0
        %3280 = vmatprep.subr.mxu0 0.0
        %3281 = vmatpush1.msra.mxu0 0.0
        %3282 = vmatprep.subr.mxu0 0.0
        %3283 = vmatpush1.msra.mxu0 0.0
        %3284 = vmatprep.subr.mxu0 0.0
        %3285 = vmatpush1.msra.mxu0 0.0
        %3286 = vmatprep.subr.mxu0 0.0
        %3287 = vmatpush1.msra.mxu0 0.0
        %3288 = vmatprep.subr.mxu0 0.0
        %3289 = vmatpush1.msra.mxu0 0.0
        %3290 = vmatprep.subr.mxu0 0.0
        %3291 = vmatpush1.msra.mxu0 0.0
        %3292 = vmatprep.subr.mxu0 0.0
        %3293 = vmatpush1.msra.mxu0 0.0
        %3294 = vmatprep.mubr.f32.mxu0 0.0
        %3295 = vmatmul.mubr.f32.gmra.mrb[0].mxu0 %v3228
        %v3296 = vpop.f32.mrb[0].mxu0
        %v3297 = vadd.f32 0.0, %v3296
        %v3298 = vpop.f32.mrb[0].mxu0
        %3299 = vdwg.mxu0
        %v3300 = vadd.f32 %v3060, %v3297
        %s3301 = scalar_lea.vmem %s9, 1
        %v3302 = vld [vmem:[%s3301] sm:$0x1]
        %s3303 = scalar_lea.vmem %s10, 1
        %v3304 = vld [vmem:[%s3303] sm:$0x1]
        %vm3305 = vcmask 253952
        %v3306 = vsel %vm3305, %v3300, 0.0
        %3307 = vadd.xlane.f32.xlu0 %v3306
        %v3308 = vpop.xlane.xlu0 %3307
        %v3309 = vmul.f32 %v3308, %v919
        %v3310 = vsub.f32 %v3300, %v3309
        %v3311 = vmul.f32 %v3310, %v3310
        %v3312 = vsel %vm3305, %v3311, 0.0
        %3313 = vadd.xlane.f32.xlu0 %v3312
        %v3314 = vpop.xlane.xlu0 %3313
        %v3315 = vmul.f32 %v3314, %v919
        %v3316 = vadd.f32 %v3315, 1e-12
        %v3317 = vrsqrt.pop %v3316
        %v3318 = vmul.f32 %v3310, %v3317
        %v3319 = vmul.f32 %v3318, %v3302
        %v3320 = vadd.f32 %v3319, %v3304
        %s3321 = scalar_lea.vmem %s11, 32
        %v3322 = vld [vmem:[%s3321] sm:$0xff]
        %v3323 = vld [vmem:[%s3321 + $0x8] sm:$0xff]
        %v3324 = vld [vmem:[%s3321 + $0x10] sm:$0xff]
        %v3325 = vld [vmem:[%s3321 + $0x18] sm:$0xff]
        %s3326 = scalar_lea.vmem %s12, 1
        %v3327 = vld [vmem:[%s3326] sm:$0x1]
        %v3329 = vsel %vm955, %v3320, 0
        %3331 = vmatprep.subr.mxu0 0.0
        %3332 = vmatpush1.msra.mxu0 %v3322
        %3333 = vmatprep.subr.mxu0 0.0
        %3334 = vmatpush1.msra.mxu0 %v3323
        %3335 = vmatprep.subr.mxu0 0.0
        %3336 = vmatpush1.msra.mxu0 %v3324
        %3337 = vmatprep.subr.mxu0 0.0
        %3338 = vmatpush1.msra.mxu0 %v3325
        %3339 = vmatprep.subr.mxu0 0.0
        %3340 = vmatpush1.msra.mxu0 0.0
        %3341 = vmatprep.subr.mxu0 0.0
        %3342 = vmatpush1.msra.mxu0 0.0
        %3343 = vmatprep.subr.mxu0 0.0
        %3344 = vmatpush1.msra.mxu0 0.0
        %3345 = vmatprep.subr.mxu0 0.0
        %3346 = vmatpush1.msra.mxu0 0.0
        %3347 = vmatprep.subr.mxu0 0.0
        %3348 = vmatpush1.msra.mxu0 0.0
        %3349 = vmatprep.subr.mxu0 0.0
        %3350 = vmatpush1.msra.mxu0 0.0
        %3351 = vmatprep.subr.mxu0 0.0
        %3352 = vmatpush1.msra.mxu0 0.0
        %3353 = vmatprep.subr.mxu0 0.0
        %3354 = vmatpush1.msra.mxu0 0.0
        %3355 = vmatprep.subr.mxu0 0.0
        %3356 = vmatpush1.msra.mxu0 0.0
        %3357 = vmatprep.subr.mxu0 0.0
        %3358 = vmatpush1.msra.mxu0 0.0
        %3359 = vmatprep.subr.mxu0 0.0
        %3360 = vmatpush1.msra.mxu0 0.0
        %3361 = vmatprep.subr.mxu0 0.0
        %3362 = vmatpush1.msra.mxu0 0.0
        %3363 = vmatprep.subr.mxu0 0.0
        %3364 = vmatpush1.msra.mxu0 0.0
        %3365 = vmatprep.subr.mxu0 0.0
        %3366 = vmatpush1.msra.mxu0 0.0
        %3367 = vmatprep.subr.mxu0 0.0
        %3368 = vmatpush1.msra.mxu0 0.0
        %3369 = vmatprep.subr.mxu0 0.0
        %3370 = vmatpush1.msra.mxu0 0.0
        %3371 = vmatprep.subr.mxu0 0.0
        %3372 = vmatpush1.msra.mxu0 0.0
        %3373 = vmatprep.subr.mxu0 0.0
        %3374 = vmatpush1.msra.mxu0 0.0
        %3375 = vmatprep.subr.mxu0 0.0
        %3376 = vmatpush1.msra.mxu0 0.0
        %3377 = vmatprep.subr.mxu0 0.0
        %3378 = vmatpush1.msra.mxu0 0.0
        %3379 = vmatprep.subr.mxu0 0.0
        %3380 = vmatpush1.msra.mxu0 0.0
        %3381 = vmatprep.subr.mxu0 0.0
        %3382 = vmatpush1.msra.mxu0 0.0
        %3383 = vmatprep.subr.mxu0 0.0
        %3384 = vmatpush1.msra.mxu0 0.0
        %3385 = vmatprep.subr.mxu0 0.0
        %3386 = vmatpush1.msra.mxu0 0.0
        %3387 = vmatprep.subr.mxu0 0.0
        %3388 = vmatpush1.msra.mxu0 0.0
        %3389 = vmatprep.subr.mxu0 0.0
        %3390 = vmatpush1.msra.mxu0 0.0
        %3391 = vmatprep.subr.mxu0 0.0
        %3392 = vmatpush1.msra.mxu0 0.0
        %3393 = vmatprep.subr.mxu0 0.0
        %3394 = vmatpush1.msra.mxu0 0.0
        %3395 = vmatprep.mubr.f32.mxu0 0.0
        %3396 = vmatmul.mubr.f32.gmra.mrb[0].mxu0 %v3329
        %v3397 = vpop.f32.mrb[0].mxu0
        %v3398 = vadd.f32 %v3327, %v3397
        %v3399 = vpop.f32.mrb[0].mxu0
        %3400 = vdwg.mxu0
        %v3401 = vmul.f32 %v3398, 0.5
        %v3402 = vmul.f32 %v3398, 0.70710677
        %v3403 = verf.f32.pop %v3402
        %v3404 = vadd.f32 %v3403, 1.0
        %v3405 = vmul.f32 %v3401, %v3404
        %s3406 = scalar_lea.vmem %s13, 128
        %v3407 = vld [vmem:[%s3406] sm:$0xff]
        %v3408 = vld [vmem:[%s3406 + $0x8] sm:$0xff]
        %v3409 = vld [vmem:[%s3406 + $0x10] sm:$0xff]
        %v3410 = vld [vmem:[%s3406 + $0x18] sm:$0xff]
        %v3411 = vld [vmem:[%s3406 + $0x20] sm:$0xff]
        %v3412 = vld [vmem:[%s3406 + $0x28] sm:$0xff]
        %v3413 = vld [vmem:[%s3406 + $0x30] sm:$0xff]
        %v3414 = vld [vmem:[%s3406 + $0x38] sm:$0xff]
        %v3415 = vld [vmem:[%s3406 + $0x40] sm:$0xff]
        %v3416 = vld [vmem:[%s3406 + $0x48] sm:$0xff]
        %v3417 = vld [vmem:[%s3406 + $0x50] sm:$0xff]
        %v3418 = vld [vmem:[%s3406 + $0x58] sm:$0xff]
        %v3419 = vld [vmem:[%s3406 + $0x60] sm:$0xff]
        %v3420 = vld [vmem:[%s3406 + $0x68] sm:$0xff]
        %v3421 = vld [vmem:[%s3406 + $0x70] sm:$0xff]
        %v3422 = vld [vmem:[%s3406 + $0x78] sm:$0xff]
        %s3423 = scalar_lea.vmem %s14, 1
        %v3424 = vld [vmem:[%s3423] sm:$0x1]
        %3425 = vmatprep.subr.mxu0 0.0
        %3426 = vmatpush1.msra.mxu0 %v3407
        %3427 = vmatprep.subr.mxu0 0.0
        %3428 = vmatpush1.msra.mxu0 %v3408
        %3429 = vmatprep.subr.mxu0 0.0
        %3430 = vmatpush1.msra.mxu0 %v3409
        %3431 = vmatprep.subr.mxu0 0.0
        %3432 = vmatpush1.msra.mxu0 %v3410
        %3433 = vmatprep.subr.mxu0 0.0
        %3434 = vmatpush1.msra.mxu0 %v3411
        %3435 = vmatprep.subr.mxu0 0.0
        %3436 = vmatpush1.msra.mxu0 %v3412
        %3437 = vmatprep.subr.mxu0 0.0
        %3438 = vmatpush1.msra.mxu0 %v3413
        %3439 = vmatprep.subr.mxu0 0.0
        %3440 = vmatpush1.msra.mxu0 %v3414
        %3441 = vmatprep.subr.mxu0 0.0
        %3442 = vmatpush1.msra.mxu0 %v3415
        %3443 = vmatprep.subr.mxu0 0.0
        %3444 = vmatpush1.msra.mxu0 %v3416
        %3445 = vmatprep.subr.mxu0 0.0
        %3446 = vmatpush1.msra.mxu0 %v3417
        %3447 = vmatprep.subr.mxu0 0.0
        %3448 = vmatpush1.msra.mxu0 %v3418
        %3449 = vmatprep.subr.mxu0 0.0
        %3450 = vmatpush1.msra.mxu0 %v3419
        %3451 = vmatprep.subr.mxu0 0.0
        %3452 = vmatpush1.msra.mxu0 %v3420
        %3453 = vmatprep.subr.mxu0 0.0
        %3454 = vmatpush1.msra.mxu0 %v3421
        %3455 = vmatprep.subr.mxu0 0.0
        %3456 = vmatpush1.msra.mxu0 %v3422
        %3457 = vmatprep.subr.mxu0 0.0
        %3458 = vmatpush1.msra.mxu0 0.0
        %3459 = vmatprep.subr.mxu0 0.0
        %3460 = vmatpush1.msra.mxu0 0.0
        %3461 = vmatprep.subr.mxu0 0.0
        %3462 = vmatpush1.msra.mxu0 0.0
        %3463 = vmatprep.subr.mxu0 0.0
        %3464 = vmatpush1.msra.mxu0 0.0
        %3465 = vmatprep.subr.mxu0 0.0
        %3466 = vmatpush1.msra.mxu0 0.0
        %3467 = vmatprep.subr.mxu0 0.0
        %3468 = vmatpush1.msra.mxu0 0.0
        %3469 = vmatprep.subr.mxu0 0.0
        %3470 = vmatpush1.msra.mxu0 0.0
        %3471 = vmatprep.subr.mxu0 0.0
        %3472 = vmatpush1.msra.mxu0 0.0
        %3473 = vmatprep.subr.mxu0 0.0
        %3474 = vmatpush1.msra.mxu0 0.0
        %3475 = vmatprep.subr.mxu0 0.0
        %3476 = vmatpush1.msra.mxu0 0.0
        %3477 = vmatprep.subr.mxu0 0.0
        %3478 = vmatpush1.msra.mxu0 0.0
        %3479 = vmatprep.subr.mxu0 0.0
        %3480 = vmatpush1.msra.mxu0 0.0
        %3481 = vmatprep.subr.mxu0 0.0
        %3482 = vmatpush1.msra.mxu0 0.0
        %3483 = vmatprep.subr.mxu0 0.0
        %3484 = vmatpush1.msra.mxu0 0.0
        %3485 = vmatprep.subr.mxu0 0.0
        %3486 = vmatpush1.msra.mxu0 0.0
        %3487 = vmatprep.subr.mxu0 0.0
        %3488 = vmatpush1.msra.mxu0 0.0
        %3489 = vmatprep.mubr.f32.mxu0 0.0
        %3490 = vmatmul.mubr.f32.gmra.mrb[0].mxu0 %v3405
        %v3491 = vpop.f32.mrb[0].mxu0
        %v3492 = vadd.f32 %v3424, %v3491
        %v3493 = vpop.f32.mrb[0].mxu0
        %3494 = vdwg.mxu0
        %v3495 = vadd.f32 %v3492, %v3300
        %v3496 = vld [vmem:[%s15] sm:$0x1]
        %v3497 = vld [vmem:[%s16] sm:$0x1]
        %v3498 = vsel %vm3305, %v3495, 0.0
        %3499 = vadd.xlane.f32.xlu0 %v3498
        %v3500 = vpop.xlane.xlu0 %3499
        %v3501 = vmul.f32 %v3500, %v919
        %v3502 = vsub.f32 %v3495, %v3501
        %v3503 = vmul.f32 %v3502, %v3502
        %v3504 = vsel %vm3305, %v3503, 0.0
        %3505 = vadd.xlane.f32.xlu0 %v3504
        %v3506 = vpop.xlane.xlu0 %3505
        %v3507 = vmul.f32 %v3506, %v919
        %v3508 = vadd.f32 %v3507, 1e-12
        %v3509 = vrsqrt.pop %v3508
        %v3510 = vmul.f32 %v3502, %v3509
        %v3511 = vmul.f32 %v3510, %v3496
        %v3512 = vadd.f32 %v3511, %v3497
        %v3513 = vld [vmem:[%s17] sm:$0xff]
        %v3514 = vld [vmem:[%s17 + $0x8] sm:$0xff]
        %v3515 = vld [vmem:[%s17 + $0x10] sm:$0xff]
        %v3516 = vld [vmem:[%s17 + $0x18] sm:$0xff]
        %v3517 = vld [vmem:[%s18] sm:$0x1]
        %v3519 = vsel %vm955, %v3512, 0
        %3521 = vmatprep.subr.mxu0 0.0
        %3522 = vmatpush1.msra.mxu0 %v3513
        %3523 = vmatprep.subr.mxu0 0.0
        %3524 = vmatpush1.msra.mxu0 %v3514
        %3525 = vmatprep.subr.mxu0 0.0
        %3526 = vmatpush1.msra.mxu0 %v3515
        %3527 = vmatprep.subr.mxu0 0.0
        %3528 = vmatpush1.msra.mxu0 %v3516
        %3529 = vmatprep.subr.mxu0 0.0
        %3530 = vmatpush1.msra.mxu0 0.0
        %3531 = vmatprep.subr.mxu0 0.0
        %3532 = vmatpush1.msra.mxu0 0.0
        %3533 = vmatprep.subr.mxu0 0.0
        %3534 = vmatpush1.msra.mxu0 0.0
        %3535 = vmatprep.subr.mxu0 0.0
        %3536 = vmatpush1.msra.mxu0 0.0
        %3537 = vmatprep.subr.mxu0 0.0
        %3538 = vmatpush1.msra.mxu0 0.0
        %3539 = vmatprep.subr.mxu0 0.0
        %3540 = vmatpush1.msra.mxu0 0.0
        %3541 = vmatprep.subr.mxu0 0.0
        %3542 = vmatpush1.msra.mxu0 0.0
        %3543 = vmatprep.subr.mxu0 0.0
        %3544 = vmatpush1.msra.mxu0 0.0
        %3545 = vmatprep.subr.mxu0 0.0
        %3546 = vmatpush1.msra.mxu0 0.0
        %3547 = vmatprep.subr.mxu0 0.0
        %3548 = vmatpush1.msra.mxu0 0.0
        %3549 = vmatprep.subr.mxu0 0.0
        %3550 = vmatpush1.msra.mxu0 0.0
        %3551 = vmatprep.subr.mxu0 0.0
        %3552 = vmatpush1.msra.mxu0 0.0
        %3553 = vmatprep.subr.mxu0 0.0
        %3554 = vmatpush1.msra.mxu0 0.0
        %3555 = vmatprep.subr.mxu0 0.0
        %3556 = vmatpush1.msra.mxu0 0.0
        %3557 = vmatprep.subr.mxu0 0.0
        %3558 = vmatpush1.msra.mxu0 0.0
        %3559 = vmatprep.subr.mxu0 0.0
        %3560 = vmatpush1.msra.mxu0 0.0
        %3561 = vmatprep.subr.mxu0 0.0
        %3562 = vmatpush1.msra.mxu0 0.0
        %3563 = vmatprep.subr.mxu0 0.0
        %3564 = vmatpush1.msra.mxu0 0.0
        %3565 = vmatprep.subr.mxu0 0.0
        %3566 = vmatpush1.msra.mxu0 0.0
        %3567 = vmatprep.subr.mxu0 0.0
        %3568 = vmatpush1.msra.mxu0 0.0
        %3569 = vmatprep.subr.mxu0 0.0
        %3570 = vmatpush1.msra.mxu0 0.0
        %3571 = vmatprep.subr.mxu0 0.0
        %3572 = vmatpush1.msra.mxu0 0.0
        %3573 = vmatprep.subr.mxu0 0.0
        %3574 = vmatpush1.msra.mxu0 0.0
        %3575 = vmatprep.subr.mxu0 0.0
        %3576 = vmatpush1.msra.mxu0 0.0
        %3577 = vmatprep.subr.mxu0 0.0
        %3578 = vmatpush1.msra.mxu0 0.0
        %3579 = vmatprep.subr.mxu0 0.0
        %3580 = vmatpush1.msra.mxu0 0.0
        %3581 = vmatprep.subr.mxu0 0.0
        %3582 = vmatpush1.msra.mxu0 0.0
        %3583 = vmatprep.subr.mxu0 0.0
        %3584 = vmatpush1.msra.mxu0 0.0
        %3585 = vmatprep.mubr.f32.mxu0 0.0
        %3586 = vmatmul.mubr.f32.gmra.mrb[0].mxu0 %v3519
        %v3587 = vpop.f32.mrb[0].mxu0
        %v3588 = vadd.f32 %v3517, %v3587
        %v3589 = vpop.f32.mrb[0].mxu0
        %3590 = vdwg.mxu0
        %3591 = vst [vmem:[%s594] sm:$0x1] %v3588
        %s3592 = sand.u32 %s445, 1
        %s3593 = scalar_lea.sflag [#allocation3], %s3592
        %s3594 = sand.u32 %s445, 1
        %s3595 = scalar_lea.vmem [#allocation2], %s3594
        // Predicated region
        $region97: #{vit_forward.1} parent=95 // pred_check
          %p3596 = pneg %p455
        $region98: #{vit_forward.1} parent=95 // pred_check_branch
          %3598 = sbr.rel (%p3596) target = $region100
        $region99: #{vit_forward.1} parent=95 // pred_region
          %s3600 = ssub.s32 16, 16
          %3601 = vsyncadd %s3593, %s3600
          %s3602 = smul.addr %s33, 16
          %s3603 = scalar_lea.hbm %s19, %s3602
          %s3605 = sshll.u32 %s3595, 4
          %s3606 = int_to_ptr.vmem [resolvable:$true] %s3605
          %3608 = dma.vmem_to_hbm [thread:$0]  %s3606, 16, %s3603, %s3593
        $region100: #{vit_forward.1} parent=95 // pred_fallthru
          _
      $region96: #{vit_forward.1} parent=5 // pred_fallthru
        _
      %p3609 = scmp.le.s32.totalorder 2, %s28
      // Predicated region
      $region101: #{vit_forward.1} parent=5 // pred_check
        %p3610 = pneg %p3609
      $region102: #{vit_forward.1} parent=5 // pred_check_branch
        %3612 = sbr.rel (%p3610) target = $region104
      $region103: #{vit_forward.1} parent=5 // pred_region
        %s3613 = ssub.s32 %s28, 2
        // Predicated region
        $region105: #{vit_forward.1} parent=103 // pred_check
          %p3614 = pneg %p461
        $region106: #{vit_forward.1} parent=103 // pred_check_branch
          %3616 = sbr.rel (%p3614) target = $region108
        $region107: #{vit_forward.1} parent=103 // pred_region
          %s3617 = sand.u32 %s446, 1
          %s3618 = scalar_lea.sflag [#allocation3], %s3617
          %s3619 = sand.u32 %s446, 1
          %s3620 = scalar_lea.vmem [#allocation2], %s3619
          %3621 = dma.done %s3618, 16
        $region108: #{vit_forward.1} parent=103 // pred_fallthru
          _
      $region104: #{vit_forward.1} parent=5 // pred_fallthru
        _
    $region6: #{vit_forward.1} parent=1 // loop_footer
      %s32 = sadd.s32 1, %s28
    $region7: #{vit_forward.1} parent=1 // loop_footer_branch
      %27 = sbr.rel target = $region3
    $region8: #{vit_forward.1} parent=1 // loop_exit
      _
    %3622 = vsyncpa [#allocation3], 1
    %s3623 = scalar_lea.sflag [#allocation3], 1
    %3624 = vsyncpa %s3623, 1

</llo_original>
